<compile_context>
chip_gen: v6e
topology: v6e:2x2x1
jax: 0.10.0
libtpu: 0.0.40
codegen_flags: <defaults>
</compile_context>

<pallas_src>
import functools

import jax
import jax.numpy as jnp
from jax.experimental import pallas as pl
from jax.experimental.pallas import tpu as pltpu

C_BLK = 512          # channels per input tensor
C_OUT = 512
C_IN = 3 * C_BLK     # 1536 channels after the (virtual) concat
LANE = 128           # vreg lane width


def _pool_conv1x1_kernel(x1_ref, x2_ref, x3_ref, w_ref, b_ref, o_ref,
                         acc1, acc2, acc3, *,
                         total_hw, t_hw, n_s, n_s_c, n_split):
    """Grid point = (batch b, chunk c, spatial step s).

    x*_ref: (1, 512, t_hw)    spatial tile of one input, native channel-major layout
    w_ref:  (512, 1536)       1x1-conv weight, resident (constant index_map)
    b_ref:  (512, 1)          conv bias
    o_ref:  (1, 1, 512, 1)    per-(batch, chunk) partial pooled conv output
    acc*:   (512, 128) f32    lane-dense running per-channel spatial sums
    """
    cc = pl.program_id(1)
    ss = pl.program_id(2)

    def epilogue(s1, s2, s3):
        # Once per (batch, chunk): three 512x512 mat-vecs on the otherwise idle MXU.
        y = (jnp.dot(w_ref[:, 0 * C_BLK:1 * C_BLK], s1,
                     preferred_element_type=jnp.float32)
             + jnp.dot(w_ref[:, 1 * C_BLK:2 * C_BLK], s2,
                       preferred_element_type=jnp.float32)
             + jnp.dot(w_ref[:, 2 * C_BLK:3 * C_BLK], s3,
                       preferred_element_type=jnp.float32))
        inv_hw = jnp.float32(1.0 / total_hw)
        bias_scale = jnp.float32(1.0 / n_split)   # partials sum exactly to b
        o_ref[0, 0] = (y * inv_hw + b_ref[...] * bias_scale).astype(o_ref.dtype)

    if n_s == 1:
        # Single spatial step per batch element: reduce and finish in one go.
        s1 = jnp.sum(x1_ref[0].astype(jnp.float32), axis=-1, keepdims=True)
        s2 = jnp.sum(x2_ref[0].astype(jnp.float32), axis=-1, keepdims=True)
        s3 = jnp.sum(x3_ref[0].astype(jnp.float32), axis=-1, keepdims=True)
        epilogue(s1, s2, s3)
        return

    # Multi-tile path: t_hw is a multiple of 128 by construction.
    n_groups = t_hw // LANE

    @pl.when(ss == 0)
    def _():
        acc1[...] = jnp.zeros_like(acc1)
        acc2[...] = jnp.zeros_like(acc2)
        acc3[...] = jnp.zeros_like(acc3)

    def accumulate(valid):
        # `valid` is a *static* number of valid lanes in this tile.
        a1 = acc1[...]
        a2 = acc2[...]
        a3 = acc3[...]
        iota = None
        if valid < t_hw:
            iota = jax.lax.broadcasted_iota(jnp.int32, (C_BLK, LANE), 1)
        for g in range(n_groups):
            lo = g * LANE
            hi = lo + LANE
            if lo >= valid:          # fully-invalid trailing groups: emit nothing
                break
            sl = slice(lo, hi)       # static slice -> cheap aligned view
            v1 = x1_ref[0, :, sl].astype(jnp.float32)
            v2 = x2_ref[0, :, sl].astype(jnp.float32)
            v3 = x3_ref[0, :, sl].astype(jnp.float32)
            if hi > valid:           # only the boundary group of the ragged tile
                m = (iota + lo) < valid
                v1 = jnp.where(m, v1, 0.0)
                v2 = jnp.where(m, v2, 0.0)
                v3 = jnp.where(m, v3, 0.0)
            a1 = a1 + v1
            a2 = a2 + v2
            a3 = a3 + v3
        acc1[...] = a1
        acc2[...] = a2
        acc3[...] = a3

    valid_last = total_hw - (n_s - 1) * t_hw       # lanes in the last real tile (static)
    has_phantom = (n_split * n_s_c) != n_s         # padded step(s) in the last chunk
    ragged = valid_last != t_hw
    last_cc = (n_s - 1) // n_s_c
    last_ss = (n_s - 1) % n_s_c

    if not ragged and not has_phantom:
        accumulate(t_hw)                           # every step identical, no masks
    else:
        g_idx = cc * n_s_c + ss                    # global tile index (may be phantom)
        is_last_real = jnp.logical_and(cc == last_cc, ss == last_ss)
        interior = jnp.logical_not(is_last_real)
        if has_phantom:
            interior = jnp.logical_and(interior, g_idx < n_s)

        @pl.when(interior)
        def _():
            accumulate(t_hw)

        @pl.when(is_last_real)
        def _():
            accumulate(valid_last)

    @pl.when(ss == n_s_c - 1)
    def _():
        epilogue(jnp.sum(acc1[...], axis=-1, keepdims=True),
                 jnp.sum(acc2[...], axis=-1, keepdims=True),
                 jnp.sum(acc3[...], axis=-1, keepdims=True))


def feature_map_attention(x1, x2, x3, w, b, *, t_hw_max=2048,
                          vmem_limit_bytes=48 * 1024 * 1024):
    """x1/x2/x3: (B, 512, H, W) NCHW (f32 or bf16).  w: (512, 1536, 1, 1).  b: (512,).
    Returns (B, 512, 1, 1), matching the PyTorch module."""
    B, C, H, W = x1.shape
    assert C == C_BLK and x2.shape == x1.shape and x3.shape == x1.shape
    hw = H * W

    # Free reshapes: keep native channel-major layout, HW on the lane axis.
    x1f = x1.reshape(B, C_BLK, hw)
    x2f = x2.reshape(B, C_BLK, hw)
    x3f = x3.reshape(B, C_BLK, hw)

    # Spatial tile: full HW if it fits in one step, else t_hw_max (multiple of 128)
    # with a masked ragged tail on the last tile only.
    if hw <= t_hw_max:
        t_hw = hw
    else:
        assert t_hw_max % LANE == 0, "tiled t_hw must be a multiple of 128"
        t_hw = t_hw_max
    n_s = pl.cdiv(hw, t_hw)

    # B==1 megacore split of the spatial reduction across two parallel chunks
    # (one per v7x TensorCore); sequential (and still correct) on 1-TC chips.
    n_split = 2 if (B == 1 and n_s >= 2) else 1
    n_s_c = pl.cdiv(n_s, n_split)
    need_clamp = (n_split * n_s_c) != n_s          # last chunk has phantom step(s)

    w2d = w.reshape(C_OUT, C_IN)     # (512, 1536); column order matches cat(x1,x2,x3)
    b2 = b.reshape(C_OUT, 1)

    def x_map(bb, cc, ss):
        g = cc * n_s_c + ss
        if need_clamp:
            g = jnp.minimum(g, n_s - 1)            # phantom step re-reads last tile (skipped)
        return (bb, 0, g)

    kernel = functools.partial(_pool_conv1x1_kernel, total_hw=hw, t_hw=t_hw,
                               n_s=n_s, n_s_c=n_s_c, n_split=n_split)

    out = pl.pallas_call(
        kernel,
        out_shape=jax.ShapeDtypeStruct((B, n_split, C_OUT, 1), x1.dtype),
        grid_spec=pltpu.PrefetchScalarGridSpec(
            num_scalar_prefetch=0,
            grid=(B, n_split, n_s_c),
            in_specs=[
                pl.BlockSpec((1, C_BLK, t_hw), x_map),
                pl.BlockSpec((1, C_BLK, t_hw), x_map),
                pl.BlockSpec((1, C_BLK, t_hw), x_map),
                pl.BlockSpec((C_OUT, C_IN), lambda bb, cc, ss: (0, 0)),  # resident weight
                pl.BlockSpec((C_OUT, 1), lambda bb, cc, ss: (0, 0)),     # resident bias
            ],
            out_specs=pl.BlockSpec((1, 1, C_OUT, 1), lambda bb, cc, ss: (bb, cc, 0, 0)),
            scratch_shapes=[pltpu.VMEM((C_BLK, LANE), jnp.float32) for _ in range(3)],
        ),
        compiler_params=pltpu.CompilerParams(
            dimension_semantics=("parallel", "parallel", "arbitrary"),
            vmem_limit_bytes=vmem_limit_bytes),
    )(x1f, x2f, x3f, w2d, b2)

    if n_split > 1:
        out = out.sum(axis=1)        # combine the two per-core partials (tiny XLA op)
    else:
        out = out[:, 0]
    return out.reshape(B, C_OUT, 1, 1)


def _reference(x1, x2, x3, w, b):
    """Plain-JAX reference of the PyTorch forward (conv1x1 then global avg pool)."""
    x = jnp.concatenate((x1, x2, x3), axis=1).astype(jnp.float32)   # (B, 1536, H, W)
    B, C, H, W = x.shape
    xt = jnp.transpose(x.reshape(B, C, H * W), (0, 2, 1))           # (B, HW, C)
    y = jnp.einsum("bpc,oc->bpo", xt, w.reshape(C_OUT, C_IN)) + b
    return jnp.mean(y, axis=1).reshape(B, C_OUT, 1, 1)


if __name__ == "__main__":
    key = jax.random.PRNGKey(0)
    k1, k2, k3, kw, kb = jax.random.split(key, 5)

    # Deterministic Conv2d(1536, 512, kernel_size=1) parameters (Kaiming-ish scale).
    w = jax.random.normal(kw, (C_OUT, C_IN, 1, 1), dtype=jnp.float32) * (1.0 / (C_IN ** 0.5))
    b = jax.random.normal(kb, (C_OUT,), dtype=jnp.float32) * 0.01

    # --- Test 1: small spatial map, B=2 -> single-tile path, batch-parallel grid.
    B, H, W = 2, 8, 8
    x1 = jax.random.normal(k1, (B, C_BLK, H, W), dtype=jnp.float32)
    x2 = jax.random.normal(k2, (B, C_BLK, H, W), dtype=jnp.float32)
    x3 = jax.random.normal(k3, (B, C_BLK, H, W), dtype=jnp.float32)
    out = jax.block_until_ready(feature_map_attention(x1, x2, x3, w, b))
    ref = _reference(x1, x2, x3, w, b)
    assert out.shape == (B, C_OUT, 1, 1), out.shape
    assert jnp.allclose(out, ref, atol=5e-4, rtol=1e-3), "mismatch vs reference (test 1)"

    # --- Test 2: B=1 with forced spatial tiling (ragged tail + 2-way chunk split + phantom step).
    Bs, Hs, Ws = 1, 36, 36   # hw = 1296 -> 3 tiles of 512 (last ragged), n_split=2
    y1 = jax.random.normal(k1, (Bs, C_BLK, Hs, Ws), dtype=jnp.float32)
    y2 = jax.random.normal(k2, (Bs, C_BLK, Hs, Ws), dtype=jnp.float32)
    y3 = jax.random.normal(k3, (Bs, C_BLK, Hs, Ws), dtype=jnp.float32)
    out2 = jax.block_until_ready(feature_map_attention(y1, y2, y3, w, b, t_hw_max=512))
    ref2 = _reference(y1, y2, y3, w, b)
    assert out2.shape == (Bs, C_OUT, 1, 1), out2.shape
    assert jnp.allclose(out2, ref2, atol=5e-4, rtol=1e-3), "mismatch vs reference (test 2)"

    # --- Test 3: bf16 input streaming path (halves HBM bytes; f32 accumulation in-kernel).
    x1b, x2b, x3b = (t.astype(jnp.bfloat16) for t in (x1, x2, x3))
    out3 = jax.block_until_ready(feature_map_attention(x1b, x2b, x3b, w, b))
    ref3 = _reference(x1b, x2b, x3b, w, b)
    assert jnp.allclose(out3.astype(jnp.float32), ref3, atol=2e-2, rtol=2e-2), \
        "mismatch vs reference (test 3, bf16)"

    print("KERNEL_OK")
</pallas_src>

<mosaic_0001>
module attributes {stable_mosaic.version = 11 : i64} {
  func.func @_pool_conv1x1_kernel(%arg0: i32, %arg1: i32, %arg2: i32, %arg3: memref<1x512x64xf32, #tpu.memory_space<vmem>>, %arg4: memref<1x512x64xf32, #tpu.memory_space<vmem>>, %arg5: memref<1x512x64xf32, #tpu.memory_space<vmem>>, %arg6: memref<512x1536xf32, #tpu.memory_space<vmem>>, %arg7: memref<512x1xf32, #tpu.memory_space<vmem>>, %arg8: memref<1x1x512x1xf32, #tpu.memory_space<vmem>>, %arg9: memref<512x128xf32, #tpu.memory_space<vmem>>, %arg10: memref<512x128xf32, #tpu.memory_space<vmem>>, %arg11: memref<512x128xf32, #tpu.memory_space<vmem>>) attributes {dimension_semantics = [#tpu.dimension_semantics<parallel>, #tpu.dimension_semantics<parallel>, #tpu.dimension_semantics<arbitrary>], iteration_bounds = array<i64: 2, 1, 1>, scalar_prefetch = 0 : i64, scratch_operands = 3 : i64, tpu.core_type = #tpu.core_type<tc>, window_params = [{transform_indices = @transform_0, window_bounds = array<i64: 1, 512, 64>}, {transform_indices = @transform_1, window_bounds = array<i64: 1, 512, 64>}, {transform_indices = @transform_2, window_bounds = array<i64: 1, 512, 64>}, {pipeline_mode = #tpu.pipeline_mode<synchronous>, transform_indices = @transform_3, window_bounds = array<i64: 512, 1536>}, {pipeline_mode = #tpu.pipeline_mode<synchronous>, transform_indices = @transform_4, window_bounds = array<i64: 512, 1>}, {transform_indices = @transform_5, window_bounds = array<i64: 1, 1, 512, 1>}]} {
    %c0 = arith.constant 0 : index
    %c0_0 = arith.constant 0 : index
    %c0_1 = arith.constant 0 : index
    %0 = vector.load %arg3[%c0, %c0_0, %c0_1] : memref<1x512x64xf32, #tpu.memory_space<vmem>>, vector<1x512x64xf32>
    %1 = vector.shape_cast %0 : vector<1x512x64xf32> to vector<512x64xf32>
    %cst = arith.constant dense<0.000000e+00> : vector<512xf32>
    %2 = vector.multi_reduction <add>, %1, %cst [1] : vector<512x64xf32> to vector<512xf32>
    %3 = vector.shape_cast %2 : vector<512xf32> to vector<512x1xf32>
    %c0_2 = arith.constant 0 : index
    %c0_3 = arith.constant 0 : index
    %c0_4 = arith.constant 0 : index
    %4 = vector.load %arg4[%c0_2, %c0_3, %c0_4] : memref<1x512x64xf32, #tpu.memory_space<vmem>>, vector<1x512x64xf32>
    %5 = vector.shape_cast %4 : vector<1x512x64xf32> to vector<512x64xf32>
    %cst_5 = arith.constant dense<0.000000e+00> : vector<512xf32>
    %6 = vector.multi_reduction <add>, %5, %cst_5 [1] : vector<512x64xf32> to vector<512xf32>
    %7 = vector.shape_cast %6 : vector<512xf32> to vector<512x1xf32>
    %c0_6 = arith.constant 0 : index
    %c0_7 = arith.constant 0 : index
    %c0_8 = arith.constant 0 : index
    %8 = vector.load %arg5[%c0_6, %c0_7, %c0_8] : memref<1x512x64xf32, #tpu.memory_space<vmem>>, vector<1x512x64xf32>
    %9 = vector.shape_cast %8 : vector<1x512x64xf32> to vector<512x64xf32>
    %cst_9 = arith.constant dense<0.000000e+00> : vector<512xf32>
    %10 = vector.multi_reduction <add>, %9, %cst_9 [1] : vector<512x64xf32> to vector<512xf32>
    %11 = vector.shape_cast %10 : vector<512xf32> to vector<512x1xf32>
    %c0_10 = arith.constant 0 : index
    %c0_11 = arith.constant 0 : index
    %12 = vector.load %arg6[%c0_10, %c0_11] : memref<512x1536xf32, #tpu.memory_space<vmem>>, vector<512x512xf32>
    %cst_12 = arith.constant dense<0.000000e+00> : vector<512x1xf32>
    %13 = tpu.matmul %12, %3, %cst_12 {dimension_numbers = #tpu.dot_dimension_numbers<[1], [0], [0], [1], [0, 0, 1, 1], [], []>} : vector<512x512xf32>, vector<512x1xf32>, vector<512x1xf32> -> vector<512x1xf32>
    %c0_13 = arith.constant 0 : index
    %c512 = arith.constant 512 : index
    %14 = vector.load %arg6[%c0_13, %c512] : memref<512x1536xf32, #tpu.memory_space<vmem>>, vector<512x512xf32>
    %cst_14 = arith.constant dense<0.000000e+00> : vector<512x1xf32>
    %15 = tpu.matmul %14, %7, %cst_14 {dimension_numbers = #tpu.dot_dimension_numbers<[1], [0], [0], [1], [0, 0, 1, 1], [], []>} : vector<512x512xf32>, vector<512x1xf32>, vector<512x1xf32> -> vector<512x1xf32>
    %16 = arith.addf %13, %15 : vector<512x1xf32>
    %c0_15 = arith.constant 0 : index
    %c1024 = arith.constant 1024 : index
    %17 = vector.load %arg6[%c0_15, %c1024] : memref<512x1536xf32, #tpu.memory_space<vmem>>, vector<512x512xf32>
    %cst_16 = arith.constant dense<0.000000e+00> : vector<512x1xf32>
    %18 = tpu.matmul %17, %11, %cst_16 {dimension_numbers = #tpu.dot_dimension_numbers<[1], [0], [0], [1], [0, 0, 1, 1], [], []>} : vector<512x512xf32>, vector<512x1xf32>, vector<512x1xf32> -> vector<512x1xf32>
    %19 = arith.addf %16, %18 : vector<512x1xf32>
    %cst_17 = arith.constant 1.562500e-02 : f32
    %20 = vector.broadcast %cst_17 : f32 to vector<512x1xf32>
    %21 = arith.mulf %19, %20 : vector<512x1xf32>
    %c0_18 = arith.constant 0 : index
    %c0_19 = arith.constant 0 : index
    %22 = vector.load %arg7[%c0_18, %c0_19] : memref<512x1xf32, #tpu.memory_space<vmem>>, vector<512x1xf32>
    %cst_20 = arith.constant 1.000000e+00 : f32
    %23 = vector.broadcast %cst_20 : f32 to vector<512x1xf32>
    %24 = arith.mulf %22, %23 : vector<512x1xf32>
    %25 = arith.addf %21, %24 : vector<512x1xf32>
    %c0_21 = arith.constant 0 : index
    %c0_22 = arith.constant 0 : index
    %c0_23 = arith.constant 0 : index
    %c0_24 = arith.constant 0 : index
    %26 = vector.load %arg8[%c0_21, %c0_22, %c0_23, %c0_24] : memref<1x1x512x1xf32, #tpu.memory_space<vmem>>, vector<1x1x512x1xf32>
    %27 = vector.shape_cast %26 : vector<1x1x512x1xf32> to vector<512x1xf32>
    %28 = vector.shape_cast %25 : vector<512x1xf32> to vector<1x1x512x1xf32>
    tpu.vector_store %arg8[%c0_21, %c0_22, %c0_23, %c0_24], %28 {strides = array<i32>} : memref<1x1x512x1xf32, #tpu.memory_space<vmem>>, vector<1x1x512x1xf32>,
    return
  }
  func.func @transform_0(%arg0: i32, %arg1: i32, %arg2: i32) -> (i32, i32, i32) {
    %c1_i32 = arith.constant 1 : i32
    %0 = arith.muli %arg1, %c1_i32 : i32
    %1 = arith.addi %0, %arg2 : i32
    %c0_i32 = arith.constant 0 : i32
    %c0_i32_0 = arith.constant 0 : i32
    return %arg0, %c0_i32, %1 : i32, i32, i32
  }
  func.func @transform_1(%arg0: i32, %arg1: i32, %arg2: i32) -> (i32, i32, i32) {
    %c1_i32 = arith.constant 1 : i32
    %0 = arith.muli %arg1, %c1_i32 : i32
    %1 = arith.addi %0, %arg2 : i32
    %c0_i32 = arith.constant 0 : i32
    %c0_i32_0 = arith.constant 0 : i32
    return %arg0, %c0_i32, %1 : i32, i32, i32
  }
  func.func @transform_2(%arg0: i32, %arg1: i32, %arg2: i32) -> (i32, i32, i32) {
    %c1_i32 = arith.constant 1 : i32
    %0 = arith.muli %arg1, %c1_i32 : i32
    %1 = arith.addi %0, %arg2 : i32
    %c0_i32 = arith.constant 0 : i32
    %c0_i32_0 = arith.constant 0 : i32
    return %arg0, %c0_i32, %1 : i32, i32, i32
  }
  func.func @transform_3(%arg0: i32, %arg1: i32, %arg2: i32) -> (i32, i32) {
    %c0_i32 = arith.constant 0 : i32
    %c0_i32_0 = arith.constant 0 : i32
    %c0_i32_1 = arith.constant 0 : i32
    return %c0_i32, %c0_i32_0 : i32, i32
  }
  func.func @transform_4(%arg0: i32, %arg1: i32, %arg2: i32) -> (i32, i32) {
    %c0_i32 = arith.constant 0 : i32
    %c0_i32_0 = arith.constant 0 : i32
    %c0_i32_1 = arith.constant 0 : i32
    return %c0_i32, %c0_i32_0 : i32, i32
  }
  func.func @transform_5(%arg0: i32, %arg1: i32, %arg2: i32) -> (i32, i32, i32, i32) {
    %c0_i32 = arith.constant 0 : i32
    %c0_i32_0 = arith.constant 0 : i32
    %c0_i32_1 = arith.constant 0 : i32
    return %arg0, %arg1, %c0_i32, %c0_i32_0 : i32, i32, i32, i32
  }
}

</mosaic_0001>

<llo_original>
// kernel: tpu_custom_call.1
$region0: #{tpu_custom_call.1}
  #allocation0 [shape = 'u32[]', space=smem, size = 0x4, offset = 0x4, fixed_abs, tag = 'smem constant byte address 0x4 - core index']
  #allocation1 [shape = 'u32[144,128]{1,0:T(1,128)}', space=vmem, size = 0x12000, scoped, tag = 'internal scratch']
  #allocation2 [shape = 'f32[512,128]{1,0:T(8,128)}', space=vmem, size = 0x40000, scoped, tag = 'scratch operand']
  #allocation3 [shape = 'f32[512,128]{1,0:T(8,128)}', space=vmem, size = 0x40000, scoped, tag = 'scratch operand']
  #allocation4 [shape = 'f32[512,128]{1,0:T(8,128)}', space=vmem, size = 0x40000, scoped, tag = 'scratch operand']
  %s0 = inlined_call_operand.vmem [shape: f32[2,512,64], index: 0, kind: input, shape index: {}]
  %s1 = inlined_call_operand.vmem [shape: f32[2,512,64], index: 1, kind: input, shape index: {}]
  %s2 = inlined_call_operand.vmem [shape: f32[2,512,64], index: 2, kind: input, shape index: {}]
  %s3 = inlined_call_operand.hbm [shape: f32[512,1536], index: 3, kind: input, shape index: {}]
  %s4 = inlined_call_operand.vmem [shape: f32[512,1], index: 4, kind: input, shape index: {}]
  %s5 = inlined_call_operand.vmem [shape: f32[2,1,512,1], index: 5, kind: output, shape index: {}]
  %s6 = sld [smem:[#allocation0]]
  $region57: #{tpu_custom_call.1} parent=0
    _
  %s8 = ssub.s32 1, %s6
  %s9 = scalar_select 0, %s8, %s6
  $region1: #{tpu_custom_call.1} parent=0
    #allocation5 [shape = 'u8[3145728]{0}', space=vmem, size = 0x300000, scoped, tag = 'input window, operand 3, single buffered']
    #allocation6 [shape = 's32[2]{0}', space=sflag, size = 0x8, scoped, tag = 'scoped memory for tpu_custom_call.1']
    %10 = vsyncpa [#allocation6], 0
    loop: start=0, step=1, limit=4
    $region2: #{tpu_custom_call.1} parent=1 // loop_pre_header
      _
    $region3: #{tpu_custom_call.1} parent=1 // loop_header
      %s12 = sphi 0, %s16
      %p13 = scmp.ge.s32.totalorder %s12, 4
      %s19 = sphi 0, %s38
      %s20 = sphi 0, %s34
      %s21 = sphi 0, %s30
      %s22 = sphi 0, %s19
      %s23 = sphi 0, %s20
      %s24 = sphi 0, %s21
      %s25 = sphi 0, %s22
      %s26 = sphi 0, %s23
      %s27 = sphi 0, %s24
      %s45 = sphi 0, %s47
      %s48 = sphi 0, %s45
      %s49 = sphi 0, %s48
      %s65 = sphi 0, %s49
      %s75 = sphi 0, %s77
      %s78 = sphi 0, %s75
      %s79 = sphi 0, %s78
      %s95 = sphi 0, %s79
      %s105 = sphi 0, %s107
      %s108 = sphi 0, %s105
      %s109 = sphi 0, %s108
      %s125 = sphi 0, %s109
      %s129 = sphi 0, %s129
      %s131 = sphi 0, %s129
      %s132 = sphi 0, %s131
      %s146 = sphi 0, %s132
      %s150 = sphi 0, %s150
      %s152 = sphi 0, %s150
      %s153 = sphi 0, %s152
      %s167 = sphi 0, %s153
      %s175 = sphi 0, %s177
      %s178 = sphi 0, %s175
      %s179 = sphi 0, %s178
      %s195 = sphi 0, %s179
    $region4: #{tpu_custom_call.1} parent=1 // loop_header_branch
      %15 = sbr.rel (%p13) target = $region8
    $region5: #{tpu_custom_call.1} parent=1 // loop_body
      %s17 = ssub.s32 %s12, 1
      %s18 = ssub.s32 %s12, 2
      %s28 = sadd.s32 1, %s21
      %p29 = scmp.ge.s32.totalorder %s28, 1
      %s30 = scalar_select %p29, 0, %s28
      %s31 = sadd.s32 1, %s20
      %s32 = scalar_select %p29, %s31, %s20
      %p33 = scmp.ge.s32.totalorder %s32, 1
      %s34 = scalar_select %p33, 0, %s32
      %s35 = sadd.s32 1, %s19
      %s36 = scalar_select %p33, %s35, %s19
      %p37 = scmp.ge.s32.totalorder %s36, 2
      %s38 = scalar_select %p37, 0, %s36
      %s39 = sadd.s32 %s20, %s21
      %s40 = sadd.s32 %s34, %s30
      %s41 = ssub.s32 %s19, %s38
      %s42 = ssub.s32 %s39, %s40
      %s43 = sor.u32 %s41, %s42
      %p44 = scmp.eq.s32.totalorder %s43, 0
      %s46 = sadd.s32 %s45, 1
      %s47 = scalar_select %p44, %s45, %s46
      %p50 = pneg %p44
      %p51 = scmp.eq.s32.totalorder %s12, 1
      %p52 = por %p50, %p51
      %p53 = scmp.ne.s32.totalorder %s45, %s48
      %p54 = scmp.eq.s32.totalorder %s12, 0
      %p55 = por %p53, %p54
      %p56 = scmp.ne.s32.totalorder %s45, %s48
      %p57 = scmp.eq.s32.totalorder %s17, 1
      %p58 = por %p56, %p57
      %p59 = scmp.ne.s32.totalorder %s48, %s49
      %p60 = scmp.eq.s32.totalorder %s17, 0
      %p61 = por %p59, %p60
      %p62 = scmp.ne.s32.totalorder %s48, %s49
      %p63 = scmp.eq.s32.totalorder %s18, 1
      %p64 = por %p62, %p63
      %p66 = scmp.ne.s32.totalorder %s49, %s65
      %p67 = scmp.eq.s32.totalorder %s18, 0
      %p68 = por %p66, %p67
      %s69 = sadd.s32 %s20, %s21
      %s70 = sadd.s32 %s34, %s30
      %s71 = ssub.s32 %s19, %s38
      %s72 = ssub.s32 %s69, %s70
      %s73 = sor.u32 %s71, %s72
      %p74 = scmp.eq.s32.totalorder %s73, 0
      %s76 = sadd.s32 %s75, 1
      %s77 = scalar_select %p74, %s75, %s76
      %p80 = pneg %p74
      %p81 = scmp.eq.s32.totalorder %s12, 1
      %p82 = por %p80, %p81
      %p83 = scmp.ne.s32.totalorder %s75, %s78
      %p84 = scmp.eq.s32.totalorder %s12, 0
      %p85 = por %p83, %p84
      %p86 = scmp.ne.s32.totalorder %s75, %s78
      %p87 = scmp.eq.s32.totalorder %s17, 1
      %p88 = por %p86, %p87
      %p89 = scmp.ne.s32.totalorder %s78, %s79
      %p90 = scmp.eq.s32.totalorder %s17, 0
      %p91 = por %p89, %p90
      %p92 = scmp.ne.s32.totalorder %s78, %s79
      %p93 = scmp.eq.s32.totalorder %s18, 1
      %p94 = por %p92, %p93
      %p96 = scmp.ne.s32.totalorder %s79, %s95
      %p97 = scmp.eq.s32.totalorder %s18, 0
      %p98 = por %p96, %p97
      %s99 = sadd.s32 %s20, %s21
      %s100 = sadd.s32 %s34, %s30
      %s101 = ssub.s32 %s19, %s38
      %s102 = ssub.s32 %s99, %s100
      %s103 = sor.u32 %s101, %s102
      %p104 = scmp.eq.s32.totalorder %s103, 0
      %s106 = sadd.s32 %s105, 1
      %s107 = scalar_select %p104, %s105, %s106
      %p110 = pneg %p104
      %p111 = scmp.eq.s32.totalorder %s12, 1
      %p112 = por %p110, %p111
      %p113 = scmp.ne.s32.totalorder %s105, %s108
      %p114 = scmp.eq.s32.totalorder %s12, 0
      %p115 = por %p113, %p114
      %p116 = scmp.ne.s32.totalorder %s105, %s108
      %p117 = scmp.eq.s32.totalorder %s17, 1
      %p118 = por %p116, %p117
      %p119 = scmp.ne.s32.totalorder %s108, %s109
      %p120 = scmp.eq.s32.totalorder %s17, 0
      %p121 = por %p119, %p120
      %p122 = scmp.ne.s32.totalorder %s108, %s109
      %p123 = scmp.eq.s32.totalorder %s18, 1
      %p124 = por %p122, %p123
      %p126 = scmp.ne.s32.totalorder %s109, %s125
      %p127 = scmp.eq.s32.totalorder %s18, 0
      %p128 = por %p126, %p127
      %s130 = sadd.s32 %s129, 1
      %p133 = scmp.eq.s32.totalorder %s12, 1
      %p134 = scmp.ne.s32.totalorder %s129, %s131
      %p135 = scmp.eq.s32.totalorder %s12, 0
      %p136 = por %p134, %p135
      %p137 = scmp.ne.s32.totalorder %s129, %s131
      %p138 = scmp.eq.s32.totalorder %s17, 1
      %p139 = por %p137, %p138
      %p140 = scmp.ne.s32.totalorder %s131, %s132
      %p141 = scmp.eq.s32.totalorder %s17, 0
      %p142 = por %p140, %p141
      %p143 = scmp.ne.s32.totalorder %s131, %s132
      %p144 = scmp.eq.s32.totalorder %s18, 1
      %p145 = por %p143, %p144
      %p147 = scmp.ne.s32.totalorder %s132, %s146
      %p148 = scmp.eq.s32.totalorder %s18, 0
      %p149 = por %p147, %p148
      %s151 = sadd.s32 %s150, 1
      %p154 = scmp.eq.s32.totalorder %s12, 1
      %p155 = scmp.ne.s32.totalorder %s150, %s152
      %p156 = scmp.eq.s32.totalorder %s12, 0
      %p157 = por %p155, %p156
      %p158 = scmp.ne.s32.totalorder %s150, %s152
      %p159 = scmp.eq.s32.totalorder %s17, 1
      %p160 = por %p158, %p159
      %p161 = scmp.ne.s32.totalorder %s152, %s153
      %p162 = scmp.eq.s32.totalorder %s17, 0
      %p163 = por %p161, %p162
      %p164 = scmp.ne.s32.totalorder %s152, %s153
      %p165 = scmp.eq.s32.totalorder %s18, 1
      %p166 = por %p164, %p165
      %p168 = scmp.ne.s32.totalorder %s153, %s167
      %p169 = scmp.eq.s32.totalorder %s18, 0
      %p170 = por %p168, %p169
      %s171 = ssub.s32 %s19, %s38
      %s172 = ssub.s32 %s20, %s34
      %s173 = sor.u32 %s171, %s172
      %p174 = scmp.eq.s32.totalorder %s173, 0
      %s176 = sadd.s32 %s175, 1
      %s177 = scalar_select %p174, %s175, %s176
      %p180 = pneg %p174
      %p181 = scmp.eq.s32.totalorder %s12, 1
      %p182 = por %p180, %p181
      %p183 = scmp.ne.s32.totalorder %s175, %s178
      %p184 = scmp.eq.s32.totalorder %s12, 0
      %p185 = por %p183, %p184
      %p186 = scmp.ne.s32.totalorder %s175, %s178
      %p187 = scmp.eq.s32.totalorder %s17, 1
      %p188 = por %p186, %p187
      %p189 = scmp.ne.s32.totalorder %s178, %s179
      %p190 = scmp.eq.s32.totalorder %s17, 0
      %p191 = por %p189, %p190
      %p192 = scmp.ne.s32.totalorder %s178, %s179
      %p193 = scmp.eq.s32.totalorder %s18, 1
      %p194 = por %p192, %p193
      %p196 = scmp.ne.s32.totalorder %s179, %s195
      %p197 = scmp.eq.s32.totalorder %s18, 0
      %p198 = por %p196, %p197
      %p199 = scmp.le.s32.totalorder 1, %s12
      %p200 = scmp.lt.s32.totalorder %s12, 3
      %p201 = pnand %p199, %p200
      %p202 = pneg %p201
      // Predicated region
      $region9: #{tpu_custom_call.1} parent=5 // pred_check
        _
      $region10: #{tpu_custom_call.1} parent=5 // pred_check_branch
        %204 = sbr.rel (%p201) target = $region12
      $region11: #{tpu_custom_call.1} parent=5 // pred_region
        %s205 = ssub.s32 %s12, 1
        // Predicated region
        $region13: #{tpu_custom_call.1} parent=11 // pred_check
          %p206 = pneg %p142
        $region14: #{tpu_custom_call.1} parent=11 // pred_check_branch
          %208 = sbr.rel (%p206) target = $region16
        $region15: #{tpu_custom_call.1} parent=11 // pred_region
          %s210 = ssub.s32 98304, 98304
          %211 = vsyncadd [#allocation6], %s210
          %s212 = sshll.u32 [#allocation5], 4
          %s213 = int_to_ptr.vmem [resolvable:$true] %s212
          %218 = dma.hbm_to_vmem [thread:$0]  %s3, 98304, %s213, [#allocation6], 1536, 1536, 96
        $region16: #{tpu_custom_call.1} parent=11 // pred_fallthru
          _
        // Predicated region
        $region17: #{tpu_custom_call.1} parent=11 // pred_check
          %p219 = pneg %p163
        $region18: #{tpu_custom_call.1} parent=11 // pred_check_branch
          %221 = sbr.rel (%p219) target = $region20
        $region19: #{tpu_custom_call.1} parent=11 // pred_region
          _
        $region20: #{tpu_custom_call.1} parent=11 // pred_fallthru
          _
      $region12: #{tpu_custom_call.1} parent=5 // pred_fallthru
        _
      %p222 = scmp.lt.s32.totalorder %s12, 2
      // Predicated region
      $region21: #{tpu_custom_call.1} parent=5 // pred_check
        %p223 = pneg %p222
      $region22: #{tpu_custom_call.1} parent=5 // pred_check_branch
        %225 = sbr.rel (%p223) target = $region24
      $region23: #{tpu_custom_call.1} parent=5 // pred_region
        // Predicated region
        $region25: #{tpu_custom_call.1} parent=23 // pred_check
          %p226 = pneg %p55
        $region26: #{tpu_custom_call.1} parent=23 // pred_check_branch
          %228 = sbr.rel (%p226) target = $region28
        $region27: #{tpu_custom_call.1} parent=23 // pred_region
          %s229 = sadd.s32 %s20, %s21
          %p230 = scmp.lt.s32.totalorder %s19, 1
          %s231 = scalar_select %p230, %s19, 1
          %p232 = scmp.lt.s32.totalorder %s229, 0
          %s233 = scalar_select %p232, %s229, 0
          %s234 = smul.addr %s231, 64
          %s235 = sadd.s32 %s233, %s234
          %s236 = smul.addr %s235, 8
          %s237 = scalar_lea.vmem %s0, %s236
          %s238 = sadd.s32 %s20, %s21
        $region28: #{tpu_custom_call.1} parent=23 // pred_fallthru
          _
        // Predicated region
        $region29: #{tpu_custom_call.1} parent=23 // pred_check
          %p239 = pneg %p85
        $region30: #{tpu_custom_call.1} parent=23 // pred_check_branch
          %241 = sbr.rel (%p239) target = $region32
        $region31: #{tpu_custom_call.1} parent=23 // pred_region
          %s242 = sadd.s32 %s20, %s21
          %p243 = scmp.lt.s32.totalorder %s19, 1
          %s244 = scalar_select %p243, %s19, 1
          %p245 = scmp.lt.s32.totalorder %s242, 0
          %s246 = scalar_select %p245, %s242, 0
          %s247 = smul.addr %s244, 64
          %s248 = sadd.s32 %s246, %s247
          %s249 = smul.addr %s248, 8
          %s250 = scalar_lea.vmem %s1, %s249
          %s251 = sadd.s32 %s20, %s21
        $region32: #{tpu_custom_call.1} parent=23 // pred_fallthru
          _
        // Predicated region
        $region33: #{tpu_custom_call.1} parent=23 // pred_check
          %p252 = pneg %p115
        $region34: #{tpu_custom_call.1} parent=23 // pred_check_branch
          %254 = sbr.rel (%p252) target = $region36
        $region35: #{tpu_custom_call.1} parent=23 // pred_region
          %s255 = sadd.s32 %s20, %s21
          %p256 = scmp.lt.s32.totalorder %s19, 1
          %s257 = scalar_select %p256, %s19, 1
          %p258 = scmp.lt.s32.totalorder %s255, 0
          %s259 = scalar_select %p258, %s255, 0
          %s260 = smul.addr %s257, 64
          %s261 = sadd.s32 %s259, %s260
          %s262 = smul.addr %s261, 8
          %s263 = scalar_lea.vmem %s2, %s262
          %s264 = sadd.s32 %s20, %s21
        $region36: #{tpu_custom_call.1} parent=23 // pred_fallthru
          _
      $region24: #{tpu_custom_call.1} parent=5 // pred_fallthru
        _
      %p265 = scmp.le.s32.totalorder 1, %s12
      %p266 = scmp.lt.s32.totalorder %s12, 3
      %p267 = pnand %p265, %p266
      %p268 = pneg %p267
      // Predicated region
      $region37: #{tpu_custom_call.1} parent=5 // pred_check
        _
      $region38: #{tpu_custom_call.1} parent=5 // pred_check_branch
        %270 = sbr.rel (%p267) target = $region40
      $region39: #{tpu_custom_call.1} parent=5 // pred_region
        %s271 = ssub.s32 %s12, 1
        // Predicated region
        $region41: #{tpu_custom_call.1} parent=39 // pred_check
          %p272 = pneg %p142
        $region42: #{tpu_custom_call.1} parent=39 // pred_check_branch
          %274 = sbr.rel (%p272) target = $region44
        $region43: #{tpu_custom_call.1} parent=39 // pred_region
          %275 = dma.done [#allocation6], 98304
        $region44: #{tpu_custom_call.1} parent=39 // pred_fallthru
          _
        %s276 = sadd.s32 %s23, %s24
        %p277 = scmp.lt.s32.totalorder %s22, 1
        %s278 = scalar_select %p277, %s22, 1
        %p279 = scmp.lt.s32.totalorder %s276, 0
        %s280 = scalar_select %p279, %s276, 0
        %s281 = smul.addr %s278, 64
        %s282 = sadd.s32 %s280, %s281
        %s283 = smul.addr %s282, 8
        %s284 = scalar_lea.vmem %s0, %s283
        %p285 = pneg %p61
        %p286 = pneg %p58
        %s287 = sadd.s32 %s23, %s24
        %p288 = scmp.lt.s32.totalorder %s22, 1
        %s289 = scalar_select %p288, %s22, 1
        %p290 = scmp.lt.s32.totalorder %s287, 0
        %s291 = scalar_select %p290, %s287, 0
        %s292 = smul.addr %s289, 64
        %s293 = sadd.s32 %s291, %s292
        %s294 = smul.addr %s293, 8
        %s295 = scalar_lea.vmem %s1, %s294
        %p296 = pneg %p91
        %p297 = pneg %p88
        %s298 = sadd.s32 %s23, %s24
        %p299 = scmp.lt.s32.totalorder %s22, 1
        %s300 = scalar_select %p299, %s22, 1
        %p301 = scmp.lt.s32.totalorder %s298, 0
        %s302 = scalar_select %p301, %s298, 0
        %s303 = smul.addr %s300, 64
        %s304 = sadd.s32 %s302, %s303
        %s305 = smul.addr %s304, 8
        %s306 = scalar_lea.vmem %s2, %s305
        %p307 = pneg %p121
        %p308 = pneg %p118
        %p309 = pneg %p142
        %p310 = pneg %p139
        %p311 = pneg %p163
        %p312 = pneg %p160
        %p313 = pneg %p191
        %p314 = pneg %p188
        %p315 = scmp.lt.s32.totalorder %s22, 1
        %s316 = scalar_select %p315, %s22, 1
        %p317 = scmp.lt.s32.totalorder %s23, 0
        %s318 = scalar_select %p317, %s23, 0
        %s319 = smul.addr %s318, 64
        %s320 = smul.addr %s316, 64
        %s321 = sadd.s32 %s319, %s320
        %s322 = smul.addr %s321, 8
        %s323 = scalar_lea.vmem %s5, %s322
        %s324 = sadd.s32 %s23, %s24
        %p325 = scmp.lt.s32.totalorder %s22, 1
        %s326 = scalar_select %p325, %s22, 1
        %p327 = scmp.lt.s32.totalorder %s324, 0
        %s328 = scalar_select %p327, %s324, 0
        %s329 = smul.addr %s326, 64
        %s330 = sadd.s32 %s328, %s329
        %s331 = smul.addr %s330, 8
        %s332 = scalar_lea.vmem %s0, %s331
        %s333 = sadd.s32 %s23, %s24
        %s334 = sadd.s32 %s23, %s24
        %p335 = scmp.lt.s32.totalorder %s22, 1
        %s336 = scalar_select %p335, %s22, 1
        %p337 = scmp.lt.s32.totalorder %s334, 0
        %s338 = scalar_select %p337, %s334, 0
        %s339 = smul.addr %s336, 64
        %s340 = sadd.s32 %s338, %s339
        %s341 = smul.addr %s340, 8
        %s342 = scalar_lea.vmem %s1, %s341
        %s343 = sadd.s32 %s23, %s24
        %s344 = sadd.s32 %s23, %s24
        %p345 = scmp.lt.s32.totalorder %s22, 1
        %s346 = scalar_select %p345, %s22, 1
        %p347 = scmp.lt.s32.totalorder %s344, 0
        %s348 = scalar_select %p347, %s344, 0
        %s349 = smul.addr %s346, 64
        %s350 = sadd.s32 %s348, %s349
        %s351 = smul.addr %s350, 8
        %s352 = scalar_lea.vmem %s2, %s351
        %s353 = sadd.s32 %s23, %s24
        %p354 = scmp.lt.s32.totalorder %s22, 1
        %s355 = scalar_select %p354, %s22, 1
        %p356 = scmp.lt.s32.totalorder %s23, 0
        %s357 = scalar_select %p356, %s23, 0
        %s358 = smul.addr %s357, 64
        %s359 = smul.addr %s355, 64
        %s360 = sadd.s32 %s358, %s359
        %s361 = smul.addr %s360, 8
        %s362 = scalar_lea.vmem %s5, %s361
        %v363 = vld [vmem:[%s332] sm:$0xff]
        %v364 = vld [vmem:[%s332 + $0x8] sm:$0xff]
        %v365 = vld [vmem:[%s332 + $0x10] sm:$0xff]
        %v366 = vld [vmem:[%s332 + $0x18] sm:$0xff]
        %v367 = vld [vmem:[%s332 + $0x20] sm:$0xff]
        %v368 = vld [vmem:[%s332 + $0x28] sm:$0xff]
        %v369 = vld [vmem:[%s332 + $0x30] sm:$0xff]
        %v370 = vld [vmem:[%s332 + $0x38] sm:$0xff]
        %v371 = vld [vmem:[%s332 + $0x40] sm:$0xff]
        %v372 = vld [vmem:[%s332 + $0x48] sm:$0xff]
        %v373 = vld [vmem:[%s332 + $0x50] sm:$0xff]
        %v374 = vld [vmem:[%s332 + $0x58] sm:$0xff]
        %v375 = vld [vmem:[%s332 + $0x60] sm:$0xff]
        %v376 = vld [vmem:[%s332 + $0x68] sm:$0xff]
        %v377 = vld [vmem:[%s332 + $0x70] sm:$0xff]
        %v378 = vld [vmem:[%s332 + $0x78] sm:$0xff]
        %v379 = vld [vmem:[%s332 + $0x80] sm:$0xff]
        %v380 = vld [vmem:[%s332 + $0x88] sm:$0xff]
        %v381 = vld [vmem:[%s332 + $0x90] sm:$0xff]
        %v382 = vld [vmem:[%s332 + $0x98] sm:$0xff]
        %v383 = vld [vmem:[%s332 + $0xa0] sm:$0xff]
        %v384 = vld [vmem:[%s332 + $0xa8] sm:$0xff]
        %v385 = vld [vmem:[%s332 + $0xb0] sm:$0xff]
        %v386 = vld [vmem:[%s332 + $0xb8] sm:$0xff]
        %v387 = vld [vmem:[%s332 + $0xc0] sm:$0xff]
        %v388 = vld [vmem:[%s332 + $0xc8] sm:$0xff]
        %v389 = vld [vmem:[%s332 + $0xd0] sm:$0xff]
        %v390 = vld [vmem:[%s332 + $0xd8] sm:$0xff]
        %v391 = vld [vmem:[%s332 + $0xe0] sm:$0xff]
        %v392 = vld [vmem:[%s332 + $0xe8] sm:$0xff]
        %v393 = vld [vmem:[%s332 + $0xf0] sm:$0xff]
        %v394 = vld [vmem:[%s332 + $0xf8] sm:$0xff]
        %v395 = vld [vmem:[%s332 + $0x100] sm:$0xff]
        %v396 = vld [vmem:[%s332 + $0x108] sm:$0xff]
        %v397 = vld [vmem:[%s332 + $0x110] sm:$0xff]
        %v398 = vld [vmem:[%s332 + $0x118] sm:$0xff]
        %v399 = vld [vmem:[%s332 + $0x120] sm:$0xff]
        %v400 = vld [vmem:[%s332 + $0x128] sm:$0xff]
        %v401 = vld [vmem:[%s332 + $0x130] sm:$0xff]
        %v402 = vld [vmem:[%s332 + $0x138] sm:$0xff]
        %v403 = vld [vmem:[%s332 + $0x140] sm:$0xff]
        %v404 = vld [vmem:[%s332 + $0x148] sm:$0xff]
        %v405 = vld [vmem:[%s332 + $0x150] sm:$0xff]
        %v406 = vld [vmem:[%s332 + $0x158] sm:$0xff]
        %v407 = vld [vmem:[%s332 + $0x160] sm:$0xff]
        %v408 = vld [vmem:[%s332 + $0x168] sm:$0xff]
        %v409 = vld [vmem:[%s332 + $0x170] sm:$0xff]
        %v410 = vld [vmem:[%s332 + $0x178] sm:$0xff]
        %v411 = vld [vmem:[%s332 + $0x180] sm:$0xff]
        %v412 = vld [vmem:[%s332 + $0x188] sm:$0xff]
        %v413 = vld [vmem:[%s332 + $0x190] sm:$0xff]
        %v414 = vld [vmem:[%s332 + $0x198] sm:$0xff]
        %v415 = vld [vmem:[%s332 + $0x1a0] sm:$0xff]
        %v416 = vld [vmem:[%s332 + $0x1a8] sm:$0xff]
        %v417 = vld [vmem:[%s332 + $0x1b0] sm:$0xff]
        %v418 = vld [vmem:[%s332 + $0x1b8] sm:$0xff]
        %v419 = vld [vmem:[%s332 + $0x1c0] sm:$0xff]
        %v420 = vld [vmem:[%s332 + $0x1c8] sm:$0xff]
        %v421 = vld [vmem:[%s332 + $0x1d0] sm:$0xff]
        %v422 = vld [vmem:[%s332 + $0x1d8] sm:$0xff]
        %v423 = vld [vmem:[%s332 + $0x1e0] sm:$0xff]
        %v424 = vld [vmem:[%s332 + $0x1e8] sm:$0xff]
        %v425 = vld [vmem:[%s332 + $0x1f0] sm:$0xff]
        %v426 = vld [vmem:[%s332 + $0x1f8] sm:$0xff]
        %vm427 = vcmask 523264
        %v428 = vsel %vm427, %v363, 0.0
        %429 = vadd.xlane.f32.xlu0 %v428
        %v430 = vpop.xlane.xlu0 %429
        %v431 = vsel %vm427, %v364, 0.0
        %432 = vadd.xlane.f32.xlu0 %v431
        %v433 = vpop.xlane.xlu0 %432
        %v434 = vsel %vm427, %v365, 0.0
        %435 = vadd.xlane.f32.xlu0 %v434
        %v436 = vpop.xlane.xlu0 %435
        %v437 = vsel %vm427, %v366, 0.0
        %438 = vadd.xlane.f32.xlu0 %v437
        %v439 = vpop.xlane.xlu0 %438
        %v440 = vsel %vm427, %v367, 0.0
        %441 = vadd.xlane.f32.xlu0 %v440
        %v442 = vpop.xlane.xlu0 %441
        %v443 = vsel %vm427, %v368, 0.0
        %444 = vadd.xlane.f32.xlu0 %v443
        %v445 = vpop.xlane.xlu0 %444
        %v446 = vsel %vm427, %v369, 0.0
        %447 = vadd.xlane.f32.xlu0 %v446
        %v448 = vpop.xlane.xlu0 %447
        %v449 = vsel %vm427, %v370, 0.0
        %450 = vadd.xlane.f32.xlu0 %v449
        %v451 = vpop.xlane.xlu0 %450
        %v452 = vsel %vm427, %v371, 0.0
        %453 = vadd.xlane.f32.xlu0 %v452
        %v454 = vpop.xlane.xlu0 %453
        %v455 = vsel %vm427, %v372, 0.0
        %456 = vadd.xlane.f32.xlu0 %v455
        %v457 = vpop.xlane.xlu0 %456
        %v458 = vsel %vm427, %v373, 0.0
        %459 = vadd.xlane.f32.xlu0 %v458
        %v460 = vpop.xlane.xlu0 %459
        %v461 = vsel %vm427, %v374, 0.0
        %462 = vadd.xlane.f32.xlu0 %v461
        %v463 = vpop.xlane.xlu0 %462
        %v464 = vsel %vm427, %v375, 0.0
        %465 = vadd.xlane.f32.xlu0 %v464
        %v466 = vpop.xlane.xlu0 %465
        %v467 = vsel %vm427, %v376, 0.0
        %468 = vadd.xlane.f32.xlu0 %v467
        %v469 = vpop.xlane.xlu0 %468
        %v470 = vsel %vm427, %v377, 0.0
        %471 = vadd.xlane.f32.xlu0 %v470
        %v472 = vpop.xlane.xlu0 %471
        %v473 = vsel %vm427, %v378, 0.0
        %474 = vadd.xlane.f32.xlu0 %v473
        %v475 = vpop.xlane.xlu0 %474
        %v476 = vsel %vm427, %v379, 0.0
        %477 = vadd.xlane.f32.xlu0 %v476
        %v478 = vpop.xlane.xlu0 %477
        %v479 = vsel %vm427, %v380, 0.0
        %480 = vadd.xlane.f32.xlu0 %v479
        %v481 = vpop.xlane.xlu0 %480
        %v482 = vsel %vm427, %v381, 0.0
        %483 = vadd.xlane.f32.xlu0 %v482
        %v484 = vpop.xlane.xlu0 %483
        %v485 = vsel %vm427, %v382, 0.0
        %486 = vadd.xlane.f32.xlu0 %v485
        %v487 = vpop.xlane.xlu0 %486
        %v488 = vsel %vm427, %v383, 0.0
        %489 = vadd.xlane.f32.xlu0 %v488
        %v490 = vpop.xlane.xlu0 %489
        %v491 = vsel %vm427, %v384, 0.0
        %492 = vadd.xlane.f32.xlu0 %v491
        %v493 = vpop.xlane.xlu0 %492
        %v494 = vsel %vm427, %v385, 0.0
        %495 = vadd.xlane.f32.xlu0 %v494
        %v496 = vpop.xlane.xlu0 %495
        %v497 = vsel %vm427, %v386, 0.0
        %498 = vadd.xlane.f32.xlu0 %v497
        %v499 = vpop.xlane.xlu0 %498
        %v500 = vsel %vm427, %v387, 0.0
        %501 = vadd.xlane.f32.xlu0 %v500
        %v502 = vpop.xlane.xlu0 %501
        %v503 = vsel %vm427, %v388, 0.0
        %504 = vadd.xlane.f32.xlu0 %v503
        %v505 = vpop.xlane.xlu0 %504
        %v506 = vsel %vm427, %v389, 0.0
        %507 = vadd.xlane.f32.xlu0 %v506
        %v508 = vpop.xlane.xlu0 %507
        %v509 = vsel %vm427, %v390, 0.0
        %510 = vadd.xlane.f32.xlu0 %v509
        %v511 = vpop.xlane.xlu0 %510
        %v512 = vsel %vm427, %v391, 0.0
        %513 = vadd.xlane.f32.xlu0 %v512
        %v514 = vpop.xlane.xlu0 %513
        %v515 = vsel %vm427, %v392, 0.0
        %516 = vadd.xlane.f32.xlu0 %v515
        %v517 = vpop.xlane.xlu0 %516
        %v518 = vsel %vm427, %v393, 0.0
        %519 = vadd.xlane.f32.xlu0 %v518
        %v520 = vpop.xlane.xlu0 %519
        %v521 = vsel %vm427, %v394, 0.0
        %522 = vadd.xlane.f32.xlu0 %v521
        %v523 = vpop.xlane.xlu0 %522
        %v524 = vsel %vm427, %v395, 0.0
        %525 = vadd.xlane.f32.xlu0 %v524
        %v526 = vpop.xlane.xlu0 %525
        %v527 = vsel %vm427, %v396, 0.0
        %528 = vadd.xlane.f32.xlu0 %v527
        %v529 = vpop.xlane.xlu0 %528
        %v530 = vsel %vm427, %v397, 0.0
        %531 = vadd.xlane.f32.xlu0 %v530
        %v532 = vpop.xlane.xlu0 %531
        %v533 = vsel %vm427, %v398, 0.0
        %534 = vadd.xlane.f32.xlu0 %v533
        %v535 = vpop.xlane.xlu0 %534
        %v536 = vsel %vm427, %v399, 0.0
        %537 = vadd.xlane.f32.xlu0 %v536
        %v538 = vpop.xlane.xlu0 %537
        %v539 = vsel %vm427, %v400, 0.0
        %540 = vadd.xlane.f32.xlu0 %v539
        %v541 = vpop.xlane.xlu0 %540
        %v542 = vsel %vm427, %v401, 0.0
        %543 = vadd.xlane.f32.xlu0 %v542
        %v544 = vpop.xlane.xlu0 %543
        %v545 = vsel %vm427, %v402, 0.0
        %546 = vadd.xlane.f32.xlu0 %v545
        %v547 = vpop.xlane.xlu0 %546
        %v548 = vsel %vm427, %v403, 0.0
        %549 = vadd.xlane.f32.xlu0 %v548
        %v550 = vpop.xlane.xlu0 %549
        %v551 = vsel %vm427, %v404, 0.0
        %552 = vadd.xlane.f32.xlu0 %v551
        %v553 = vpop.xlane.xlu0 %552
        %v554 = vsel %vm427, %v405, 0.0
        %555 = vadd.xlane.f32.xlu0 %v554
        %v556 = vpop.xlane.xlu0 %555
        %v557 = vsel %vm427, %v406, 0.0
        %558 = vadd.xlane.f32.xlu0 %v557
        %v559 = vpop.xlane.xlu0 %558
        %v560 = vsel %vm427, %v407, 0.0
        %561 = vadd.xlane.f32.xlu0 %v560
        %v562 = vpop.xlane.xlu0 %561
        %v563 = vsel %vm427, %v408, 0.0
        %564 = vadd.xlane.f32.xlu0 %v563
        %v565 = vpop.xlane.xlu0 %564
        %v566 = vsel %vm427, %v409, 0.0
        %567 = vadd.xlane.f32.xlu0 %v566
        %v568 = vpop.xlane.xlu0 %567
        %v569 = vsel %vm427, %v410, 0.0
        %570 = vadd.xlane.f32.xlu0 %v569
        %v571 = vpop.xlane.xlu0 %570
        %v572 = vsel %vm427, %v411, 0.0
        %573 = vadd.xlane.f32.xlu0 %v572
        %v574 = vpop.xlane.xlu0 %573
        %v575 = vsel %vm427, %v412, 0.0
        %576 = vadd.xlane.f32.xlu0 %v575
        %v577 = vpop.xlane.xlu0 %576
        %v578 = vsel %vm427, %v413, 0.0
        %579 = vadd.xlane.f32.xlu0 %v578
        %v580 = vpop.xlane.xlu0 %579
        %v581 = vsel %vm427, %v414, 0.0
        %582 = vadd.xlane.f32.xlu0 %v581
        %v583 = vpop.xlane.xlu0 %582
        %v584 = vsel %vm427, %v415, 0.0
        %585 = vadd.xlane.f32.xlu0 %v584
        %v586 = vpop.xlane.xlu0 %585
        %v587 = vsel %vm427, %v416, 0.0
        %588 = vadd.xlane.f32.xlu0 %v587
        %v589 = vpop.xlane.xlu0 %588
        %v590 = vsel %vm427, %v417, 0.0
        %591 = vadd.xlane.f32.xlu0 %v590
        %v592 = vpop.xlane.xlu0 %591
        %v593 = vsel %vm427, %v418, 0.0
        %594 = vadd.xlane.f32.xlu0 %v593
        %v595 = vpop.xlane.xlu0 %594
        %v596 = vsel %vm427, %v419, 0.0
        %597 = vadd.xlane.f32.xlu0 %v596
        %v598 = vpop.xlane.xlu0 %597
        %v599 = vsel %vm427, %v420, 0.0
        %600 = vadd.xlane.f32.xlu0 %v599
        %v601 = vpop.xlane.xlu0 %600
        %v602 = vsel %vm427, %v421, 0.0
        %603 = vadd.xlane.f32.xlu0 %v602
        %v604 = vpop.xlane.xlu0 %603
        %v605 = vsel %vm427, %v422, 0.0
        %606 = vadd.xlane.f32.xlu0 %v605
        %v607 = vpop.xlane.xlu0 %606
        %v608 = vsel %vm427, %v423, 0.0
        %609 = vadd.xlane.f32.xlu0 %v608
        %v610 = vpop.xlane.xlu0 %609
        %v611 = vsel %vm427, %v424, 0.0
        %612 = vadd.xlane.f32.xlu0 %v611
        %v613 = vpop.xlane.xlu0 %612
        %v614 = vsel %vm427, %v425, 0.0
        %615 = vadd.xlane.f32.xlu0 %v614
        %v616 = vpop.xlane.xlu0 %615
        %v617 = vsel %vm427, %v426, 0.0
        %618 = vadd.xlane.f32.xlu0 %v617
        %v619 = vpop.xlane.xlu0 %618
        %v620 = vld [vmem:[%s342] sm:$0xff]
        %v621 = vld [vmem:[%s342 + $0x8] sm:$0xff]
        %v622 = vld [vmem:[%s342 + $0x10] sm:$0xff]
        %v623 = vld [vmem:[%s342 + $0x18] sm:$0xff]
        %v624 = vld [vmem:[%s342 + $0x20] sm:$0xff]
        %v625 = vld [vmem:[%s342 + $0x28] sm:$0xff]
        %v626 = vld [vmem:[%s342 + $0x30] sm:$0xff]
        %v627 = vld [vmem:[%s342 + $0x38] sm:$0xff]
        %v628 = vld [vmem:[%s342 + $0x40] sm:$0xff]
        %v629 = vld [vmem:[%s342 + $0x48] sm:$0xff]
        %v630 = vld [vmem:[%s342 + $0x50] sm:$0xff]
        %v631 = vld [vmem:[%s342 + $0x58] sm:$0xff]
        %v632 = vld [vmem:[%s342 + $0x60] sm:$0xff]
        %v633 = vld [vmem:[%s342 + $0x68] sm:$0xff]
        %v634 = vld [vmem:[%s342 + $0x70] sm:$0xff]
        %v635 = vld [vmem:[%s342 + $0x78] sm:$0xff]
        %v636 = vld [vmem:[%s342 + $0x80] sm:$0xff]
        %v637 = vld [vmem:[%s342 + $0x88] sm:$0xff]
        %v638 = vld [vmem:[%s342 + $0x90] sm:$0xff]
        %v639 = vld [vmem:[%s342 + $0x98] sm:$0xff]
        %v640 = vld [vmem:[%s342 + $0xa0] sm:$0xff]
        %v641 = vld [vmem:[%s342 + $0xa8] sm:$0xff]
        %v642 = vld [vmem:[%s342 + $0xb0] sm:$0xff]
        %v643 = vld [vmem:[%s342 + $0xb8] sm:$0xff]
        %v644 = vld [vmem:[%s342 + $0xc0] sm:$0xff]
        %v645 = vld [vmem:[%s342 + $0xc8] sm:$0xff]
        %v646 = vld [vmem:[%s342 + $0xd0] sm:$0xff]
        %v647 = vld [vmem:[%s342 + $0xd8] sm:$0xff]
        %v648 = vld [vmem:[%s342 + $0xe0] sm:$0xff]
        %v649 = vld [vmem:[%s342 + $0xe8] sm:$0xff]
        %v650 = vld [vmem:[%s342 + $0xf0] sm:$0xff]
        %v651 = vld [vmem:[%s342 + $0xf8] sm:$0xff]
        %v652 = vld [vmem:[%s342 + $0x100] sm:$0xff]
        %v653 = vld [vmem:[%s342 + $0x108] sm:$0xff]
        %v654 = vld [vmem:[%s342 + $0x110] sm:$0xff]
        %v655 = vld [vmem:[%s342 + $0x118] sm:$0xff]
        %v656 = vld [vmem:[%s342 + $0x120] sm:$0xff]
        %v657 = vld [vmem:[%s342 + $0x128] sm:$0xff]
        %v658 = vld [vmem:[%s342 + $0x130] sm:$0xff]
        %v659 = vld [vmem:[%s342 + $0x138] sm:$0xff]
        %v660 = vld [vmem:[%s342 + $0x140] sm:$0xff]
        %v661 = vld [vmem:[%s342 + $0x148] sm:$0xff]
        %v662 = vld [vmem:[%s342 + $0x150] sm:$0xff]
        %v663 = vld [vmem:[%s342 + $0x158] sm:$0xff]
        %v664 = vld [vmem:[%s342 + $0x160] sm:$0xff]
        %v665 = vld [vmem:[%s342 + $0x168] sm:$0xff]
        %v666 = vld [vmem:[%s342 + $0x170] sm:$0xff]
        %v667 = vld [vmem:[%s342 + $0x178] sm:$0xff]
        %v668 = vld [vmem:[%s342 + $0x180] sm:$0xff]
        %v669 = vld [vmem:[%s342 + $0x188] sm:$0xff]
        %v670 = vld [vmem:[%s342 + $0x190] sm:$0xff]
        %v671 = vld [vmem:[%s342 + $0x198] sm:$0xff]
        %v672 = vld [vmem:[%s342 + $0x1a0] sm:$0xff]
        %v673 = vld [vmem:[%s342 + $0x1a8] sm:$0xff]
        %v674 = vld [vmem:[%s342 + $0x1b0] sm:$0xff]
        %v675 = vld [vmem:[%s342 + $0x1b8] sm:$0xff]
        %v676 = vld [vmem:[%s342 + $0x1c0] sm:$0xff]
        %v677 = vld [vmem:[%s342 + $0x1c8] sm:$0xff]
        %v678 = vld [vmem:[%s342 + $0x1d0] sm:$0xff]
        %v679 = vld [vmem:[%s342 + $0x1d8] sm:$0xff]
        %v680 = vld [vmem:[%s342 + $0x1e0] sm:$0xff]
        %v681 = vld [vmem:[%s342 + $0x1e8] sm:$0xff]
        %v682 = vld [vmem:[%s342 + $0x1f0] sm:$0xff]
        %v683 = vld [vmem:[%s342 + $0x1f8] sm:$0xff]
        %v684 = vsel %vm427, %v620, 0.0
        %685 = vadd.xlane.f32.xlu0 %v684
        %v686 = vpop.xlane.xlu0 %685
        %v687 = vsel %vm427, %v621, 0.0
        %688 = vadd.xlane.f32.xlu0 %v687
        %v689 = vpop.xlane.xlu0 %688
        %v690 = vsel %vm427, %v622, 0.0
        %691 = vadd.xlane.f32.xlu0 %v690
        %v692 = vpop.xlane.xlu0 %691
        %v693 = vsel %vm427, %v623, 0.0
        %694 = vadd.xlane.f32.xlu0 %v693
        %v695 = vpop.xlane.xlu0 %694
        %v696 = vsel %vm427, %v624, 0.0
        %697 = vadd.xlane.f32.xlu0 %v696
        %v698 = vpop.xlane.xlu0 %697
        %v699 = vsel %vm427, %v625, 0.0
        %700 = vadd.xlane.f32.xlu0 %v699
        %v701 = vpop.xlane.xlu0 %700
        %v702 = vsel %vm427, %v626, 0.0
        %703 = vadd.xlane.f32.xlu0 %v702
        %v704 = vpop.xlane.xlu0 %703
        %v705 = vsel %vm427, %v627, 0.0
        %706 = vadd.xlane.f32.xlu0 %v705
        %v707 = vpop.xlane.xlu0 %706
        %v708 = vsel %vm427, %v628, 0.0
        %709 = vadd.xlane.f32.xlu0 %v708
        %v710 = vpop.xlane.xlu0 %709
        %v711 = vsel %vm427, %v629, 0.0
        %712 = vadd.xlane.f32.xlu0 %v711
        %v713 = vpop.xlane.xlu0 %712
        %v714 = vsel %vm427, %v630, 0.0
        %715 = vadd.xlane.f32.xlu0 %v714
        %v716 = vpop.xlane.xlu0 %715
        %v717 = vsel %vm427, %v631, 0.0
        %718 = vadd.xlane.f32.xlu0 %v717
        %v719 = vpop.xlane.xlu0 %718
        %v720 = vsel %vm427, %v632, 0.0
        %721 = vadd.xlane.f32.xlu0 %v720
        %v722 = vpop.xlane.xlu0 %721
        %v723 = vsel %vm427, %v633, 0.0
        %724 = vadd.xlane.f32.xlu0 %v723
        %v725 = vpop.xlane.xlu0 %724
        %v726 = vsel %vm427, %v634, 0.0
        %727 = vadd.xlane.f32.xlu0 %v726
        %v728 = vpop.xlane.xlu0 %727
        %v729 = vsel %vm427, %v635, 0.0
        %730 = vadd.xlane.f32.xlu0 %v729
        %v731 = vpop.xlane.xlu0 %730
        %v732 = vsel %vm427, %v636, 0.0
        %733 = vadd.xlane.f32.xlu0 %v732
        %v734 = vpop.xlane.xlu0 %733
        %v735 = vsel %vm427, %v637, 0.0
        %736 = vadd.xlane.f32.xlu0 %v735
        %v737 = vpop.xlane.xlu0 %736
        %v738 = vsel %vm427, %v638, 0.0
        %739 = vadd.xlane.f32.xlu0 %v738
        %v740 = vpop.xlane.xlu0 %739
        %v741 = vsel %vm427, %v639, 0.0
        %742 = vadd.xlane.f32.xlu0 %v741
        %v743 = vpop.xlane.xlu0 %742
        %v744 = vsel %vm427, %v640, 0.0
        %745 = vadd.xlane.f32.xlu0 %v744
        %v746 = vpop.xlane.xlu0 %745
        %v747 = vsel %vm427, %v641, 0.0
        %748 = vadd.xlane.f32.xlu0 %v747
        %v749 = vpop.xlane.xlu0 %748
        %v750 = vsel %vm427, %v642, 0.0
        %751 = vadd.xlane.f32.xlu0 %v750
        %v752 = vpop.xlane.xlu0 %751
        %v753 = vsel %vm427, %v643, 0.0
        %754 = vadd.xlane.f32.xlu0 %v753
        %v755 = vpop.xlane.xlu0 %754
        %v756 = vsel %vm427, %v644, 0.0
        %757 = vadd.xlane.f32.xlu0 %v756
        %v758 = vpop.xlane.xlu0 %757
        %v759 = vsel %vm427, %v645, 0.0
        %760 = vadd.xlane.f32.xlu0 %v759
        %v761 = vpop.xlane.xlu0 %760
        %v762 = vsel %vm427, %v646, 0.0
        %763 = vadd.xlane.f32.xlu0 %v762
        %v764 = vpop.xlane.xlu0 %763
        %v765 = vsel %vm427, %v647, 0.0
        %766 = vadd.xlane.f32.xlu0 %v765
        %v767 = vpop.xlane.xlu0 %766
        %v768 = vsel %vm427, %v648, 0.0
        %769 = vadd.xlane.f32.xlu0 %v768
        %v770 = vpop.xlane.xlu0 %769
        %v771 = vsel %vm427, %v649, 0.0
        %772 = vadd.xlane.f32.xlu0 %v771
        %v773 = vpop.xlane.xlu0 %772
        %v774 = vsel %vm427, %v650, 0.0
        %775 = vadd.xlane.f32.xlu0 %v774
        %v776 = vpop.xlane.xlu0 %775
        %v777 = vsel %vm427, %v651, 0.0
        %778 = vadd.xlane.f32.xlu0 %v777
        %v779 = vpop.xlane.xlu0 %778
        %v780 = vsel %vm427, %v652, 0.0
        %781 = vadd.xlane.f32.xlu0 %v780
        %v782 = vpop.xlane.xlu0 %781
        %v783 = vsel %vm427, %v653, 0.0
        %784 = vadd.xlane.f32.xlu0 %v783
        %v785 = vpop.xlane.xlu0 %784
        %v786 = vsel %vm427, %v654, 0.0
        %787 = vadd.xlane.f32.xlu0 %v786
        %v788 = vpop.xlane.xlu0 %787
        %v789 = vsel %vm427, %v655, 0.0
        %790 = vadd.xlane.f32.xlu0 %v789
        %v791 = vpop.xlane.xlu0 %790
        %v792 = vsel %vm427, %v656, 0.0
        %793 = vadd.xlane.f32.xlu0 %v792
        %v794 = vpop.xlane.xlu0 %793
        %v795 = vsel %vm427, %v657, 0.0
        %796 = vadd.xlane.f32.xlu0 %v795
        %v797 = vpop.xlane.xlu0 %796
        %v798 = vsel %vm427, %v658, 0.0
        %799 = vadd.xlane.f32.xlu0 %v798
        %v800 = vpop.xlane.xlu0 %799
        %v801 = vsel %vm427, %v659, 0.0
        %802 = vadd.xlane.f32.xlu0 %v801
        %v803 = vpop.xlane.xlu0 %802
        %v804 = vsel %vm427, %v660, 0.0
        %805 = vadd.xlane.f32.xlu0 %v804
        %v806 = vpop.xlane.xlu0 %805
        %v807 = vsel %vm427, %v661, 0.0
        %808 = vadd.xlane.f32.xlu0 %v807
        %v809 = vpop.xlane.xlu0 %808
        %v810 = vsel %vm427, %v662, 0.0
        %811 = vadd.xlane.f32.xlu0 %v810
        %v812 = vpop.xlane.xlu0 %811
        %v813 = vsel %vm427, %v663, 0.0
        %814 = vadd.xlane.f32.xlu0 %v813
        %v815 = vpop.xlane.xlu0 %814
        %v816 = vsel %vm427, %v664, 0.0
        %817 = vadd.xlane.f32.xlu0 %v816
        %v818 = vpop.xlane.xlu0 %817
        %v819 = vsel %vm427, %v665, 0.0
        %820 = vadd.xlane.f32.xlu0 %v819
        %v821 = vpop.xlane.xlu0 %820
        %v822 = vsel %vm427, %v666, 0.0
        %823 = vadd.xlane.f32.xlu0 %v822
        %v824 = vpop.xlane.xlu0 %823
        %v825 = vsel %vm427, %v667, 0.0
        %826 = vadd.xlane.f32.xlu0 %v825
        %v827 = vpop.xlane.xlu0 %826
        %v828 = vsel %vm427, %v668, 0.0
        %829 = vadd.xlane.f32.xlu0 %v828
        %v830 = vpop.xlane.xlu0 %829
        %v831 = vsel %vm427, %v669, 0.0
        %832 = vadd.xlane.f32.xlu0 %v831
        %v833 = vpop.xlane.xlu0 %832
        %v834 = vsel %vm427, %v670, 0.0
        %835 = vadd.xlane.f32.xlu0 %v834
        %v836 = vpop.xlane.xlu0 %835
        %v837 = vsel %vm427, %v671, 0.0
        %838 = vadd.xlane.f32.xlu0 %v837
        %v839 = vpop.xlane.xlu0 %838
        %v840 = vsel %vm427, %v672, 0.0
        %841 = vadd.xlane.f32.xlu0 %v840
        %v842 = vpop.xlane.xlu0 %841
        %v843 = vsel %vm427, %v673, 0.0
        %844 = vadd.xlane.f32.xlu0 %v843
        %v845 = vpop.xlane.xlu0 %844
        %v846 = vsel %vm427, %v674, 0.0
        %847 = vadd.xlane.f32.xlu0 %v846
        %v848 = vpop.xlane.xlu0 %847
        %v849 = vsel %vm427, %v675, 0.0
        %850 = vadd.xlane.f32.xlu0 %v849
        %v851 = vpop.xlane.xlu0 %850
        %v852 = vsel %vm427, %v676, 0.0
        %853 = vadd.xlane.f32.xlu0 %v852
        %v854 = vpop.xlane.xlu0 %853
        %v855 = vsel %vm427, %v677, 0.0
        %856 = vadd.xlane.f32.xlu0 %v855
        %v857 = vpop.xlane.xlu0 %856
        %v858 = vsel %vm427, %v678, 0.0
        %859 = vadd.xlane.f32.xlu0 %v858
        %v860 = vpop.xlane.xlu0 %859
        %v861 = vsel %vm427, %v679, 0.0
        %862 = vadd.xlane.f32.xlu0 %v861
        %v863 = vpop.xlane.xlu0 %862
        %v864 = vsel %vm427, %v680, 0.0
        %865 = vadd.xlane.f32.xlu0 %v864
        %v866 = vpop.xlane.xlu0 %865
        %v867 = vsel %vm427, %v681, 0.0
        %868 = vadd.xlane.f32.xlu0 %v867
        %v869 = vpop.xlane.xlu0 %868
        %v870 = vsel %vm427, %v682, 0.0
        %871 = vadd.xlane.f32.xlu0 %v870
        %v872 = vpop.xlane.xlu0 %871
        %v873 = vsel %vm427, %v683, 0.0
        %874 = vadd.xlane.f32.xlu0 %v873
        %v875 = vpop.xlane.xlu0 %874
        %v876 = vld [vmem:[%s352] sm:$0xff]
        %v877 = vld [vmem:[%s352 + $0x8] sm:$0xff]
        %v878 = vld [vmem:[%s352 + $0x10] sm:$0xff]
        %v879 = vld [vmem:[%s352 + $0x18] sm:$0xff]
        %v880 = vld [vmem:[%s352 + $0x20] sm:$0xff]
        %v881 = vld [vmem:[%s352 + $0x28] sm:$0xff]
        %v882 = vld [vmem:[%s352 + $0x30] sm:$0xff]
        %v883 = vld [vmem:[%s352 + $0x38] sm:$0xff]
        %v884 = vld [vmem:[%s352 + $0x40] sm:$0xff]
        %v885 = vld [vmem:[%s352 + $0x48] sm:$0xff]
        %v886 = vld [vmem:[%s352 + $0x50] sm:$0xff]
        %v887 = vld [vmem:[%s352 + $0x58] sm:$0xff]
        %v888 = vld [vmem:[%s352 + $0x60] sm:$0xff]
        %v889 = vld [vmem:[%s352 + $0x68] sm:$0xff]
        %v890 = vld [vmem:[%s352 + $0x70] sm:$0xff]
        %v891 = vld [vmem:[%s352 + $0x78] sm:$0xff]
        %v892 = vld [vmem:[%s352 + $0x80] sm:$0xff]
        %v893 = vld [vmem:[%s352 + $0x88] sm:$0xff]
        %v894 = vld [vmem:[%s352 + $0x90] sm:$0xff]
        %v895 = vld [vmem:[%s352 + $0x98] sm:$0xff]
        %v896 = vld [vmem:[%s352 + $0xa0] sm:$0xff]
        %v897 = vld [vmem:[%s352 + $0xa8] sm:$0xff]
        %v898 = vld [vmem:[%s352 + $0xb0] sm:$0xff]
        %v899 = vld [vmem:[%s352 + $0xb8] sm:$0xff]
        %v900 = vld [vmem:[%s352 + $0xc0] sm:$0xff]
        %v901 = vld [vmem:[%s352 + $0xc8] sm:$0xff]
        %v902 = vld [vmem:[%s352 + $0xd0] sm:$0xff]
        %v903 = vld [vmem:[%s352 + $0xd8] sm:$0xff]
        %v904 = vld [vmem:[%s352 + $0xe0] sm:$0xff]
        %v905 = vld [vmem:[%s352 + $0xe8] sm:$0xff]
        %v906 = vld [vmem:[%s352 + $0xf0] sm:$0xff]
        %v907 = vld [vmem:[%s352 + $0xf8] sm:$0xff]
        %v908 = vld [vmem:[%s352 + $0x100] sm:$0xff]
        %v909 = vld [vmem:[%s352 + $0x108] sm:$0xff]
        %v910 = vld [vmem:[%s352 + $0x110] sm:$0xff]
        %v911 = vld [vmem:[%s352 + $0x118] sm:$0xff]
        %v912 = vld [vmem:[%s352 + $0x120] sm:$0xff]
        %v913 = vld [vmem:[%s352 + $0x128] sm:$0xff]
        %v914 = vld [vmem:[%s352 + $0x130] sm:$0xff]
        %v915 = vld [vmem:[%s352 + $0x138] sm:$0xff]
        %v916 = vld [vmem:[%s352 + $0x140] sm:$0xff]
        %v917 = vld [vmem:[%s352 + $0x148] sm:$0xff]
        %v918 = vld [vmem:[%s352 + $0x150] sm:$0xff]
        %v919 = vld [vmem:[%s352 + $0x158] sm:$0xff]
        %v920 = vld [vmem:[%s352 + $0x160] sm:$0xff]
        %v921 = vld [vmem:[%s352 + $0x168] sm:$0xff]
        %v922 = vld [vmem:[%s352 + $0x170] sm:$0xff]
        %v923 = vld [vmem:[%s352 + $0x178] sm:$0xff]
        %v924 = vld [vmem:[%s352 + $0x180] sm:$0xff]
        %v925 = vld [vmem:[%s352 + $0x188] sm:$0xff]
        %v926 = vld [vmem:[%s352 + $0x190] sm:$0xff]
        %v927 = vld [vmem:[%s352 + $0x198] sm:$0xff]
        %v928 = vld [vmem:[%s352 + $0x1a0] sm:$0xff]
        %v929 = vld [vmem:[%s352 + $0x1a8] sm:$0xff]
        %v930 = vld [vmem:[%s352 + $0x1b0] sm:$0xff]
        %v931 = vld [vmem:[%s352 + $0x1b8] sm:$0xff]
        %v932 = vld [vmem:[%s352 + $0x1c0] sm:$0xff]
        %v933 = vld [vmem:[%s352 + $0x1c8] sm:$0xff]
        %v934 = vld [vmem:[%s352 + $0x1d0] sm:$0xff]
        %v935 = vld [vmem:[%s352 + $0x1d8] sm:$0xff]
        %v936 = vld [vmem:[%s352 + $0x1e0] sm:$0xff]
        %v937 = vld [vmem:[%s352 + $0x1e8] sm:$0xff]
        %v938 = vld [vmem:[%s352 + $0x1f0] sm:$0xff]
        %v939 = vld [vmem:[%s352 + $0x1f8] sm:$0xff]
        %v940 = vsel %vm427, %v876, 0.0
        %941 = vadd.xlane.f32.xlu0 %v940
        %v942 = vpop.xlane.xlu0 %941
        %v943 = vsel %vm427, %v877, 0.0
        %944 = vadd.xlane.f32.xlu0 %v943
        %v945 = vpop.xlane.xlu0 %944
        %v946 = vsel %vm427, %v878, 0.0
        %947 = vadd.xlane.f32.xlu0 %v946
        %v948 = vpop.xlane.xlu0 %947
        %v949 = vsel %vm427, %v879, 0.0
        %950 = vadd.xlane.f32.xlu0 %v949
        %v951 = vpop.xlane.xlu0 %950
        %v952 = vsel %vm427, %v880, 0.0
        %953 = vadd.xlane.f32.xlu0 %v952
        %v954 = vpop.xlane.xlu0 %953
        %v955 = vsel %vm427, %v881, 0.0
        %956 = vadd.xlane.f32.xlu0 %v955
        %v957 = vpop.xlane.xlu0 %956
        %v958 = vsel %vm427, %v882, 0.0
        %959 = vadd.xlane.f32.xlu0 %v958
        %v960 = vpop.xlane.xlu0 %959
        %v961 = vsel %vm427, %v883, 0.0
        %962 = vadd.xlane.f32.xlu0 %v961
        %v963 = vpop.xlane.xlu0 %962
        %v964 = vsel %vm427, %v884, 0.0
        %965 = vadd.xlane.f32.xlu0 %v964
        %v966 = vpop.xlane.xlu0 %965
        %v967 = vsel %vm427, %v885, 0.0
        %968 = vadd.xlane.f32.xlu0 %v967
        %v969 = vpop.xlane.xlu0 %968
        %v970 = vsel %vm427, %v886, 0.0
        %971 = vadd.xlane.f32.xlu0 %v970
        %v972 = vpop.xlane.xlu0 %971
        %v973 = vsel %vm427, %v887, 0.0
        %974 = vadd.xlane.f32.xlu0 %v973
        %v975 = vpop.xlane.xlu0 %974
        %v976 = vsel %vm427, %v888, 0.0
        %977 = vadd.xlane.f32.xlu0 %v976
        %v978 = vpop.xlane.xlu0 %977
        %v979 = vsel %vm427, %v889, 0.0
        %980 = vadd.xlane.f32.xlu0 %v979
        %v981 = vpop.xlane.xlu0 %980
        %v982 = vsel %vm427, %v890, 0.0
        %983 = vadd.xlane.f32.xlu0 %v982
        %v984 = vpop.xlane.xlu0 %983
        %v985 = vsel %vm427, %v891, 0.0
        %986 = vadd.xlane.f32.xlu0 %v985
        %v987 = vpop.xlane.xlu0 %986
        %v988 = vsel %vm427, %v892, 0.0
        %989 = vadd.xlane.f32.xlu0 %v988
        %v990 = vpop.xlane.xlu0 %989
        %v991 = vsel %vm427, %v893, 0.0
        %992 = vadd.xlane.f32.xlu0 %v991
        %v993 = vpop.xlane.xlu0 %992
        %v994 = vsel %vm427, %v894, 0.0
        %995 = vadd.xlane.f32.xlu0 %v994
        %v996 = vpop.xlane.xlu0 %995
        %v997 = vsel %vm427, %v895, 0.0
        %998 = vadd.xlane.f32.xlu0 %v997
        %v999 = vpop.xlane.xlu0 %998
        %v1000 = vsel %vm427, %v896, 0.0
        %1001 = vadd.xlane.f32.xlu0 %v1000
        %v1002 = vpop.xlane.xlu0 %1001
        %v1003 = vsel %vm427, %v897, 0.0
        %1004 = vadd.xlane.f32.xlu0 %v1003
        %v1005 = vpop.xlane.xlu0 %1004
        %v1006 = vsel %vm427, %v898, 0.0
        %1007 = vadd.xlane.f32.xlu0 %v1006
        %v1008 = vpop.xlane.xlu0 %1007
        %v1009 = vsel %vm427, %v899, 0.0
        %1010 = vadd.xlane.f32.xlu0 %v1009
        %v1011 = vpop.xlane.xlu0 %1010
        %v1012 = vsel %vm427, %v900, 0.0
        %1013 = vadd.xlane.f32.xlu0 %v1012
        %v1014 = vpop.xlane.xlu0 %1013
        %v1015 = vsel %vm427, %v901, 0.0
        %1016 = vadd.xlane.f32.xlu0 %v1015
        %v1017 = vpop.xlane.xlu0 %1016
        %v1018 = vsel %vm427, %v902, 0.0
        %1019 = vadd.xlane.f32.xlu0 %v1018
        %v1020 = vpop.xlane.xlu0 %1019
        %v1021 = vsel %vm427, %v903, 0.0
        %1022 = vadd.xlane.f32.xlu0 %v1021
        %v1023 = vpop.xlane.xlu0 %1022
        %v1024 = vsel %vm427, %v904, 0.0
        %1025 = vadd.xlane.f32.xlu0 %v1024
        %v1026 = vpop.xlane.xlu0 %1025
        %v1027 = vsel %vm427, %v905, 0.0
        %1028 = vadd.xlane.f32.xlu0 %v1027
        %v1029 = vpop.xlane.xlu0 %1028
        %v1030 = vsel %vm427, %v906, 0.0
        %1031 = vadd.xlane.f32.xlu0 %v1030
        %v1032 = vpop.xlane.xlu0 %1031
        %v1033 = vsel %vm427, %v907, 0.0
        %1034 = vadd.xlane.f32.xlu0 %v1033
        %v1035 = vpop.xlane.xlu0 %1034
        %v1036 = vsel %vm427, %v908, 0.0
        %1037 = vadd.xlane.f32.xlu0 %v1036
        %v1038 = vpop.xlane.xlu0 %1037
        %v1039 = vsel %vm427, %v909, 0.0
        %1040 = vadd.xlane.f32.xlu0 %v1039
        %v1041 = vpop.xlane.xlu0 %1040
        %v1042 = vsel %vm427, %v910, 0.0
        %1043 = vadd.xlane.f32.xlu0 %v1042
        %v1044 = vpop.xlane.xlu0 %1043
        %v1045 = vsel %vm427, %v911, 0.0
        %1046 = vadd.xlane.f32.xlu0 %v1045
        %v1047 = vpop.xlane.xlu0 %1046
        %v1048 = vsel %vm427, %v912, 0.0
        %1049 = vadd.xlane.f32.xlu0 %v1048
        %v1050 = vpop.xlane.xlu0 %1049
        %v1051 = vsel %vm427, %v913, 0.0
        %1052 = vadd.xlane.f32.xlu0 %v1051
        %v1053 = vpop.xlane.xlu0 %1052
        %v1054 = vsel %vm427, %v914, 0.0
        %1055 = vadd.xlane.f32.xlu0 %v1054
        %v1056 = vpop.xlane.xlu0 %1055
        %v1057 = vsel %vm427, %v915, 0.0
        %1058 = vadd.xlane.f32.xlu0 %v1057
        %v1059 = vpop.xlane.xlu0 %1058
        %v1060 = vsel %vm427, %v916, 0.0
        %1061 = vadd.xlane.f32.xlu0 %v1060
        %v1062 = vpop.xlane.xlu0 %1061
        %v1063 = vsel %vm427, %v917, 0.0
        %1064 = vadd.xlane.f32.xlu0 %v1063
        %v1065 = vpop.xlane.xlu0 %1064
        %v1066 = vsel %vm427, %v918, 0.0
        %1067 = vadd.xlane.f32.xlu0 %v1066
        %v1068 = vpop.xlane.xlu0 %1067
        %v1069 = vsel %vm427, %v919, 0.0
        %1070 = vadd.xlane.f32.xlu0 %v1069
        %v1071 = vpop.xlane.xlu0 %1070
        %v1072 = vsel %vm427, %v920, 0.0
        %1073 = vadd.xlane.f32.xlu0 %v1072
        %v1074 = vpop.xlane.xlu0 %1073
        %v1075 = vsel %vm427, %v921, 0.0
        %1076 = vadd.xlane.f32.xlu0 %v1075
        %v1077 = vpop.xlane.xlu0 %1076
        %v1078 = vsel %vm427, %v922, 0.0
        %1079 = vadd.xlane.f32.xlu0 %v1078
        %v1080 = vpop.xlane.xlu0 %1079
        %v1081 = vsel %vm427, %v923, 0.0
        %1082 = vadd.xlane.f32.xlu0 %v1081
        %v1083 = vpop.xlane.xlu0 %1082
        %v1084 = vsel %vm427, %v924, 0.0
        %1085 = vadd.xlane.f32.xlu0 %v1084
        %v1086 = vpop.xlane.xlu0 %1085
        %v1087 = vsel %vm427, %v925, 0.0
        %1088 = vadd.xlane.f32.xlu0 %v1087
        %v1089 = vpop.xlane.xlu0 %1088
        %v1090 = vsel %vm427, %v926, 0.0
        %1091 = vadd.xlane.f32.xlu0 %v1090
        %v1092 = vpop.xlane.xlu0 %1091
        %v1093 = vsel %vm427, %v927, 0.0
        %1094 = vadd.xlane.f32.xlu0 %v1093
        %v1095 = vpop.xlane.xlu0 %1094
        %v1096 = vsel %vm427, %v928, 0.0
        %1097 = vadd.xlane.f32.xlu0 %v1096
        %v1098 = vpop.xlane.xlu0 %1097
        %v1099 = vsel %vm427, %v929, 0.0
        %1100 = vadd.xlane.f32.xlu0 %v1099
        %v1101 = vpop.xlane.xlu0 %1100
        %v1102 = vsel %vm427, %v930, 0.0
        %1103 = vadd.xlane.f32.xlu0 %v1102
        %v1104 = vpop.xlane.xlu0 %1103
        %v1105 = vsel %vm427, %v931, 0.0
        %1106 = vadd.xlane.f32.xlu0 %v1105
        %v1107 = vpop.xlane.xlu0 %1106
        %v1108 = vsel %vm427, %v932, 0.0
        %1109 = vadd.xlane.f32.xlu0 %v1108
        %v1110 = vpop.xlane.xlu0 %1109
        %v1111 = vsel %vm427, %v933, 0.0
        %1112 = vadd.xlane.f32.xlu0 %v1111
        %v1113 = vpop.xlane.xlu0 %1112
        %v1114 = vsel %vm427, %v934, 0.0
        %1115 = vadd.xlane.f32.xlu0 %v1114
        %v1116 = vpop.xlane.xlu0 %1115
        %v1117 = vsel %vm427, %v935, 0.0
        %1118 = vadd.xlane.f32.xlu0 %v1117
        %v1119 = vpop.xlane.xlu0 %1118
        %v1120 = vsel %vm427, %v936, 0.0
        %1121 = vadd.xlane.f32.xlu0 %v1120
        %v1122 = vpop.xlane.xlu0 %1121
        %v1123 = vsel %vm427, %v937, 0.0
        %1124 = vadd.xlane.f32.xlu0 %v1123
        %v1125 = vpop.xlane.xlu0 %1124
        %v1126 = vsel %vm427, %v938, 0.0
        %1127 = vadd.xlane.f32.xlu0 %v1126
        %v1128 = vpop.xlane.xlu0 %1127
        %v1129 = vsel %vm427, %v939, 0.0
        %1130 = vadd.xlane.f32.xlu0 %v1129
        %v1131 = vpop.xlane.xlu0 %1130
        %v1132 = vld [vmem:[#allocation5] sm:$0xff]
        %v1133 = vld [vmem:[#allocation5 + $0x8] sm:$0xff]
        %v1134 = vld [vmem:[#allocation5 + $0x10] sm:$0xff]
        %v1135 = vld [vmem:[#allocation5 + $0x18] sm:$0xff]
        %v1136 = vld [vmem:[#allocation5 + $0x60] sm:$0xff]
        %v1137 = vld [vmem:[#allocation5 + $0x68] sm:$0xff]
        %v1138 = vld [vmem:[#allocation5 + $0x70] sm:$0xff]
        %v1139 = vld [vmem:[#allocation5 + $0x78] sm:$0xff]
        %v1140 = vld [vmem:[#allocation5 + $0xc0] sm:$0xff]
        %v1141 = vld [vmem:[#allocation5 + $0xc8] sm:$0xff]
        %v1142 = vld [vmem:[#allocation5 + $0xd0] sm:$0xff]
        %v1143 = vld [vmem:[#allocation5 + $0xd8] sm:$0xff]
        %v1144 = vld [vmem:[#allocation5 + $0x120] sm:$0xff]
        %v1145 = vld [vmem:[#allocation5 + $0x128] sm:$0xff]
        %v1146 = vld [vmem:[#allocation5 + $0x130] sm:$0xff]
        %v1147 = vld [vmem:[#allocation5 + $0x138] sm:$0xff]
        %v1148 = vld [vmem:[#allocation5 + $0x180] sm:$0xff]
        %v1149 = vld [vmem:[#allocation5 + $0x188] sm:$0xff]
        %v1150 = vld [vmem:[#allocation5 + $0x190] sm:$0xff]
        %v1151 = vld [vmem:[#allocation5 + $0x198] sm:$0xff]
        %v1152 = vld [vmem:[#allocation5 + $0x1e0] sm:$0xff]
        %v1153 = vld [vmem:[#allocation5 + $0x1e8] sm:$0xff]
        %v1154 = vld [vmem:[#allocation5 + $0x1f0] sm:$0xff]
        %v1155 = vld [vmem:[#allocation5 + $0x1f8] sm:$0xff]
        %v1156 = vld [vmem:[#allocation5 + $0x240] sm:$0xff]
        %v1157 = vld [vmem:[#allocation5 + $0x248] sm:$0xff]
        %v1158 = vld [vmem:[#allocation5 + $0x250] sm:$0xff]
        %v1159 = vld [vmem:[#allocation5 + $0x258] sm:$0xff]
        %v1160 = vld [vmem:[#allocation5 + $0x2a0] sm:$0xff]
        %v1161 = vld [vmem:[#allocation5 + $0x2a8] sm:$0xff]
        %v1162 = vld [vmem:[#allocation5 + $0x2b0] sm:$0xff]
        %v1163 = vld [vmem:[#allocation5 + $0x2b8] sm:$0xff]
        %v1164 = vld [vmem:[#allocation5 + $0x300] sm:$0xff]
        %v1165 = vld [vmem:[#allocation5 + $0x308] sm:$0xff]
        %v1166 = vld [vmem:[#allocation5 + $0x310] sm:$0xff]
        %v1167 = vld [vmem:[#allocation5 + $0x318] sm:$0xff]
        %v1168 = vld [vmem:[#allocation5 + $0x360] sm:$0xff]
        %v1169 = vld [vmem:[#allocation5 + $0x368] sm:$0xff]
        %v1170 = vld [vmem:[#allocation5 + $0x370] sm:$0xff]
        %v1171 = vld [vmem:[#allocation5 + $0x378] sm:$0xff]
        %v1172 = vld [vmem:[#allocation5 + $0x3c0] sm:$0xff]
        %v1173 = vld [vmem:[#allocation5 + $0x3c8] sm:$0xff]
        %v1174 = vld [vmem:[#allocation5 + $0x3d0] sm:$0xff]
        %v1175 = vld [vmem:[#allocation5 + $0x3d8] sm:$0xff]
        %v1176 = vld [vmem:[#allocation5 + $0x420] sm:$0xff]
        %v1177 = vld [vmem:[#allocation5 + $0x428] sm:$0xff]
        %v1178 = vld [vmem:[#allocation5 + $0x430] sm:$0xff]
        %v1179 = vld [vmem:[#allocation5 + $0x438] sm:$0xff]
        %v1180 = vld [vmem:[#allocation5 + $0x480] sm:$0xff]
        %v1181 = vld [vmem:[#allocation5 + $0x488] sm:$0xff]
        %v1182 = vld [vmem:[#allocation5 + $0x490] sm:$0xff]
        %v1183 = vld [vmem:[#allocation5 + $0x498] sm:$0xff]
        %v1184 = vld [vmem:[#allocation5 + $0x4e0] sm:$0xff]
        %v1185 = vld [vmem:[#allocation5 + $0x4e8] sm:$0xff]
        %v1186 = vld [vmem:[#allocation5 + $0x4f0] sm:$0xff]
        %v1187 = vld [vmem:[#allocation5 + $0x4f8] sm:$0xff]
        %v1188 = vld [vmem:[#allocation5 + $0x540] sm:$0xff]
        %v1189 = vld [vmem:[#allocation5 + $0x548] sm:$0xff]
        %v1190 = vld [vmem:[#allocation5 + $0x550] sm:$0xff]
        %v1191 = vld [vmem:[#allocation5 + $0x558] sm:$0xff]
        %v1192 = vld [vmem:[#allocation5 + $0x5a0] sm:$0xff]
        %v1193 = vld [vmem:[#allocation5 + $0x5a8] sm:$0xff]
        %v1194 = vld [vmem:[#allocation5 + $0x5b0] sm:$0xff]
        %v1195 = vld [vmem:[#allocation5 + $0x5b8] sm:$0xff]
        %v1196 = vld [vmem:[#allocation5 + $0x600] sm:$0xff]
        %v1197 = vld [vmem:[#allocation5 + $0x608] sm:$0xff]
        %v1198 = vld [vmem:[#allocation5 + $0x610] sm:$0xff]
        %v1199 = vld [vmem:[#allocation5 + $0x618] sm:$0xff]
        %v1200 = vld [vmem:[#allocation5 + $0x660] sm:$0xff]
        %v1201 = vld [vmem:[#allocation5 + $0x668] sm:$0xff]
        %v1202 = vld [vmem:[#allocation5 + $0x670] sm:$0xff]
        %v1203 = vld [vmem:[#allocation5 + $0x678] sm:$0xff]
        %v1204 = vld [vmem:[#allocation5 + $0x6c0] sm:$0xff]
        %v1205 = vld [vmem:[#allocation5 + $0x6c8] sm:$0xff]
        %v1206 = vld [vmem:[#allocation5 + $0x6d0] sm:$0xff]
        %v1207 = vld [vmem:[#allocation5 + $0x6d8] sm:$0xff]
        %v1208 = vld [vmem:[#allocation5 + $0x720] sm:$0xff]
        %v1209 = vld [vmem:[#allocation5 + $0x728] sm:$0xff]
        %v1210 = vld [vmem:[#allocation5 + $0x730] sm:$0xff]
        %v1211 = vld [vmem:[#allocation5 + $0x738] sm:$0xff]
        %v1212 = vld [vmem:[#allocation5 + $0x780] sm:$0xff]
        %v1213 = vld [vmem:[#allocation5 + $0x788] sm:$0xff]
        %v1214 = vld [vmem:[#allocation5 + $0x790] sm:$0xff]
        %v1215 = vld [vmem:[#allocation5 + $0x798] sm:$0xff]
        %v1216 = vld [vmem:[#allocation5 + $0x7e0] sm:$0xff]
        %v1217 = vld [vmem:[#allocation5 + $0x7e8] sm:$0xff]
        %v1218 = vld [vmem:[#allocation5 + $0x7f0] sm:$0xff]
        %v1219 = vld [vmem:[#allocation5 + $0x7f8] sm:$0xff]
        %v1220 = vld [vmem:[#allocation5 + $0x840] sm:$0xff]
        %v1221 = vld [vmem:[#allocation5 + $0x848] sm:$0xff]
        %v1222 = vld [vmem:[#allocation5 + $0x850] sm:$0xff]
        %v1223 = vld [vmem:[#allocation5 + $0x858] sm:$0xff]
        %v1224 = vld [vmem:[#allocation5 + $0x8a0] sm:$0xff]
        %v1225 = vld [vmem:[#allocation5 + $0x8a8] sm:$0xff]
        %v1226 = vld [vmem:[#allocation5 + $0x8b0] sm:$0xff]
        %v1227 = vld [vmem:[#allocation5 + $0x8b8] sm:$0xff]
        %v1228 = vld [vmem:[#allocation5 + $0x900] sm:$0xff]
        %v1229 = vld [vmem:[#allocation5 + $0x908] sm:$0xff]
        %v1230 = vld [vmem:[#allocation5 + $0x910] sm:$0xff]
        %v1231 = vld [vmem:[#allocation5 + $0x918] sm:$0xff]
        %v1232 = vld [vmem:[#allocation5 + $0x960] sm:$0xff]
        %v1233 = vld [vmem:[#allocation5 + $0x968] sm:$0xff]
        %v1234 = vld [vmem:[#allocation5 + $0x970] sm:$0xff]
        %v1235 = vld [vmem:[#allocation5 + $0x978] sm:$0xff]
        %v1236 = vld [vmem:[#allocation5 + $0x9c0] sm:$0xff]
        %v1237 = vld [vmem:[#allocation5 + $0x9c8] sm:$0xff]
        %v1238 = vld [vmem:[#allocation5 + $0x9d0] sm:$0xff]
        %v1239 = vld [vmem:[#allocation5 + $0x9d8] sm:$0xff]
        %v1240 = vld [vmem:[#allocation5 + $0xa20] sm:$0xff]
        %v1241 = vld [vmem:[#allocation5 + $0xa28] sm:$0xff]
        %v1242 = vld [vmem:[#allocation5 + $0xa30] sm:$0xff]
        %v1243 = vld [vmem:[#allocation5 + $0xa38] sm:$0xff]
        %v1244 = vld [vmem:[#allocation5 + $0xa80] sm:$0xff]
        %v1245 = vld [vmem:[#allocation5 + $0xa88] sm:$0xff]
        %v1246 = vld [vmem:[#allocation5 + $0xa90] sm:$0xff]
        %v1247 = vld [vmem:[#allocation5 + $0xa98] sm:$0xff]
        %v1248 = vld [vmem:[#allocation5 + $0xae0] sm:$0xff]
        %v1249 = vld [vmem:[#allocation5 + $0xae8] sm:$0xff]
        %v1250 = vld [vmem:[#allocation5 + $0xaf0] sm:$0xff]
        %v1251 = vld [vmem:[#allocation5 + $0xaf8] sm:$0xff]
        %v1252 = vld [vmem:[#allocation5 + $0xb40] sm:$0xff]
        %v1253 = vld [vmem:[#allocation5 + $0xb48] sm:$0xff]
        %v1254 = vld [vmem:[#allocation5 + $0xb50] sm:$0xff]
        %v1255 = vld [vmem:[#allocation5 + $0xb58] sm:$0xff]
        %v1256 = vld [vmem:[#allocation5 + $0xba0] sm:$0xff]
        %v1257 = vld [vmem:[#allocation5 + $0xba8] sm:$0xff]
        %v1258 = vld [vmem:[#allocation5 + $0xbb0] sm:$0xff]
        %v1259 = vld [vmem:[#allocation5 + $0xbb8] sm:$0xff]
        %v1260 = vld [vmem:[#allocation5 + $0xc00] sm:$0xff]
        %v1261 = vld [vmem:[#allocation5 + $0xc08] sm:$0xff]
        %v1262 = vld [vmem:[#allocation5 + $0xc10] sm:$0xff]
        %v1263 = vld [vmem:[#allocation5 + $0xc18] sm:$0xff]
        %v1264 = vld [vmem:[#allocation5 + $0xc60] sm:$0xff]
        %v1265 = vld [vmem:[#allocation5 + $0xc68] sm:$0xff]
        %v1266 = vld [vmem:[#allocation5 + $0xc70] sm:$0xff]
        %v1267 = vld [vmem:[#allocation5 + $0xc78] sm:$0xff]
        %v1268 = vld [vmem:[#allocation5 + $0xcc0] sm:$0xff]
        %v1269 = vld [vmem:[#allocation5 + $0xcc8] sm:$0xff]
        %v1270 = vld [vmem:[#allocation5 + $0xcd0] sm:$0xff]
        %v1271 = vld [vmem:[#allocation5 + $0xcd8] sm:$0xff]
        %v1272 = vld [vmem:[#allocation5 + $0xd20] sm:$0xff]
        %v1273 = vld [vmem:[#allocation5 + $0xd28] sm:$0xff]
        %v1274 = vld [vmem:[#allocation5 + $0xd30] sm:$0xff]
        %v1275 = vld [vmem:[#allocation5 + $0xd38] sm:$0xff]
        %v1276 = vld [vmem:[#allocation5 + $0xd80] sm:$0xff]
        %v1277 = vld [vmem:[#allocation5 + $0xd88] sm:$0xff]
        %v1278 = vld [vmem:[#allocation5 + $0xd90] sm:$0xff]
        %v1279 = vld [vmem:[#allocation5 + $0xd98] sm:$0xff]
        %v1280 = vld [vmem:[#allocation5 + $0xde0] sm:$0xff]
        %v1281 = vld [vmem:[#allocation5 + $0xde8] sm:$0xff]
        %v1282 = vld [vmem:[#allocation5 + $0xdf0] sm:$0xff]
        %v1283 = vld [vmem:[#allocation5 + $0xdf8] sm:$0xff]
        %v1284 = vld [vmem:[#allocation5 + $0xe40] sm:$0xff]
        %v1285 = vld [vmem:[#allocation5 + $0xe48] sm:$0xff]
        %v1286 = vld [vmem:[#allocation5 + $0xe50] sm:$0xff]
        %v1287 = vld [vmem:[#allocation5 + $0xe58] sm:$0xff]
        %v1288 = vld [vmem:[#allocation5 + $0xea0] sm:$0xff]
        %v1289 = vld [vmem:[#allocation5 + $0xea8] sm:$0xff]
        %v1290 = vld [vmem:[#allocation5 + $0xeb0] sm:$0xff]
        %v1291 = vld [vmem:[#allocation5 + $0xeb8] sm:$0xff]
        %v1292 = vld [vmem:[#allocation5 + $0xf00] sm:$0xff]
        %v1293 = vld [vmem:[#allocation5 + $0xf08] sm:$0xff]
        %v1294 = vld [vmem:[#allocation5 + $0xf10] sm:$0xff]
        %v1295 = vld [vmem:[#allocation5 + $0xf18] sm:$0xff]
        %v1296 = vld [vmem:[#allocation5 + $0xf60] sm:$0xff]
        %v1297 = vld [vmem:[#allocation5 + $0xf68] sm:$0xff]
        %v1298 = vld [vmem:[#allocation5 + $0xf70] sm:$0xff]
        %v1299 = vld [vmem:[#allocation5 + $0xf78] sm:$0xff]
        %v1300 = vld [vmem:[#allocation5 + $0xfc0] sm:$0xff]
        %v1301 = vld [vmem:[#allocation5 + $0xfc8] sm:$0xff]
        %v1302 = vld [vmem:[#allocation5 + $0xfd0] sm:$0xff]
        %v1303 = vld [vmem:[#allocation5 + $0xfd8] sm:$0xff]
        %v1304 = vld [vmem:[#allocation5 + $0x1020] sm:$0xff]
        %v1305 = vld [vmem:[#allocation5 + $0x1028] sm:$0xff]
        %v1306 = vld [vmem:[#allocation5 + $0x1030] sm:$0xff]
        %v1307 = vld [vmem:[#allocation5 + $0x1038] sm:$0xff]
        %v1308 = vld [vmem:[#allocation5 + $0x1080] sm:$0xff]
        %v1309 = vld [vmem:[#allocation5 + $0x1088] sm:$0xff]
        %v1310 = vld [vmem:[#allocation5 + $0x1090] sm:$0xff]
        %v1311 = vld [vmem:[#allocation5 + $0x1098] sm:$0xff]
        %v1312 = vld [vmem:[#allocation5 + $0x10e0] sm:$0xff]
        %v1313 = vld [vmem:[#allocation5 + $0x10e8] sm:$0xff]
        %v1314 = vld [vmem:[#allocation5 + $0x10f0] sm:$0xff]
        %v1315 = vld [vmem:[#allocation5 + $0x10f8] sm:$0xff]
        %v1316 = vld [vmem:[#allocation5 + $0x1140] sm:$0xff]
        %v1317 = vld [vmem:[#allocation5 + $0x1148] sm:$0xff]
        %v1318 = vld [vmem:[#allocation5 + $0x1150] sm:$0xff]
        %v1319 = vld [vmem:[#allocation5 + $0x1158] sm:$0xff]
        %v1320 = vld [vmem:[#allocation5 + $0x11a0] sm:$0xff]
        %v1321 = vld [vmem:[#allocation5 + $0x11a8] sm:$0xff]
        %v1322 = vld [vmem:[#allocation5 + $0x11b0] sm:$0xff]
        %v1323 = vld [vmem:[#allocation5 + $0x11b8] sm:$0xff]
        %v1324 = vld [vmem:[#allocation5 + $0x1200] sm:$0xff]
        %v1325 = vld [vmem:[#allocation5 + $0x1208] sm:$0xff]
        %v1326 = vld [vmem:[#allocation5 + $0x1210] sm:$0xff]
        %v1327 = vld [vmem:[#allocation5 + $0x1218] sm:$0xff]
        %v1328 = vld [vmem:[#allocation5 + $0x1260] sm:$0xff]
        %v1329 = vld [vmem:[#allocation5 + $0x1268] sm:$0xff]
        %v1330 = vld [vmem:[#allocation5 + $0x1270] sm:$0xff]
        %v1331 = vld [vmem:[#allocation5 + $0x1278] sm:$0xff]
        %v1332 = vld [vmem:[#allocation5 + $0x12c0] sm:$0xff]
        %v1333 = vld [vmem:[#allocation5 + $0x12c8] sm:$0xff]
        %v1334 = vld [vmem:[#allocation5 + $0x12d0] sm:$0xff]
        %v1335 = vld [vmem:[#allocation5 + $0x12d8] sm:$0xff]
        %v1336 = vld [vmem:[#allocation5 + $0x1320] sm:$0xff]
        %v1337 = vld [vmem:[#allocation5 + $0x1328] sm:$0xff]
        %v1338 = vld [vmem:[#allocation5 + $0x1330] sm:$0xff]
        %v1339 = vld [vmem:[#allocation5 + $0x1338] sm:$0xff]
        %v1340 = vld [vmem:[#allocation5 + $0x1380] sm:$0xff]
        %v1341 = vld [vmem:[#allocation5 + $0x1388] sm:$0xff]
        %v1342 = vld [vmem:[#allocation5 + $0x1390] sm:$0xff]
        %v1343 = vld [vmem:[#allocation5 + $0x1398] sm:$0xff]
        %v1344 = vld [vmem:[#allocation5 + $0x13e0] sm:$0xff]
        %v1345 = vld [vmem:[#allocation5 + $0x13e8] sm:$0xff]
        %v1346 = vld [vmem:[#allocation5 + $0x13f0] sm:$0xff]
        %v1347 = vld [vmem:[#allocation5 + $0x13f8] sm:$0xff]
        %v1348 = vld [vmem:[#allocation5 + $0x1440] sm:$0xff]
        %v1349 = vld [vmem:[#allocation5 + $0x1448] sm:$0xff]
        %v1350 = vld [vmem:[#allocation5 + $0x1450] sm:$0xff]
        %v1351 = vld [vmem:[#allocation5 + $0x1458] sm:$0xff]
        %v1352 = vld [vmem:[#allocation5 + $0x14a0] sm:$0xff]
        %v1353 = vld [vmem:[#allocation5 + $0x14a8] sm:$0xff]
        %v1354 = vld [vmem:[#allocation5 + $0x14b0] sm:$0xff]
        %v1355 = vld [vmem:[#allocation5 + $0x14b8] sm:$0xff]
        %v1356 = vld [vmem:[#allocation5 + $0x1500] sm:$0xff]
        %v1357 = vld [vmem:[#allocation5 + $0x1508] sm:$0xff]
        %v1358 = vld [vmem:[#allocation5 + $0x1510] sm:$0xff]
        %v1359 = vld [vmem:[#allocation5 + $0x1518] sm:$0xff]
        %v1360 = vld [vmem:[#allocation5 + $0x1560] sm:$0xff]
        %v1361 = vld [vmem:[#allocation5 + $0x1568] sm:$0xff]
        %v1362 = vld [vmem:[#allocation5 + $0x1570] sm:$0xff]
        %v1363 = vld [vmem:[#allocation5 + $0x1578] sm:$0xff]
        %v1364 = vld [vmem:[#allocation5 + $0x15c0] sm:$0xff]
        %v1365 = vld [vmem:[#allocation5 + $0x15c8] sm:$0xff]
        %v1366 = vld [vmem:[#allocation5 + $0x15d0] sm:$0xff]
        %v1367 = vld [vmem:[#allocation5 + $0x15d8] sm:$0xff]
        %v1368 = vld [vmem:[#allocation5 + $0x1620] sm:$0xff]
        %v1369 = vld [vmem:[#allocation5 + $0x1628] sm:$0xff]
        %v1370 = vld [vmem:[#allocation5 + $0x1630] sm:$0xff]
        %v1371 = vld [vmem:[#allocation5 + $0x1638] sm:$0xff]
        %v1372 = vld [vmem:[#allocation5 + $0x1680] sm:$0xff]
        %v1373 = vld [vmem:[#allocation5 + $0x1688] sm:$0xff]
        %v1374 = vld [vmem:[#allocation5 + $0x1690] sm:$0xff]
        %v1375 = vld [vmem:[#allocation5 + $0x1698] sm:$0xff]
        %v1376 = vld [vmem:[#allocation5 + $0x16e0] sm:$0xff]
        %v1377 = vld [vmem:[#allocation5 + $0x16e8] sm:$0xff]
        %v1378 = vld [vmem:[#allocation5 + $0x16f0] sm:$0xff]
        %v1379 = vld [vmem:[#allocation5 + $0x16f8] sm:$0xff]
        %v1380 = vld [vmem:[#allocation5 + $0x1740] sm:$0xff]
        %v1381 = vld [vmem:[#allocation5 + $0x1748] sm:$0xff]
        %v1382 = vld [vmem:[#allocation5 + $0x1750] sm:$0xff]
        %v1383 = vld [vmem:[#allocation5 + $0x1758] sm:$0xff]
        %v1384 = vld [vmem:[#allocation5 + $0x17a0] sm:$0xff]
        %v1385 = vld [vmem:[#allocation5 + $0x17a8] sm:$0xff]
        %v1386 = vld [vmem:[#allocation5 + $0x17b0] sm:$0xff]
        %v1387 = vld [vmem:[#allocation5 + $0x17b8] sm:$0xff]
        %v1388 = vld [vmem:[#allocation5 + $0x20] sm:$0xff]
        %v1389 = vld [vmem:[#allocation5 + $0x28] sm:$0xff]
        %v1390 = vld [vmem:[#allocation5 + $0x30] sm:$0xff]
        %v1391 = vld [vmem:[#allocation5 + $0x38] sm:$0xff]
        %v1392 = vld [vmem:[#allocation5 + $0x80] sm:$0xff]
        %v1393 = vld [vmem:[#allocation5 + $0x88] sm:$0xff]
        %v1394 = vld [vmem:[#allocation5 + $0x90] sm:$0xff]
        %v1395 = vld [vmem:[#allocation5 + $0x98] sm:$0xff]
        %v1396 = vld [vmem:[#allocation5 + $0xe0] sm:$0xff]
        %v1397 = vld [vmem:[#allocation5 + $0xe8] sm:$0xff]
        %v1398 = vld [vmem:[#allocation5 + $0xf0] sm:$0xff]
        %v1399 = vld [vmem:[#allocation5 + $0xf8] sm:$0xff]
        %v1400 = vld [vmem:[#allocation5 + $0x140] sm:$0xff]
        %v1401 = vld [vmem:[#allocation5 + $0x148] sm:$0xff]
        %v1402 = vld [vmem:[#allocation5 + $0x150] sm:$0xff]
        %v1403 = vld [vmem:[#allocation5 + $0x158] sm:$0xff]
        %v1404 = vld [vmem:[#allocation5 + $0x1a0] sm:$0xff]
        %v1405 = vld [vmem:[#allocation5 + $0x1a8] sm:$0xff]
        %v1406 = vld [vmem:[#allocation5 + $0x1b0] sm:$0xff]
        %v1407 = vld [vmem:[#allocation5 + $0x1b8] sm:$0xff]
        %v1408 = vld [vmem:[#allocation5 + $0x200] sm:$0xff]
        %v1409 = vld [vmem:[#allocation5 + $0x208] sm:$0xff]
        %v1410 = vld [vmem:[#allocation5 + $0x210] sm:$0xff]
        %v1411 = vld [vmem:[#allocation5 + $0x218] sm:$0xff]
        %v1412 = vld [vmem:[#allocation5 + $0x260] sm:$0xff]
        %v1413 = vld [vmem:[#allocation5 + $0x268] sm:$0xff]
        %v1414 = vld [vmem:[#allocation5 + $0x270] sm:$0xff]
        %v1415 = vld [vmem:[#allocation5 + $0x278] sm:$0xff]
        %v1416 = vld [vmem:[#allocation5 + $0x2c0] sm:$0xff]
        %v1417 = vld [vmem:[#allocation5 + $0x2c8] sm:$0xff]
        %v1418 = vld [vmem:[#allocation5 + $0x2d0] sm:$0xff]
        %v1419 = vld [vmem:[#allocation5 + $0x2d8] sm:$0xff]
        %v1420 = vld [vmem:[#allocation5 + $0x320] sm:$0xff]
        %v1421 = vld [vmem:[#allocation5 + $0x328] sm:$0xff]
        %v1422 = vld [vmem:[#allocation5 + $0x330] sm:$0xff]
        %v1423 = vld [vmem:[#allocation5 + $0x338] sm:$0xff]
        %v1424 = vld [vmem:[#allocation5 + $0x380] sm:$0xff]
        %v1425 = vld [vmem:[#allocation5 + $0x388] sm:$0xff]
        %v1426 = vld [vmem:[#allocation5 + $0x390] sm:$0xff]
        %v1427 = vld [vmem:[#allocation5 + $0x398] sm:$0xff]
        %v1428 = vld [vmem:[#allocation5 + $0x3e0] sm:$0xff]
        %v1429 = vld [vmem:[#allocation5 + $0x3e8] sm:$0xff]
        %v1430 = vld [vmem:[#allocation5 + $0x3f0] sm:$0xff]
        %v1431 = vld [vmem:[#allocation5 + $0x3f8] sm:$0xff]
        %v1432 = vld [vmem:[#allocation5 + $0x440] sm:$0xff]
        %v1433 = vld [vmem:[#allocation5 + $0x448] sm:$0xff]
        %v1434 = vld [vmem:[#allocation5 + $0x450] sm:$0xff]
        %v1435 = vld [vmem:[#allocation5 + $0x458] sm:$0xff]
        %v1436 = vld [vmem:[#allocation5 + $0x4a0] sm:$0xff]
        %v1437 = vld [vmem:[#allocation5 + $0x4a8] sm:$0xff]
        %v1438 = vld [vmem:[#allocation5 + $0x4b0] sm:$0xff]
        %v1439 = vld [vmem:[#allocation5 + $0x4b8] sm:$0xff]
        %v1440 = vld [vmem:[#allocation5 + $0x500] sm:$0xff]
        %v1441 = vld [vmem:[#allocation5 + $0x508] sm:$0xff]
        %v1442 = vld [vmem:[#allocation5 + $0x510] sm:$0xff]
        %v1443 = vld [vmem:[#allocation5 + $0x518] sm:$0xff]
        %v1444 = vld [vmem:[#allocation5 + $0x560] sm:$0xff]
        %v1445 = vld [vmem:[#allocation5 + $0x568] sm:$0xff]
        %v1446 = vld [vmem:[#allocation5 + $0x570] sm:$0xff]
        %v1447 = vld [vmem:[#allocation5 + $0x578] sm:$0xff]
        %v1448 = vld [vmem:[#allocation5 + $0x5c0] sm:$0xff]
        %v1449 = vld [vmem:[#allocation5 + $0x5c8] sm:$0xff]
        %v1450 = vld [vmem:[#allocation5 + $0x5d0] sm:$0xff]
        %v1451 = vld [vmem:[#allocation5 + $0x5d8] sm:$0xff]
        %v1452 = vld [vmem:[#allocation5 + $0x620] sm:$0xff]
        %v1453 = vld [vmem:[#allocation5 + $0x628] sm:$0xff]
        %v1454 = vld [vmem:[#allocation5 + $0x630] sm:$0xff]
        %v1455 = vld [vmem:[#allocation5 + $0x638] sm:$0xff]
        %v1456 = vld [vmem:[#allocation5 + $0x680] sm:$0xff]
        %v1457 = vld [vmem:[#allocation5 + $0x688] sm:$0xff]
        %v1458 = vld [vmem:[#allocation5 + $0x690] sm:$0xff]
        %v1459 = vld [vmem:[#allocation5 + $0x698] sm:$0xff]
        %v1460 = vld [vmem:[#allocation5 + $0x6e0] sm:$0xff]
        %v1461 = vld [vmem:[#allocation5 + $0x6e8] sm:$0xff]
        %v1462 = vld [vmem:[#allocation5 + $0x6f0] sm:$0xff]
        %v1463 = vld [vmem:[#allocation5 + $0x6f8] sm:$0xff]
        %v1464 = vld [vmem:[#allocation5 + $0x740] sm:$0xff]
        %v1465 = vld [vmem:[#allocation5 + $0x748] sm:$0xff]
        %v1466 = vld [vmem:[#allocation5 + $0x750] sm:$0xff]
        %v1467 = vld [vmem:[#allocation5 + $0x758] sm:$0xff]
        %v1468 = vld [vmem:[#allocation5 + $0x7a0] sm:$0xff]
        %v1469 = vld [vmem:[#allocation5 + $0x7a8] sm:$0xff]
        %v1470 = vld [vmem:[#allocation5 + $0x7b0] sm:$0xff]
        %v1471 = vld [vmem:[#allocation5 + $0x7b8] sm:$0xff]
        %v1472 = vld [vmem:[#allocation5 + $0x800] sm:$0xff]
        %v1473 = vld [vmem:[#allocation5 + $0x808] sm:$0xff]
        %v1474 = vld [vmem:[#allocation5 + $0x810] sm:$0xff]
        %v1475 = vld [vmem:[#allocation5 + $0x818] sm:$0xff]
        %v1476 = vld [vmem:[#allocation5 + $0x860] sm:$0xff]
        %v1477 = vld [vmem:[#allocation5 + $0x868] sm:$0xff]
        %v1478 = vld [vmem:[#allocation5 + $0x870] sm:$0xff]
        %v1479 = vld [vmem:[#allocation5 + $0x878] sm:$0xff]
        %v1480 = vld [vmem:[#allocation5 + $0x8c0] sm:$0xff]
        %v1481 = vld [vmem:[#allocation5 + $0x8c8] sm:$0xff]
        %v1482 = vld [vmem:[#allocation5 + $0x8d0] sm:$0xff]
        %v1483 = vld [vmem:[#allocation5 + $0x8d8] sm:$0xff]
        %v1484 = vld [vmem:[#allocation5 + $0x920] sm:$0xff]
        %v1485 = vld [vmem:[#allocation5 + $0x928] sm:$0xff]
        %v1486 = vld [vmem:[#allocation5 + $0x930] sm:$0xff]
        %v1487 = vld [vmem:[#allocation5 + $0x938] sm:$0xff]
        %v1488 = vld [vmem:[#allocation5 + $0x980] sm:$0xff]
        %v1489 = vld [vmem:[#allocation5 + $0x988] sm:$0xff]
        %v1490 = vld [vmem:[#allocation5 + $0x990] sm:$0xff]
        %v1491 = vld [vmem:[#allocation5 + $0x998] sm:$0xff]
        %v1492 = vld [vmem:[#allocation5 + $0x9e0] sm:$0xff]
        %v1493 = vld [vmem:[#allocation5 + $0x9e8] sm:$0xff]
        %v1494 = vld [vmem:[#allocation5 + $0x9f0] sm:$0xff]
        %v1495 = vld [vmem:[#allocation5 + $0x9f8] sm:$0xff]
        %v1496 = vld [vmem:[#allocation5 + $0xa40] sm:$0xff]
        %v1497 = vld [vmem:[#allocation5 + $0xa48] sm:$0xff]
        %v1498 = vld [vmem:[#allocation5 + $0xa50] sm:$0xff]
        %v1499 = vld [vmem:[#allocation5 + $0xa58] sm:$0xff]
        %v1500 = vld [vmem:[#allocation5 + $0xaa0] sm:$0xff]
        %v1501 = vld [vmem:[#allocation5 + $0xaa8] sm:$0xff]
        %v1502 = vld [vmem:[#allocation5 + $0xab0] sm:$0xff]
        %v1503 = vld [vmem:[#allocation5 + $0xab8] sm:$0xff]
        %v1504 = vld [vmem:[#allocation5 + $0xb00] sm:$0xff]
        %v1505 = vld [vmem:[#allocation5 + $0xb08] sm:$0xff]
        %v1506 = vld [vmem:[#allocation5 + $0xb10] sm:$0xff]
        %v1507 = vld [vmem:[#allocation5 + $0xb18] sm:$0xff]
        %v1508 = vld [vmem:[#allocation5 + $0xb60] sm:$0xff]
        %v1509 = vld [vmem:[#allocation5 + $0xb68] sm:$0xff]
        %v1510 = vld [vmem:[#allocation5 + $0xb70] sm:$0xff]
        %v1511 = vld [vmem:[#allocation5 + $0xb78] sm:$0xff]
        %v1512 = vld [vmem:[#allocation5 + $0xbc0] sm:$0xff]
        %v1513 = vld [vmem:[#allocation5 + $0xbc8] sm:$0xff]
        %v1514 = vld [vmem:[#allocation5 + $0xbd0] sm:$0xff]
        %v1515 = vld [vmem:[#allocation5 + $0xbd8] sm:$0xff]
        %v1516 = vld [vmem:[#allocation5 + $0xc20] sm:$0xff]
        %v1517 = vld [vmem:[#allocation5 + $0xc28] sm:$0xff]
        %v1518 = vld [vmem:[#allocation5 + $0xc30] sm:$0xff]
        %v1519 = vld [vmem:[#allocation5 + $0xc38] sm:$0xff]
        %v1520 = vld [vmem:[#allocation5 + $0xc80] sm:$0xff]
        %v1521 = vld [vmem:[#allocation5 + $0xc88] sm:$0xff]
        %v1522 = vld [vmem:[#allocation5 + $0xc90] sm:$0xff]
        %v1523 = vld [vmem:[#allocation5 + $0xc98] sm:$0xff]
        %v1524 = vld [vmem:[#allocation5 + $0xce0] sm:$0xff]
        %v1525 = vld [vmem:[#allocation5 + $0xce8] sm:$0xff]
        %v1526 = vld [vmem:[#allocation5 + $0xcf0] sm:$0xff]
        %v1527 = vld [vmem:[#allocation5 + $0xcf8] sm:$0xff]
        %v1528 = vld [vmem:[#allocation5 + $0xd40] sm:$0xff]
        %v1529 = vld [vmem:[#allocation5 + $0xd48] sm:$0xff]
        %v1530 = vld [vmem:[#allocation5 + $0xd50] sm:$0xff]
        %v1531 = vld [vmem:[#allocation5 + $0xd58] sm:$0xff]
        %v1532 = vld [vmem:[#allocation5 + $0xda0] sm:$0xff]
        %v1533 = vld [vmem:[#allocation5 + $0xda8] sm:$0xff]
        %v1534 = vld [vmem:[#allocation5 + $0xdb0] sm:$0xff]
        %v1535 = vld [vmem:[#allocation5 + $0xdb8] sm:$0xff]
        %v1536 = vld [vmem:[#allocation5 + $0xe00] sm:$0xff]
        %v1537 = vld [vmem:[#allocation5 + $0xe08] sm:$0xff]
        %v1538 = vld [vmem:[#allocation5 + $0xe10] sm:$0xff]
        %v1539 = vld [vmem:[#allocation5 + $0xe18] sm:$0xff]
        %v1540 = vld [vmem:[#allocation5 + $0xe60] sm:$0xff]
        %v1541 = vld [vmem:[#allocation5 + $0xe68] sm:$0xff]
        %v1542 = vld [vmem:[#allocation5 + $0xe70] sm:$0xff]
        %v1543 = vld [vmem:[#allocation5 + $0xe78] sm:$0xff]
        %v1544 = vld [vmem:[#allocation5 + $0xec0] sm:$0xff]
        %v1545 = vld [vmem:[#allocation5 + $0xec8] sm:$0xff]
        %v1546 = vld [vmem:[#allocation5 + $0xed0] sm:$0xff]
        %v1547 = vld [vmem:[#allocation5 + $0xed8] sm:$0xff]
        %v1548 = vld [vmem:[#allocation5 + $0xf20] sm:$0xff]
        %v1549 = vld [vmem:[#allocation5 + $0xf28] sm:$0xff]
        %v1550 = vld [vmem:[#allocation5 + $0xf30] sm:$0xff]
        %v1551 = vld [vmem:[#allocation5 + $0xf38] sm:$0xff]
        %v1552 = vld [vmem:[#allocation5 + $0xf80] sm:$0xff]
        %v1553 = vld [vmem:[#allocation5 + $0xf88] sm:$0xff]
        %v1554 = vld [vmem:[#allocation5 + $0xf90] sm:$0xff]
        %v1555 = vld [vmem:[#allocation5 + $0xf98] sm:$0xff]
        %v1556 = vld [vmem:[#allocation5 + $0xfe0] sm:$0xff]
        %v1557 = vld [vmem:[#allocation5 + $0xfe8] sm:$0xff]
        %v1558 = vld [vmem:[#allocation5 + $0xff0] sm:$0xff]
        %v1559 = vld [vmem:[#allocation5 + $0xff8] sm:$0xff]
        %v1560 = vld [vmem:[#allocation5 + $0x1040] sm:$0xff]
        %v1561 = vld [vmem:[#allocation5 + $0x1048] sm:$0xff]
        %v1562 = vld [vmem:[#allocation5 + $0x1050] sm:$0xff]
        %v1563 = vld [vmem:[#allocation5 + $0x1058] sm:$0xff]
        %v1564 = vld [vmem:[#allocation5 + $0x10a0] sm:$0xff]
        %v1565 = vld [vmem:[#allocation5 + $0x10a8] sm:$0xff]
        %v1566 = vld [vmem:[#allocation5 + $0x10b0] sm:$0xff]
        %v1567 = vld [vmem:[#allocation5 + $0x10b8] sm:$0xff]
        %v1568 = vld [vmem:[#allocation5 + $0x1100] sm:$0xff]
        %v1569 = vld [vmem:[#allocation5 + $0x1108] sm:$0xff]
        %v1570 = vld [vmem:[#allocation5 + $0x1110] sm:$0xff]
        %v1571 = vld [vmem:[#allocation5 + $0x1118] sm:$0xff]
        %v1572 = vld [vmem:[#allocation5 + $0x1160] sm:$0xff]
        %v1573 = vld [vmem:[#allocation5 + $0x1168] sm:$0xff]
        %v1574 = vld [vmem:[#allocation5 + $0x1170] sm:$0xff]
        %v1575 = vld [vmem:[#allocation5 + $0x1178] sm:$0xff]
        %v1576 = vld [vmem:[#allocation5 + $0x11c0] sm:$0xff]
        %v1577 = vld [vmem:[#allocation5 + $0x11c8] sm:$0xff]
        %v1578 = vld [vmem:[#allocation5 + $0x11d0] sm:$0xff]
        %v1579 = vld [vmem:[#allocation5 + $0x11d8] sm:$0xff]
        %v1580 = vld [vmem:[#allocation5 + $0x1220] sm:$0xff]
        %v1581 = vld [vmem:[#allocation5 + $0x1228] sm:$0xff]
        %v1582 = vld [vmem:[#allocation5 + $0x1230] sm:$0xff]
        %v1583 = vld [vmem:[#allocation5 + $0x1238] sm:$0xff]
        %v1584 = vld [vmem:[#allocation5 + $0x1280] sm:$0xff]
        %v1585 = vld [vmem:[#allocation5 + $0x1288] sm:$0xff]
        %v1586 = vld [vmem:[#allocation5 + $0x1290] sm:$0xff]
        %v1587 = vld [vmem:[#allocation5 + $0x1298] sm:$0xff]
        %v1588 = vld [vmem:[#allocation5 + $0x12e0] sm:$0xff]
        %v1589 = vld [vmem:[#allocation5 + $0x12e8] sm:$0xff]
        %v1590 = vld [vmem:[#allocation5 + $0x12f0] sm:$0xff]
        %v1591 = vld [vmem:[#allocation5 + $0x12f8] sm:$0xff]
        %v1592 = vld [vmem:[#allocation5 + $0x1340] sm:$0xff]
        %v1593 = vld [vmem:[#allocation5 + $0x1348] sm:$0xff]
        %v1594 = vld [vmem:[#allocation5 + $0x1350] sm:$0xff]
        %v1595 = vld [vmem:[#allocation5 + $0x1358] sm:$0xff]
        %v1596 = vld [vmem:[#allocation5 + $0x13a0] sm:$0xff]
        %v1597 = vld [vmem:[#allocation5 + $0x13a8] sm:$0xff]
        %v1598 = vld [vmem:[#allocation5 + $0x13b0] sm:$0xff]
        %v1599 = vld [vmem:[#allocation5 + $0x13b8] sm:$0xff]
        %v1600 = vld [vmem:[#allocation5 + $0x1400] sm:$0xff]
        %v1601 = vld [vmem:[#allocation5 + $0x1408] sm:$0xff]
        %v1602 = vld [vmem:[#allocation5 + $0x1410] sm:$0xff]
        %v1603 = vld [vmem:[#allocation5 + $0x1418] sm:$0xff]
        %v1604 = vld [vmem:[#allocation5 + $0x1460] sm:$0xff]
        %v1605 = vld [vmem:[#allocation5 + $0x1468] sm:$0xff]
        %v1606 = vld [vmem:[#allocation5 + $0x1470] sm:$0xff]
        %v1607 = vld [vmem:[#allocation5 + $0x1478] sm:$0xff]
        %v1608 = vld [vmem:[#allocation5 + $0x14c0] sm:$0xff]
        %v1609 = vld [vmem:[#allocation5 + $0x14c8] sm:$0xff]
        %v1610 = vld [vmem:[#allocation5 + $0x14d0] sm:$0xff]
        %v1611 = vld [vmem:[#allocation5 + $0x14d8] sm:$0xff]
        %v1612 = vld [vmem:[#allocation5 + $0x1520] sm:$0xff]
        %v1613 = vld [vmem:[#allocation5 + $0x1528] sm:$0xff]
        %v1614 = vld [vmem:[#allocation5 + $0x1530] sm:$0xff]
        %v1615 = vld [vmem:[#allocation5 + $0x1538] sm:$0xff]
        %v1616 = vld [vmem:[#allocation5 + $0x1580] sm:$0xff]
        %v1617 = vld [vmem:[#allocation5 + $0x1588] sm:$0xff]
        %v1618 = vld [vmem:[#allocation5 + $0x1590] sm:$0xff]
        %v1619 = vld [vmem:[#allocation5 + $0x1598] sm:$0xff]
        %v1620 = vld [vmem:[#allocation5 + $0x15e0] sm:$0xff]
        %v1621 = vld [vmem:[#allocation5 + $0x15e8] sm:$0xff]
        %v1622 = vld [vmem:[#allocation5 + $0x15f0] sm:$0xff]
        %v1623 = vld [vmem:[#allocation5 + $0x15f8] sm:$0xff]
        %v1624 = vld [vmem:[#allocation5 + $0x1640] sm:$0xff]
        %v1625 = vld [vmem:[#allocation5 + $0x1648] sm:$0xff]
        %v1626 = vld [vmem:[#allocation5 + $0x1650] sm:$0xff]
        %v1627 = vld [vmem:[#allocation5 + $0x1658] sm:$0xff]
        %v1628 = vld [vmem:[#allocation5 + $0x16a0] sm:$0xff]
        %v1629 = vld [vmem:[#allocation5 + $0x16a8] sm:$0xff]
        %v1630 = vld [vmem:[#allocation5 + $0x16b0] sm:$0xff]
        %v1631 = vld [vmem:[#allocation5 + $0x16b8] sm:$0xff]
        %v1632 = vld [vmem:[#allocation5 + $0x1700] sm:$0xff]
        %v1633 = vld [vmem:[#allocation5 + $0x1708] sm:$0xff]
        %v1634 = vld [vmem:[#allocation5 + $0x1710] sm:$0xff]
        %v1635 = vld [vmem:[#allocation5 + $0x1718] sm:$0xff]
        %v1636 = vld [vmem:[#allocation5 + $0x1760] sm:$0xff]
        %v1637 = vld [vmem:[#allocation5 + $0x1768] sm:$0xff]
        %v1638 = vld [vmem:[#allocation5 + $0x1770] sm:$0xff]
        %v1639 = vld [vmem:[#allocation5 + $0x1778] sm:$0xff]
        %v1640 = vld [vmem:[#allocation5 + $0x17c0] sm:$0xff]
        %v1641 = vld [vmem:[#allocation5 + $0x17c8] sm:$0xff]
        %v1642 = vld [vmem:[#allocation5 + $0x17d0] sm:$0xff]
        %v1643 = vld [vmem:[#allocation5 + $0x17d8] sm:$0xff]
        %1644 = vmatprep.subr.mxu0 0.0
        %1645 = vmatpush1.msra.mxu0 %v731
        %1646 = vmatprep.subr.mxu0 0.0
        %1647 = vmatpush1.msra.mxu0 %v728
        %1648 = vmatprep.subr.mxu0 0.0
        %1649 = vmatpush1.msra.mxu0 %v725
        %1650 = vmatprep.subr.mxu0 0.0
        %1651 = vmatpush1.msra.mxu0 %v722
        %1652 = vmatprep.subr.mxu0 0.0
        %1653 = vmatpush1.msra.mxu0 %v719
        %1654 = vmatprep.subr.mxu0 0.0
        %1655 = vmatpush1.msra.mxu0 %v716
        %1656 = vmatprep.subr.mxu0 0.0
        %1657 = vmatpush1.msra.mxu0 %v713
        %1658 = vmatprep.subr.mxu0 0.0
        %1659 = vmatpush1.msra.mxu0 %v710
        %1660 = vmatprep.subr.mxu0 0.0
        %1661 = vmatpush1.msra.mxu0 %v707
        %1662 = vmatprep.subr.mxu0 0.0
        %1663 = vmatpush1.msra.mxu0 %v704
        %1664 = vmatprep.subr.mxu0 0.0
        %1665 = vmatpush1.msra.mxu0 %v701
        %1666 = vmatprep.subr.mxu0 0.0
        %1667 = vmatpush1.msra.mxu0 %v698
        %1668 = vmatprep.subr.mxu0 0.0
        %1669 = vmatpush1.msra.mxu0 %v695
        %1670 = vmatprep.subr.mxu0 0.0
        %1671 = vmatpush1.msra.mxu0 %v692
        %1672 = vmatprep.subr.mxu0 0.0
        %1673 = vmatpush1.msra.mxu0 %v689
        %1674 = vmatprep.subr.mxu0 0.0
        %1675 = vmatpush1.msra.mxu0 %v686
        %1676 = vmatprep.subr.mxu0 0.0
        %1677 = vmatpush2.msra.mxu0 %v779
        %1678 = vmatprep.subr.mxu0 0.0
        %1679 = vmatpush2.msra.mxu0 %v776
        %1680 = vmatprep.subr.mxu0 0.0
        %1681 = vmatpush2.msra.mxu0 %v773
        %1682 = vmatprep.subr.mxu0 0.0
        %1683 = vmatpush2.msra.mxu0 %v770
        %1684 = vmatprep.subr.mxu0 0.0
        %1685 = vmatpush2.msra.mxu0 %v767
        %1686 = vmatprep.subr.mxu0 0.0
        %1687 = vmatpush2.msra.mxu0 %v764
        %1688 = vmatprep.subr.mxu0 0.0
        %1689 = vmatpush2.msra.mxu0 %v761
        %1690 = vmatprep.subr.mxu0 0.0
        %1691 = vmatpush2.msra.mxu0 %v758
        %1692 = vmatprep.subr.mxu0 0.0
        %1693 = vmatpush2.msra.mxu0 %v755
        %1694 = vmatprep.subr.mxu0 0.0
        %1695 = vmatpush2.msra.mxu0 %v752
        %1696 = vmatprep.subr.mxu0 0.0
        %1697 = vmatpush2.msra.mxu0 %v749
        %1698 = vmatprep.subr.mxu0 0.0
        %1699 = vmatpush2.msra.mxu0 %v746
        %1700 = vmatprep.subr.mxu0 0.0
        %1701 = vmatpush2.msra.mxu0 %v743
        %1702 = vmatprep.subr.mxu0 0.0
        %1703 = vmatpush2.msra.mxu0 %v740
        %1704 = vmatprep.subr.mxu0 0.0
        %1705 = vmatpush2.msra.mxu0 %v737
        %1706 = vmatprep.subr.mxu0 0.0
        %1707 = vmatpush2.msra.mxu0 %v734
        %1708 = vmatprep.mubr.f32.mxu0 %v1389
        %1709 = vmatmul.mubr.f32.gmra.mxu0 %v1388
        %v1710 = vpop.f32.mrf.mxu0
        %v1711 = vadd.f32 0.0, %v1710
        %v1712 = vpop.f32.mrf.mxu0
        %1713 = vmatprep.mubr.f32.mxu0 %v1393
        %1714 = vmatmul.mubr.f32.gmra.mxu0 %v1392
        %v1715 = vpop.f32.mrf.mxu0
        %v1716 = vadd.f32 0.0, %v1715
        %v1717 = vpop.f32.mrf.mxu0
        %1718 = vmatprep.mubr.f32.mxu0 %v1397
        %1719 = vmatmul.mubr.f32.gmra.mxu0 %v1396
        %v1720 = vpop.f32.mrf.mxu0
        %v1721 = vadd.f32 0.0, %v1720
        %v1722 = vpop.f32.mrf.mxu0
        %1723 = vmatprep.mubr.f32.mxu0 %v1401
        %1724 = vmatmul.mubr.f32.gmra.mxu0 %v1400
        %v1725 = vpop.f32.mrf.mxu0
        %v1726 = vadd.f32 0.0, %v1725
        %v1727 = vpop.f32.mrf.mxu0
        %1728 = vmatprep.mubr.f32.mxu0 %v1405
        %1729 = vmatmul.mubr.f32.gmra.mxu0 %v1404
        %v1730 = vpop.f32.mrf.mxu0
        %v1731 = vadd.f32 0.0, %v1730
        %v1732 = vpop.f32.mrf.mxu0
        %1733 = vmatprep.mubr.f32.mxu0 %v1409
        %1734 = vmatmul.mubr.f32.gmra.mxu0 %v1408
        %v1735 = vpop.f32.mrf.mxu0
        %v1736 = vadd.f32 0.0, %v1735
        %v1737 = vpop.f32.mrf.mxu0
        %1738 = vmatprep.mubr.f32.mxu0 %v1413
        %1739 = vmatmul.mubr.f32.gmra.mxu0 %v1412
        %v1740 = vpop.f32.mrf.mxu0
        %v1741 = vadd.f32 0.0, %v1740
        %v1742 = vpop.f32.mrf.mxu0
        %1743 = vmatprep.mubr.f32.mxu0 %v1417
        %1744 = vmatmul.mubr.f32.gmra.mxu0 %v1416
        %v1745 = vpop.f32.mrf.mxu0
        %v1746 = vadd.f32 0.0, %v1745
        %v1747 = vpop.f32.mrf.mxu0
        %1748 = vmatprep.mubr.f32.mxu0 %v1421
        %1749 = vmatmul.mubr.f32.gmra.mxu0 %v1420
        %v1750 = vpop.f32.mrf.mxu0
        %v1751 = vadd.f32 0.0, %v1750
        %v1752 = vpop.f32.mrf.mxu0
        %1753 = vmatprep.mubr.f32.mxu0 %v1425
        %1754 = vmatmul.mubr.f32.gmra.mxu0 %v1424
        %v1755 = vpop.f32.mrf.mxu0
        %v1756 = vadd.f32 0.0, %v1755
        %v1757 = vpop.f32.mrf.mxu0
        %1758 = vmatprep.mubr.f32.mxu0 %v1429
        %1759 = vmatmul.mubr.f32.gmra.mxu0 %v1428
        %v1760 = vpop.f32.mrf.mxu0
        %v1761 = vadd.f32 0.0, %v1760
        %v1762 = vpop.f32.mrf.mxu0
        %1763 = vmatprep.mubr.f32.mxu0 %v1433
        %1764 = vmatmul.mubr.f32.gmra.mxu0 %v1432
        %v1765 = vpop.f32.mrf.mxu0
        %v1766 = vadd.f32 0.0, %v1765
        %v1767 = vpop.f32.mrf.mxu0
        %1768 = vmatprep.mubr.f32.mxu0 %v1437
        %1769 = vmatmul.mubr.f32.gmra.mxu0 %v1436
        %v1770 = vpop.f32.mrf.mxu0
        %v1771 = vadd.f32 0.0, %v1770
        %v1772 = vpop.f32.mrf.mxu0
        %1773 = vmatprep.mubr.f32.mxu0 %v1441
        %1774 = vmatmul.mubr.f32.gmra.mxu0 %v1440
        %v1775 = vpop.f32.mrf.mxu0
        %v1776 = vadd.f32 0.0, %v1775
        %v1777 = vpop.f32.mrf.mxu0
        %1778 = vmatprep.mubr.f32.mxu0 %v1445
        %1779 = vmatmul.mubr.f32.gmra.mxu0 %v1444
        %v1780 = vpop.f32.mrf.mxu0
        %v1781 = vadd.f32 0.0, %v1780
        %v1782 = vpop.f32.mrf.mxu0
        %1783 = vmatprep.mubr.f32.mxu0 %v1449
        %1784 = vmatmul.mubr.f32.gmra.mxu0 %v1448
        %v1785 = vpop.f32.mrf.mxu0
        %v1786 = vadd.f32 0.0, %v1785
        %v1787 = vpop.f32.mrf.mxu0
        %1788 = vmatprep.mubr.f32.mxu0 %v1453
        %1789 = vmatmul.mubr.f32.gmra.mxu0 %v1452
        %v1790 = vpop.f32.mrf.mxu0
        %v1791 = vadd.f32 0.0, %v1790
        %v1792 = vpop.f32.mrf.mxu0
        %1793 = vmatprep.mubr.f32.mxu0 %v1457
        %1794 = vmatmul.mubr.f32.gmra.mxu0 %v1456
        %v1795 = vpop.f32.mrf.mxu0
        %v1796 = vadd.f32 0.0, %v1795
        %v1797 = vpop.f32.mrf.mxu0
        %1798 = vmatprep.mubr.f32.mxu0 %v1461
        %1799 = vmatmul.mubr.f32.gmra.mxu0 %v1460
        %v1800 = vpop.f32.mrf.mxu0
        %v1801 = vadd.f32 0.0, %v1800
        %v1802 = vpop.f32.mrf.mxu0
        %1803 = vmatprep.mubr.f32.mxu0 %v1465
        %1804 = vmatmul.mubr.f32.gmra.mxu0 %v1464
        %v1805 = vpop.f32.mrf.mxu0
        %v1806 = vadd.f32 0.0, %v1805
        %v1807 = vpop.f32.mrf.mxu0
        %1808 = vmatprep.mubr.f32.mxu0 %v1469
        %1809 = vmatmul.mubr.f32.gmra.mxu0 %v1468
        %v1810 = vpop.f32.mrf.mxu0
        %v1811 = vadd.f32 0.0, %v1810
        %v1812 = vpop.f32.mrf.mxu0
        %1813 = vmatprep.mubr.f32.mxu0 %v1473
        %1814 = vmatmul.mubr.f32.gmra.mxu0 %v1472
        %v1815 = vpop.f32.mrf.mxu0
        %v1816 = vadd.f32 0.0, %v1815
        %v1817 = vpop.f32.mrf.mxu0
        %1818 = vmatprep.mubr.f32.mxu0 %v1477
        %1819 = vmatmul.mubr.f32.gmra.mxu0 %v1476
        %v1820 = vpop.f32.mrf.mxu0
        %v1821 = vadd.f32 0.0, %v1820
        %v1822 = vpop.f32.mrf.mxu0
        %1823 = vmatprep.mubr.f32.mxu0 %v1481
        %1824 = vmatmul.mubr.f32.gmra.mxu0 %v1480
        %v1825 = vpop.f32.mrf.mxu0
        %v1826 = vadd.f32 0.0, %v1825
        %v1827 = vpop.f32.mrf.mxu0
        %1828 = vmatprep.mubr.f32.mxu0 %v1485
        %1829 = vmatmul.mubr.f32.gmra.mxu0 %v1484
        %v1830 = vpop.f32.mrf.mxu0
        %v1831 = vadd.f32 0.0, %v1830
        %v1832 = vpop.f32.mrf.mxu0
        %1833 = vmatprep.mubr.f32.mxu0 %v1489
        %1834 = vmatmul.mubr.f32.gmra.mxu0 %v1488
        %v1835 = vpop.f32.mrf.mxu0
        %v1836 = vadd.f32 0.0, %v1835
        %v1837 = vpop.f32.mrf.mxu0
        %1838 = vmatprep.mubr.f32.mxu0 %v1493
        %1839 = vmatmul.mubr.f32.gmra.mxu0 %v1492
        %v1840 = vpop.f32.mrf.mxu0
        %v1841 = vadd.f32 0.0, %v1840
        %v1842 = vpop.f32.mrf.mxu0
        %1843 = vmatprep.mubr.f32.mxu0 %v1497
        %1844 = vmatmul.mubr.f32.gmra.mxu0 %v1496
        %v1845 = vpop.f32.mrf.mxu0
        %v1846 = vadd.f32 0.0, %v1845
        %v1847 = vpop.f32.mrf.mxu0
        %1848 = vmatprep.mubr.f32.mxu0 %v1501
        %1849 = vmatmul.mubr.f32.gmra.mxu0 %v1500
        %v1850 = vpop.f32.mrf.mxu0
        %v1851 = vadd.f32 0.0, %v1850
        %v1852 = vpop.f32.mrf.mxu0
        %1853 = vmatprep.mubr.f32.mxu0 %v1505
        %1854 = vmatmul.mubr.f32.gmra.mxu0 %v1504
        %v1855 = vpop.f32.mrf.mxu0
        %v1856 = vadd.f32 0.0, %v1855
        %v1857 = vpop.f32.mrf.mxu0
        %1858 = vmatprep.mubr.f32.mxu0 %v1509
        %1859 = vmatmul.mubr.f32.gmra.mxu0 %v1508
        %v1860 = vpop.f32.mrf.mxu0
        %v1861 = vadd.f32 0.0, %v1860
        %v1862 = vpop.f32.mrf.mxu0
        %1863 = vmatprep.mubr.f32.mxu0 %v1513
        %1864 = vmatmul.mubr.f32.gmra.mxu0 %v1512
        %v1865 = vpop.f32.mrf.mxu0
        %v1866 = vadd.f32 0.0, %v1865
        %v1867 = vpop.f32.mrf.mxu0
        %1868 = vmatprep.mubr.f32.mxu0 %v1517
        %1869 = vmatmul.mubr.f32.gmra.mxu0 %v1516
        %v1870 = vpop.f32.mrf.mxu0
        %v1871 = vadd.f32 0.0, %v1870
        %v1872 = vpop.f32.mrf.mxu0
        %1873 = vmatprep.mubr.f32.mxu0 %v1521
        %1874 = vmatmul.mubr.f32.gmra.mxu0 %v1520
        %v1875 = vpop.f32.mrf.mxu0
        %v1876 = vadd.f32 0.0, %v1875
        %v1877 = vpop.f32.mrf.mxu0
        %1878 = vmatprep.mubr.f32.mxu0 %v1525
        %1879 = vmatmul.mubr.f32.gmra.mxu0 %v1524
        %v1880 = vpop.f32.mrf.mxu0
        %v1881 = vadd.f32 0.0, %v1880
        %v1882 = vpop.f32.mrf.mxu0
        %1883 = vmatprep.mubr.f32.mxu0 %v1529
        %1884 = vmatmul.mubr.f32.gmra.mxu0 %v1528
        %v1885 = vpop.f32.mrf.mxu0
        %v1886 = vadd.f32 0.0, %v1885
        %v1887 = vpop.f32.mrf.mxu0
        %1888 = vmatprep.mubr.f32.mxu0 %v1533
        %1889 = vmatmul.mubr.f32.gmra.mxu0 %v1532
        %v1890 = vpop.f32.mrf.mxu0
        %v1891 = vadd.f32 0.0, %v1890
        %v1892 = vpop.f32.mrf.mxu0
        %1893 = vmatprep.mubr.f32.mxu0 %v1537
        %1894 = vmatmul.mubr.f32.gmra.mxu0 %v1536
        %v1895 = vpop.f32.mrf.mxu0
        %v1896 = vadd.f32 0.0, %v1895
        %v1897 = vpop.f32.mrf.mxu0
        %1898 = vmatprep.mubr.f32.mxu0 %v1541
        %1899 = vmatmul.mubr.f32.gmra.mxu0 %v1540
        %v1900 = vpop.f32.mrf.mxu0
        %v1901 = vadd.f32 0.0, %v1900
        %v1902 = vpop.f32.mrf.mxu0
        %1903 = vmatprep.mubr.f32.mxu0 %v1545
        %1904 = vmatmul.mubr.f32.gmra.mxu0 %v1544
        %v1905 = vpop.f32.mrf.mxu0
        %v1906 = vadd.f32 0.0, %v1905
        %v1907 = vpop.f32.mrf.mxu0
        %1908 = vmatprep.mubr.f32.mxu0 %v1549
        %1909 = vmatmul.mubr.f32.gmra.mxu0 %v1548
        %v1910 = vpop.f32.mrf.mxu0
        %v1911 = vadd.f32 0.0, %v1910
        %v1912 = vpop.f32.mrf.mxu0
        %1913 = vmatprep.mubr.f32.mxu0 %v1553
        %1914 = vmatmul.mubr.f32.gmra.mxu0 %v1552
        %v1915 = vpop.f32.mrf.mxu0
        %v1916 = vadd.f32 0.0, %v1915
        %v1917 = vpop.f32.mrf.mxu0
        %1918 = vmatprep.mubr.f32.mxu0 %v1557
        %1919 = vmatmul.mubr.f32.gmra.mxu0 %v1556
        %v1920 = vpop.f32.mrf.mxu0
        %v1921 = vadd.f32 0.0, %v1920
        %v1922 = vpop.f32.mrf.mxu0
        %1923 = vmatprep.mubr.f32.mxu0 %v1561
        %1924 = vmatmul.mubr.f32.gmra.mxu0 %v1560
        %v1925 = vpop.f32.mrf.mxu0
        %v1926 = vadd.f32 0.0, %v1925
        %v1927 = vpop.f32.mrf.mxu0
        %1928 = vmatprep.mubr.f32.mxu0 %v1565
        %1929 = vmatmul.mubr.f32.gmra.mxu0 %v1564
        %v1930 = vpop.f32.mrf.mxu0
        %v1931 = vadd.f32 0.0, %v1930
        %v1932 = vpop.f32.mrf.mxu0
        %1933 = vmatprep.mubr.f32.mxu0 %v1569
        %1934 = vmatmul.mubr.f32.gmra.mxu0 %v1568
        %v1935 = vpop.f32.mrf.mxu0
        %v1936 = vadd.f32 0.0, %v1935
        %v1937 = vpop.f32.mrf.mxu0
        %1938 = vmatprep.mubr.f32.mxu0 %v1573
        %1939 = vmatmul.mubr.f32.gmra.mxu0 %v1572
        %v1940 = vpop.f32.mrf.mxu0
        %v1941 = vadd.f32 0.0, %v1940
        %v1942 = vpop.f32.mrf.mxu0
        %1943 = vmatprep.mubr.f32.mxu0 %v1577
        %1944 = vmatmul.mubr.f32.gmra.mxu0 %v1576
        %v1945 = vpop.f32.mrf.mxu0
        %v1946 = vadd.f32 0.0, %v1945
        %v1947 = vpop.f32.mrf.mxu0
        %1948 = vmatprep.mubr.f32.mxu0 %v1581
        %1949 = vmatmul.mubr.f32.gmra.mxu0 %v1580
        %v1950 = vpop.f32.mrf.mxu0
        %v1951 = vadd.f32 0.0, %v1950
        %v1952 = vpop.f32.mrf.mxu0
        %1953 = vmatprep.mubr.f32.mxu0 %v1585
        %1954 = vmatmul.mubr.f32.gmra.mxu0 %v1584
        %v1955 = vpop.f32.mrf.mxu0
        %v1956 = vadd.f32 0.0, %v1955
        %v1957 = vpop.f32.mrf.mxu0
        %1958 = vmatprep.mubr.f32.mxu0 %v1589
        %1959 = vmatmul.mubr.f32.gmra.mxu0 %v1588
        %v1960 = vpop.f32.mrf.mxu0
        %v1961 = vadd.f32 0.0, %v1960
        %v1962 = vpop.f32.mrf.mxu0
        %1963 = vmatprep.mubr.f32.mxu0 %v1593
        %1964 = vmatmul.mubr.f32.gmra.mxu0 %v1592
        %v1965 = vpop.f32.mrf.mxu0
        %v1966 = vadd.f32 0.0, %v1965
        %v1967 = vpop.f32.mrf.mxu0
        %1968 = vmatprep.mubr.f32.mxu0 %v1597
        %1969 = vmatmul.mubr.f32.gmra.mxu0 %v1596
        %v1970 = vpop.f32.mrf.mxu0
        %v1971 = vadd.f32 0.0, %v1970
        %v1972 = vpop.f32.mrf.mxu0
        %1973 = vmatprep.mubr.f32.mxu0 %v1601
        %1974 = vmatmul.mubr.f32.gmra.mxu0 %v1600
        %v1975 = vpop.f32.mrf.mxu0
        %v1976 = vadd.f32 0.0, %v1975
        %v1977 = vpop.f32.mrf.mxu0
        %1978 = vmatprep.mubr.f32.mxu0 %v1605
        %1979 = vmatmul.mubr.f32.gmra.mxu0 %v1604
        %v1980 = vpop.f32.mrf.mxu0
        %v1981 = vadd.f32 0.0, %v1980
        %v1982 = vpop.f32.mrf.mxu0
        %1983 = vmatprep.mubr.f32.mxu0 %v1609
        %1984 = vmatmul.mubr.f32.gmra.mxu0 %v1608
        %v1985 = vpop.f32.mrf.mxu0
        %v1986 = vadd.f32 0.0, %v1985
        %v1987 = vpop.f32.mrf.mxu0
        %1988 = vmatprep.mubr.f32.mxu0 %v1613
        %1989 = vmatmul.mubr.f32.gmra.mxu0 %v1612
        %v1990 = vpop.f32.mrf.mxu0
        %v1991 = vadd.f32 0.0, %v1990
        %v1992 = vpop.f32.mrf.mxu0
        %1993 = vmatprep.mubr.f32.mxu0 %v1617
        %1994 = vmatmul.mubr.f32.gmra.mxu0 %v1616
        %v1995 = vpop.f32.mrf.mxu0
        %v1996 = vadd.f32 0.0, %v1995
        %v1997 = vpop.f32.mrf.mxu0
        %1998 = vmatprep.mubr.f32.mxu0 %v1621
        %1999 = vmatmul.mubr.f32.gmra.mxu0 %v1620
        %v2000 = vpop.f32.mrf.mxu0
        %v2001 = vadd.f32 0.0, %v2000
        %v2002 = vpop.f32.mrf.mxu0
        %2003 = vmatprep.mubr.f32.mxu0 %v1625
        %2004 = vmatmul.mubr.f32.gmra.mxu0 %v1624
        %v2005 = vpop.f32.mrf.mxu0
        %v2006 = vadd.f32 0.0, %v2005
        %v2007 = vpop.f32.mrf.mxu0
        %2008 = vmatprep.mubr.f32.mxu0 %v1629
        %2009 = vmatmul.mubr.f32.gmra.mxu0 %v1628
        %v2010 = vpop.f32.mrf.mxu0
        %v2011 = vadd.f32 0.0, %v2010
        %v2012 = vpop.f32.mrf.mxu0
        %2013 = vmatprep.mubr.f32.mxu0 %v1633
        %2014 = vmatmul.mubr.f32.gmra.mxu0 %v1632
        %v2015 = vpop.f32.mrf.mxu0
        %v2016 = vadd.f32 0.0, %v2015
        %v2017 = vpop.f32.mrf.mxu0
        %2018 = vmatprep.mubr.f32.mxu0 %v1637
        %2019 = vmatmul.mubr.f32.gmra.mxu0 %v1636
        %v2020 = vpop.f32.mrf.mxu0
        %v2021 = vadd.f32 0.0, %v2020
        %v2022 = vpop.f32.mrf.mxu0
        %2023 = vmatprep.mubr.f32.mxu0 %v1641
        %2024 = vmatmul.mubr.f32.gmra.mxu0 %v1640
        %v2025 = vpop.f32.mrf.mxu0
        %v2026 = vadd.f32 0.0, %v2025
        %v2027 = vpop.f32.mrf.mxu0
        %2028 = vdwg.mxu0
        %2029 = vmatprep.subr.mxu0 0.0
        %2030 = vmatpush1.msra.mxu0 %v827
        %2031 = vmatprep.subr.mxu0 0.0
        %2032 = vmatpush1.msra.mxu0 %v824
        %2033 = vmatprep.subr.mxu0 0.0
        %2034 = vmatpush1.msra.mxu0 %v821
        %2035 = vmatprep.subr.mxu0 0.0
        %2036 = vmatpush1.msra.mxu0 %v818
        %2037 = vmatprep.subr.mxu0 0.0
        %2038 = vmatpush1.msra.mxu0 %v815
        %2039 = vmatprep.subr.mxu0 0.0
        %2040 = vmatpush1.msra.mxu0 %v812
        %2041 = vmatprep.subr.mxu0 0.0
        %2042 = vmatpush1.msra.mxu0 %v809
        %2043 = vmatprep.subr.mxu0 0.0
        %2044 = vmatpush1.msra.mxu0 %v806
        %2045 = vmatprep.subr.mxu0 0.0
        %2046 = vmatpush1.msra.mxu0 %v803
        %2047 = vmatprep.subr.mxu0 0.0
        %2048 = vmatpush1.msra.mxu0 %v800
        %2049 = vmatprep.subr.mxu0 0.0
        %2050 = vmatpush1.msra.mxu0 %v797
        %2051 = vmatprep.subr.mxu0 0.0
        %2052 = vmatpush1.msra.mxu0 %v794
        %2053 = vmatprep.subr.mxu0 0.0
        %2054 = vmatpush1.msra.mxu0 %v791
        %2055 = vmatprep.subr.mxu0 0.0
        %2056 = vmatpush1.msra.mxu0 %v788
        %2057 = vmatprep.subr.mxu0 0.0
        %2058 = vmatpush1.msra.mxu0 %v785
        %2059 = vmatprep.subr.mxu0 0.0
        %2060 = vmatpush1.msra.mxu0 %v782
        %2061 = vmatprep.subr.mxu0 0.0
        %2062 = vmatpush2.msra.mxu0 %v875
        %2063 = vmatprep.subr.mxu0 0.0
        %2064 = vmatpush2.msra.mxu0 %v872
        %2065 = vmatprep.subr.mxu0 0.0
        %2066 = vmatpush2.msra.mxu0 %v869
        %2067 = vmatprep.subr.mxu0 0.0
        %2068 = vmatpush2.msra.mxu0 %v866
        %2069 = vmatprep.subr.mxu0 0.0
        %2070 = vmatpush2.msra.mxu0 %v863
        %2071 = vmatprep.subr.mxu0 0.0
        %2072 = vmatpush2.msra.mxu0 %v860
        %2073 = vmatprep.subr.mxu0 0.0
        %2074 = vmatpush2.msra.mxu0 %v857
        %2075 = vmatprep.subr.mxu0 0.0
        %2076 = vmatpush2.msra.mxu0 %v854
        %2077 = vmatprep.subr.mxu0 0.0
        %2078 = vmatpush2.msra.mxu0 %v851
        %2079 = vmatprep.subr.mxu0 0.0
        %2080 = vmatpush2.msra.mxu0 %v848
        %2081 = vmatprep.subr.mxu0 0.0
        %2082 = vmatpush2.msra.mxu0 %v845
        %2083 = vmatprep.subr.mxu0 0.0
        %2084 = vmatpush2.msra.mxu0 %v842
        %2085 = vmatprep.subr.mxu0 0.0
        %2086 = vmatpush2.msra.mxu0 %v839
        %2087 = vmatprep.subr.mxu0 0.0
        %2088 = vmatpush2.msra.mxu0 %v836
        %2089 = vmatprep.subr.mxu0 0.0
        %2090 = vmatpush2.msra.mxu0 %v833
        %2091 = vmatprep.subr.mxu0 0.0
        %2092 = vmatpush2.msra.mxu0 %v830
        %2093 = vmatprep.mubr.f32.mxu0 %v1391
        %2094 = vmatmul.mubr.f32.gmra.mxu0 %v1390
        %v2095 = vpop.f32.mrf.mxu0
        %v2096 = vadd.f32 %v1711, %v2095
        %v2097 = vpop.f32.mrf.mxu0
        %2098 = vmatprep.mubr.f32.mxu0 %v1395
        %2099 = vmatmul.mubr.f32.gmra.mxu0 %v1394
        %v2100 = vpop.f32.mrf.mxu0
        %v2101 = vadd.f32 %v1716, %v2100
        %v2102 = vpop.f32.mrf.mxu0
        %2103 = vmatprep.mubr.f32.mxu0 %v1399
        %2104 = vmatmul.mubr.f32.gmra.mxu0 %v1398
        %v2105 = vpop.f32.mrf.mxu0
        %v2106 = vadd.f32 %v1721, %v2105
        %v2107 = vpop.f32.mrf.mxu0
        %2108 = vmatprep.mubr.f32.mxu0 %v1403
        %2109 = vmatmul.mubr.f32.gmra.mxu0 %v1402
        %v2110 = vpop.f32.mrf.mxu0
        %v2111 = vadd.f32 %v1726, %v2110
        %v2112 = vpop.f32.mrf.mxu0
        %2113 = vmatprep.mubr.f32.mxu0 %v1407
        %2114 = vmatmul.mubr.f32.gmra.mxu0 %v1406
        %v2115 = vpop.f32.mrf.mxu0
        %v2116 = vadd.f32 %v1731, %v2115
        %v2117 = vpop.f32.mrf.mxu0
        %2118 = vmatprep.mubr.f32.mxu0 %v1411
        %2119 = vmatmul.mubr.f32.gmra.mxu0 %v1410
        %v2120 = vpop.f32.mrf.mxu0
        %v2121 = vadd.f32 %v1736, %v2120
        %v2122 = vpop.f32.mrf.mxu0
        %2123 = vmatprep.mubr.f32.mxu0 %v1415
        %2124 = vmatmul.mubr.f32.gmra.mxu0 %v1414
        %v2125 = vpop.f32.mrf.mxu0
        %v2126 = vadd.f32 %v1741, %v2125
        %v2127 = vpop.f32.mrf.mxu0
        %2128 = vmatprep.mubr.f32.mxu0 %v1419
        %2129 = vmatmul.mubr.f32.gmra.mxu0 %v1418
        %v2130 = vpop.f32.mrf.mxu0
        %v2131 = vadd.f32 %v1746, %v2130
        %v2132 = vpop.f32.mrf.mxu0
        %2133 = vmatprep.mubr.f32.mxu0 %v1423
        %2134 = vmatmul.mubr.f32.gmra.mxu0 %v1422
        %v2135 = vpop.f32.mrf.mxu0
        %v2136 = vadd.f32 %v1751, %v2135
        %v2137 = vpop.f32.mrf.mxu0
        %2138 = vmatprep.mubr.f32.mxu0 %v1427
        %2139 = vmatmul.mubr.f32.gmra.mxu0 %v1426
        %v2140 = vpop.f32.mrf.mxu0
        %v2141 = vadd.f32 %v1756, %v2140
        %v2142 = vpop.f32.mrf.mxu0
        %2143 = vmatprep.mubr.f32.mxu0 %v1431
        %2144 = vmatmul.mubr.f32.gmra.mxu0 %v1430
        %v2145 = vpop.f32.mrf.mxu0
        %v2146 = vadd.f32 %v1761, %v2145
        %v2147 = vpop.f32.mrf.mxu0
        %2148 = vmatprep.mubr.f32.mxu0 %v1435
        %2149 = vmatmul.mubr.f32.gmra.mxu0 %v1434
        %v2150 = vpop.f32.mrf.mxu0
        %v2151 = vadd.f32 %v1766, %v2150
        %v2152 = vpop.f32.mrf.mxu0
        %2153 = vmatprep.mubr.f32.mxu0 %v1439
        %2154 = vmatmul.mubr.f32.gmra.mxu0 %v1438
        %v2155 = vpop.f32.mrf.mxu0
        %v2156 = vadd.f32 %v1771, %v2155
        %v2157 = vpop.f32.mrf.mxu0
        %2158 = vmatprep.mubr.f32.mxu0 %v1443
        %2159 = vmatmul.mubr.f32.gmra.mxu0 %v1442
        %v2160 = vpop.f32.mrf.mxu0
        %v2161 = vadd.f32 %v1776, %v2160
        %v2162 = vpop.f32.mrf.mxu0
        %2163 = vmatprep.mubr.f32.mxu0 %v1447
        %2164 = vmatmul.mubr.f32.gmra.mxu0 %v1446
        %v2165 = vpop.f32.mrf.mxu0
        %v2166 = vadd.f32 %v1781, %v2165
        %v2167 = vpop.f32.mrf.mxu0
        %2168 = vmatprep.mubr.f32.mxu0 %v1451
        %2169 = vmatmul.mubr.f32.gmra.mxu0 %v1450
        %v2170 = vpop.f32.mrf.mxu0
        %v2171 = vadd.f32 %v1786, %v2170
        %v2172 = vpop.f32.mrf.mxu0
        %2173 = vmatprep.mubr.f32.mxu0 %v1455
        %2174 = vmatmul.mubr.f32.gmra.mxu0 %v1454
        %v2175 = vpop.f32.mrf.mxu0
        %v2176 = vadd.f32 %v1791, %v2175
        %v2177 = vpop.f32.mrf.mxu0
        %2178 = vmatprep.mubr.f32.mxu0 %v1459
        %2179 = vmatmul.mubr.f32.gmra.mxu0 %v1458
        %v2180 = vpop.f32.mrf.mxu0
        %v2181 = vadd.f32 %v1796, %v2180
        %v2182 = vpop.f32.mrf.mxu0
        %2183 = vmatprep.mubr.f32.mxu0 %v1463
        %2184 = vmatmul.mubr.f32.gmra.mxu0 %v1462
        %v2185 = vpop.f32.mrf.mxu0
        %v2186 = vadd.f32 %v1801, %v2185
        %v2187 = vpop.f32.mrf.mxu0
        %2188 = vmatprep.mubr.f32.mxu0 %v1467
        %2189 = vmatmul.mubr.f32.gmra.mxu0 %v1466
        %v2190 = vpop.f32.mrf.mxu0
        %v2191 = vadd.f32 %v1806, %v2190
        %v2192 = vpop.f32.mrf.mxu0
        %2193 = vmatprep.mubr.f32.mxu0 %v1471
        %2194 = vmatmul.mubr.f32.gmra.mxu0 %v1470
        %v2195 = vpop.f32.mrf.mxu0
        %v2196 = vadd.f32 %v1811, %v2195
        %v2197 = vpop.f32.mrf.mxu0
        %2198 = vmatprep.mubr.f32.mxu0 %v1475
        %2199 = vmatmul.mubr.f32.gmra.mxu0 %v1474
        %v2200 = vpop.f32.mrf.mxu0
        %v2201 = vadd.f32 %v1816, %v2200
        %v2202 = vpop.f32.mrf.mxu0
        %2203 = vmatprep.mubr.f32.mxu0 %v1479
        %2204 = vmatmul.mubr.f32.gmra.mxu0 %v1478
        %v2205 = vpop.f32.mrf.mxu0
        %v2206 = vadd.f32 %v1821, %v2205
        %v2207 = vpop.f32.mrf.mxu0
        %2208 = vmatprep.mubr.f32.mxu0 %v1483
        %2209 = vmatmul.mubr.f32.gmra.mxu0 %v1482
        %v2210 = vpop.f32.mrf.mxu0
        %v2211 = vadd.f32 %v1826, %v2210
        %v2212 = vpop.f32.mrf.mxu0
        %2213 = vmatprep.mubr.f32.mxu0 %v1487
        %2214 = vmatmul.mubr.f32.gmra.mxu0 %v1486
        %v2215 = vpop.f32.mrf.mxu0
        %v2216 = vadd.f32 %v1831, %v2215
        %v2217 = vpop.f32.mrf.mxu0
        %2218 = vmatprep.mubr.f32.mxu0 %v1491
        %2219 = vmatmul.mubr.f32.gmra.mxu0 %v1490
        %v2220 = vpop.f32.mrf.mxu0
        %v2221 = vadd.f32 %v1836, %v2220
        %v2222 = vpop.f32.mrf.mxu0
        %2223 = vmatprep.mubr.f32.mxu0 %v1495
        %2224 = vmatmul.mubr.f32.gmra.mxu0 %v1494
        %v2225 = vpop.f32.mrf.mxu0
        %v2226 = vadd.f32 %v1841, %v2225
        %v2227 = vpop.f32.mrf.mxu0
        %2228 = vmatprep.mubr.f32.mxu0 %v1499
        %2229 = vmatmul.mubr.f32.gmra.mxu0 %v1498
        %v2230 = vpop.f32.mrf.mxu0
        %v2231 = vadd.f32 %v1846, %v2230
        %v2232 = vpop.f32.mrf.mxu0
        %2233 = vmatprep.mubr.f32.mxu0 %v1503
        %2234 = vmatmul.mubr.f32.gmra.mxu0 %v1502
        %v2235 = vpop.f32.mrf.mxu0
        %v2236 = vadd.f32 %v1851, %v2235
        %v2237 = vpop.f32.mrf.mxu0
        %2238 = vmatprep.mubr.f32.mxu0 %v1507
        %2239 = vmatmul.mubr.f32.gmra.mxu0 %v1506
        %v2240 = vpop.f32.mrf.mxu0
        %v2241 = vadd.f32 %v1856, %v2240
        %v2242 = vpop.f32.mrf.mxu0
        %2243 = vmatprep.mubr.f32.mxu0 %v1511
        %2244 = vmatmul.mubr.f32.gmra.mxu0 %v1510
        %v2245 = vpop.f32.mrf.mxu0
        %v2246 = vadd.f32 %v1861, %v2245
        %v2247 = vpop.f32.mrf.mxu0
        %2248 = vmatprep.mubr.f32.mxu0 %v1515
        %2249 = vmatmul.mubr.f32.gmra.mxu0 %v1514
        %v2250 = vpop.f32.mrf.mxu0
        %v2251 = vadd.f32 %v1866, %v2250
        %v2252 = vpop.f32.mrf.mxu0
        %2253 = vmatprep.mubr.f32.mxu0 %v1519
        %2254 = vmatmul.mubr.f32.gmra.mxu0 %v1518
        %v2255 = vpop.f32.mrf.mxu0
        %v2256 = vadd.f32 %v1871, %v2255
        %v2257 = vpop.f32.mrf.mxu0
        %2258 = vmatprep.mubr.f32.mxu0 %v1523
        %2259 = vmatmul.mubr.f32.gmra.mxu0 %v1522
        %v2260 = vpop.f32.mrf.mxu0
        %v2261 = vadd.f32 %v1876, %v2260
        %v2262 = vpop.f32.mrf.mxu0
        %2263 = vmatprep.mubr.f32.mxu0 %v1527
        %2264 = vmatmul.mubr.f32.gmra.mxu0 %v1526
        %v2265 = vpop.f32.mrf.mxu0
        %v2266 = vadd.f32 %v1881, %v2265
        %v2267 = vpop.f32.mrf.mxu0
        %2268 = vmatprep.mubr.f32.mxu0 %v1531
        %2269 = vmatmul.mubr.f32.gmra.mxu0 %v1530
        %v2270 = vpop.f32.mrf.mxu0
        %v2271 = vadd.f32 %v1886, %v2270
        %v2272 = vpop.f32.mrf.mxu0
        %2273 = vmatprep.mubr.f32.mxu0 %v1535
        %2274 = vmatmul.mubr.f32.gmra.mxu0 %v1534
        %v2275 = vpop.f32.mrf.mxu0
        %v2276 = vadd.f32 %v1891, %v2275
        %v2277 = vpop.f32.mrf.mxu0
        %2278 = vmatprep.mubr.f32.mxu0 %v1539
        %2279 = vmatmul.mubr.f32.gmra.mxu0 %v1538
        %v2280 = vpop.f32.mrf.mxu0
        %v2281 = vadd.f32 %v1896, %v2280
        %v2282 = vpop.f32.mrf.mxu0
        %2283 = vmatprep.mubr.f32.mxu0 %v1543
        %2284 = vmatmul.mubr.f32.gmra.mxu0 %v1542
        %v2285 = vpop.f32.mrf.mxu0
        %v2286 = vadd.f32 %v1901, %v2285
        %v2287 = vpop.f32.mrf.mxu0
        %2288 = vmatprep.mubr.f32.mxu0 %v1547
        %2289 = vmatmul.mubr.f32.gmra.mxu0 %v1546
        %v2290 = vpop.f32.mrf.mxu0
        %v2291 = vadd.f32 %v1906, %v2290
        %v2292 = vpop.f32.mrf.mxu0
        %2293 = vmatprep.mubr.f32.mxu0 %v1551
        %2294 = vmatmul.mubr.f32.gmra.mxu0 %v1550
        %v2295 = vpop.f32.mrf.mxu0
        %v2296 = vadd.f32 %v1911, %v2295
        %v2297 = vpop.f32.mrf.mxu0
        %2298 = vmatprep.mubr.f32.mxu0 %v1555
        %2299 = vmatmul.mubr.f32.gmra.mxu0 %v1554
        %v2300 = vpop.f32.mrf.mxu0
        %v2301 = vadd.f32 %v1916, %v2300
        %v2302 = vpop.f32.mrf.mxu0
        %2303 = vmatprep.mubr.f32.mxu0 %v1559
        %2304 = vmatmul.mubr.f32.gmra.mxu0 %v1558
        %v2305 = vpop.f32.mrf.mxu0
        %v2306 = vadd.f32 %v1921, %v2305
        %v2307 = vpop.f32.mrf.mxu0
        %2308 = vmatprep.mubr.f32.mxu0 %v1563
        %2309 = vmatmul.mubr.f32.gmra.mxu0 %v1562
        %v2310 = vpop.f32.mrf.mxu0
        %v2311 = vadd.f32 %v1926, %v2310
        %v2312 = vpop.f32.mrf.mxu0
        %2313 = vmatprep.mubr.f32.mxu0 %v1567
        %2314 = vmatmul.mubr.f32.gmra.mxu0 %v1566
        %v2315 = vpop.f32.mrf.mxu0
        %v2316 = vadd.f32 %v1931, %v2315
        %v2317 = vpop.f32.mrf.mxu0
        %2318 = vmatprep.mubr.f32.mxu0 %v1571
        %2319 = vmatmul.mubr.f32.gmra.mxu0 %v1570
        %v2320 = vpop.f32.mrf.mxu0
        %v2321 = vadd.f32 %v1936, %v2320
        %v2322 = vpop.f32.mrf.mxu0
        %2323 = vmatprep.mubr.f32.mxu0 %v1575
        %2324 = vmatmul.mubr.f32.gmra.mxu0 %v1574
        %v2325 = vpop.f32.mrf.mxu0
        %v2326 = vadd.f32 %v1941, %v2325
        %v2327 = vpop.f32.mrf.mxu0
        %2328 = vmatprep.mubr.f32.mxu0 %v1579
        %2329 = vmatmul.mubr.f32.gmra.mxu0 %v1578
        %v2330 = vpop.f32.mrf.mxu0
        %v2331 = vadd.f32 %v1946, %v2330
        %v2332 = vpop.f32.mrf.mxu0
        %2333 = vmatprep.mubr.f32.mxu0 %v1583
        %2334 = vmatmul.mubr.f32.gmra.mxu0 %v1582
        %v2335 = vpop.f32.mrf.mxu0
        %v2336 = vadd.f32 %v1951, %v2335
        %v2337 = vpop.f32.mrf.mxu0
        %2338 = vmatprep.mubr.f32.mxu0 %v1587
        %2339 = vmatmul.mubr.f32.gmra.mxu0 %v1586
        %v2340 = vpop.f32.mrf.mxu0
        %v2341 = vadd.f32 %v1956, %v2340
        %v2342 = vpop.f32.mrf.mxu0
        %2343 = vmatprep.mubr.f32.mxu0 %v1591
        %2344 = vmatmul.mubr.f32.gmra.mxu0 %v1590
        %v2345 = vpop.f32.mrf.mxu0
        %v2346 = vadd.f32 %v1961, %v2345
        %v2347 = vpop.f32.mrf.mxu0
        %2348 = vmatprep.mubr.f32.mxu0 %v1595
        %2349 = vmatmul.mubr.f32.gmra.mxu0 %v1594
        %v2350 = vpop.f32.mrf.mxu0
        %v2351 = vadd.f32 %v1966, %v2350
        %v2352 = vpop.f32.mrf.mxu0
        %2353 = vmatprep.mubr.f32.mxu0 %v1599
        %2354 = vmatmul.mubr.f32.gmra.mxu0 %v1598
        %v2355 = vpop.f32.mrf.mxu0
        %v2356 = vadd.f32 %v1971, %v2355
        %v2357 = vpop.f32.mrf.mxu0
        %2358 = vmatprep.mubr.f32.mxu0 %v1603
        %2359 = vmatmul.mubr.f32.gmra.mxu0 %v1602
        %v2360 = vpop.f32.mrf.mxu0
        %v2361 = vadd.f32 %v1976, %v2360
        %v2362 = vpop.f32.mrf.mxu0
        %2363 = vmatprep.mubr.f32.mxu0 %v1607
        %2364 = vmatmul.mubr.f32.gmra.mxu0 %v1606
        %v2365 = vpop.f32.mrf.mxu0
        %v2366 = vadd.f32 %v1981, %v2365
        %v2367 = vpop.f32.mrf.mxu0
        %2368 = vmatprep.mubr.f32.mxu0 %v1611
        %2369 = vmatmul.mubr.f32.gmra.mxu0 %v1610
        %v2370 = vpop.f32.mrf.mxu0
        %v2371 = vadd.f32 %v1986, %v2370
        %v2372 = vpop.f32.mrf.mxu0
        %2373 = vmatprep.mubr.f32.mxu0 %v1615
        %2374 = vmatmul.mubr.f32.gmra.mxu0 %v1614
        %v2375 = vpop.f32.mrf.mxu0
        %v2376 = vadd.f32 %v1991, %v2375
        %v2377 = vpop.f32.mrf.mxu0
        %2378 = vmatprep.mubr.f32.mxu0 %v1619
        %2379 = vmatmul.mubr.f32.gmra.mxu0 %v1618
        %v2380 = vpop.f32.mrf.mxu0
        %v2381 = vadd.f32 %v1996, %v2380
        %v2382 = vpop.f32.mrf.mxu0
        %2383 = vmatprep.mubr.f32.mxu0 %v1623
        %2384 = vmatmul.mubr.f32.gmra.mxu0 %v1622
        %v2385 = vpop.f32.mrf.mxu0
        %v2386 = vadd.f32 %v2001, %v2385
        %v2387 = vpop.f32.mrf.mxu0
        %2388 = vmatprep.mubr.f32.mxu0 %v1627
        %2389 = vmatmul.mubr.f32.gmra.mxu0 %v1626
        %v2390 = vpop.f32.mrf.mxu0
        %v2391 = vadd.f32 %v2006, %v2390
        %v2392 = vpop.f32.mrf.mxu0
        %2393 = vmatprep.mubr.f32.mxu0 %v1631
        %2394 = vmatmul.mubr.f32.gmra.mxu0 %v1630
        %v2395 = vpop.f32.mrf.mxu0
        %v2396 = vadd.f32 %v2011, %v2395
        %v2397 = vpop.f32.mrf.mxu0
        %2398 = vmatprep.mubr.f32.mxu0 %v1635
        %2399 = vmatmul.mubr.f32.gmra.mxu0 %v1634
        %v2400 = vpop.f32.mrf.mxu0
        %v2401 = vadd.f32 %v2016, %v2400
        %v2402 = vpop.f32.mrf.mxu0
        %2403 = vmatprep.mubr.f32.mxu0 %v1639
        %2404 = vmatmul.mubr.f32.gmra.mxu0 %v1638
        %v2405 = vpop.f32.mrf.mxu0
        %v2406 = vadd.f32 %v2021, %v2405
        %v2407 = vpop.f32.mrf.mxu0
        %2408 = vmatprep.mubr.f32.mxu0 %v1643
        %2409 = vmatmul.mubr.f32.gmra.mxu0 %v1642
        %v2410 = vpop.f32.mrf.mxu0
        %v2411 = vadd.f32 %v2026, %v2410
        %v2412 = vpop.f32.mrf.mxu0
        %2413 = vdwg.mxu0
        %2414 = vmatprep.subr.mxu0 0.0
        %2415 = vmatpush1.msra.mxu0 %v475
        %2416 = vmatprep.subr.mxu0 0.0
        %2417 = vmatpush1.msra.mxu0 %v472
        %2418 = vmatprep.subr.mxu0 0.0
        %2419 = vmatpush1.msra.mxu0 %v469
        %2420 = vmatprep.subr.mxu0 0.0
        %2421 = vmatpush1.msra.mxu0 %v466
        %2422 = vmatprep.subr.mxu0 0.0
        %2423 = vmatpush1.msra.mxu0 %v463
        %2424 = vmatprep.subr.mxu0 0.0
        %2425 = vmatpush1.msra.mxu0 %v460
        %2426 = vmatprep.subr.mxu0 0.0
        %2427 = vmatpush1.msra.mxu0 %v457
        %2428 = vmatprep.subr.mxu0 0.0
        %2429 = vmatpush1.msra.mxu0 %v454
        %2430 = vmatprep.subr.mxu0 0.0
        %2431 = vmatpush1.msra.mxu0 %v451
        %2432 = vmatprep.subr.mxu0 0.0
        %2433 = vmatpush1.msra.mxu0 %v448
        %2434 = vmatprep.subr.mxu0 0.0
        %2435 = vmatpush1.msra.mxu0 %v445
        %2436 = vmatprep.subr.mxu0 0.0
        %2437 = vmatpush1.msra.mxu0 %v442
        %2438 = vmatprep.subr.mxu0 0.0
        %2439 = vmatpush1.msra.mxu0 %v439
        %2440 = vmatprep.subr.mxu0 0.0
        %2441 = vmatpush1.msra.mxu0 %v436
        %2442 = vmatprep.subr.mxu0 0.0
        %2443 = vmatpush1.msra.mxu0 %v433
        %2444 = vmatprep.subr.mxu0 0.0
        %2445 = vmatpush1.msra.mxu0 %v430
        %2446 = vmatprep.subr.mxu0 0.0
        %2447 = vmatpush2.msra.mxu0 %v523
        %2448 = vmatprep.subr.mxu0 0.0
        %2449 = vmatpush2.msra.mxu0 %v520
        %2450 = vmatprep.subr.mxu0 0.0
        %2451 = vmatpush2.msra.mxu0 %v517
        %2452 = vmatprep.subr.mxu0 0.0
        %2453 = vmatpush2.msra.mxu0 %v514
        %2454 = vmatprep.subr.mxu0 0.0
        %2455 = vmatpush2.msra.mxu0 %v511
        %2456 = vmatprep.subr.mxu0 0.0
        %2457 = vmatpush2.msra.mxu0 %v508
        %2458 = vmatprep.subr.mxu0 0.0
        %2459 = vmatpush2.msra.mxu0 %v505
        %2460 = vmatprep.subr.mxu0 0.0
        %2461 = vmatpush2.msra.mxu0 %v502
        %2462 = vmatprep.subr.mxu0 0.0
        %2463 = vmatpush2.msra.mxu0 %v499
        %2464 = vmatprep.subr.mxu0 0.0
        %2465 = vmatpush2.msra.mxu0 %v496
        %2466 = vmatprep.subr.mxu0 0.0
        %2467 = vmatpush2.msra.mxu0 %v493
        %2468 = vmatprep.subr.mxu0 0.0
        %2469 = vmatpush2.msra.mxu0 %v490
        %2470 = vmatprep.subr.mxu0 0.0
        %2471 = vmatpush2.msra.mxu0 %v487
        %2472 = vmatprep.subr.mxu0 0.0
        %2473 = vmatpush2.msra.mxu0 %v484
        %2474 = vmatprep.subr.mxu0 0.0
        %2475 = vmatpush2.msra.mxu0 %v481
        %2476 = vmatprep.subr.mxu0 0.0
        %2477 = vmatpush2.msra.mxu0 %v478
        %2478 = vmatprep.mubr.f32.mxu0 %v1133
        %2479 = vmatmul.mubr.f32.gmra.mxu0 %v1132
        %v2480 = vpop.f32.mrf.mxu0
        %v2481 = vadd.f32 %v2096, %v2480
        %v2482 = vpop.f32.mrf.mxu0
        %2483 = vmatprep.mubr.f32.mxu0 %v1137
        %2484 = vmatmul.mubr.f32.gmra.mxu0 %v1136
        %v2485 = vpop.f32.mrf.mxu0
        %v2486 = vadd.f32 %v2101, %v2485
        %v2487 = vpop.f32.mrf.mxu0
        %2488 = vmatprep.mubr.f32.mxu0 %v1141
        %2489 = vmatmul.mubr.f32.gmra.mxu0 %v1140
        %v2490 = vpop.f32.mrf.mxu0
        %v2491 = vadd.f32 %v2106, %v2490
        %v2492 = vpop.f32.mrf.mxu0
        %2493 = vmatprep.mubr.f32.mxu0 %v1145
        %2494 = vmatmul.mubr.f32.gmra.mxu0 %v1144
        %v2495 = vpop.f32.mrf.mxu0
        %v2496 = vadd.f32 %v2111, %v2495
        %v2497 = vpop.f32.mrf.mxu0
        %2498 = vmatprep.mubr.f32.mxu0 %v1149
        %2499 = vmatmul.mubr.f32.gmra.mxu0 %v1148
        %v2500 = vpop.f32.mrf.mxu0
        %v2501 = vadd.f32 %v2116, %v2500
        %v2502 = vpop.f32.mrf.mxu0
        %2503 = vmatprep.mubr.f32.mxu0 %v1153
        %2504 = vmatmul.mubr.f32.gmra.mxu0 %v1152
        %v2505 = vpop.f32.mrf.mxu0
        %v2506 = vadd.f32 %v2121, %v2505
        %v2507 = vpop.f32.mrf.mxu0
        %2508 = vmatprep.mubr.f32.mxu0 %v1157
        %2509 = vmatmul.mubr.f32.gmra.mxu0 %v1156
        %v2510 = vpop.f32.mrf.mxu0
        %v2511 = vadd.f32 %v2126, %v2510
        %v2512 = vpop.f32.mrf.mxu0
        %2513 = vmatprep.mubr.f32.mxu0 %v1161
        %2514 = vmatmul.mubr.f32.gmra.mxu0 %v1160
        %v2515 = vpop.f32.mrf.mxu0
        %v2516 = vadd.f32 %v2131, %v2515
        %v2517 = vpop.f32.mrf.mxu0
        %2518 = vmatprep.mubr.f32.mxu0 %v1165
        %2519 = vmatmul.mubr.f32.gmra.mxu0 %v1164
        %v2520 = vpop.f32.mrf.mxu0
        %v2521 = vadd.f32 %v2136, %v2520
        %v2522 = vpop.f32.mrf.mxu0
        %2523 = vmatprep.mubr.f32.mxu0 %v1169
        %2524 = vmatmul.mubr.f32.gmra.mxu0 %v1168
        %v2525 = vpop.f32.mrf.mxu0
        %v2526 = vadd.f32 %v2141, %v2525
        %v2527 = vpop.f32.mrf.mxu0
        %2528 = vmatprep.mubr.f32.mxu0 %v1173
        %2529 = vmatmul.mubr.f32.gmra.mxu0 %v1172
        %v2530 = vpop.f32.mrf.mxu0
        %v2531 = vadd.f32 %v2146, %v2530
        %v2532 = vpop.f32.mrf.mxu0
        %2533 = vmatprep.mubr.f32.mxu0 %v1177
        %2534 = vmatmul.mubr.f32.gmra.mxu0 %v1176
        %v2535 = vpop.f32.mrf.mxu0
        %v2536 = vadd.f32 %v2151, %v2535
        %v2537 = vpop.f32.mrf.mxu0
        %2538 = vmatprep.mubr.f32.mxu0 %v1181
        %2539 = vmatmul.mubr.f32.gmra.mxu0 %v1180
        %v2540 = vpop.f32.mrf.mxu0
        %v2541 = vadd.f32 %v2156, %v2540
        %v2542 = vpop.f32.mrf.mxu0
        %2543 = vmatprep.mubr.f32.mxu0 %v1185
        %2544 = vmatmul.mubr.f32.gmra.mxu0 %v1184
        %v2545 = vpop.f32.mrf.mxu0
        %v2546 = vadd.f32 %v2161, %v2545
        %v2547 = vpop.f32.mrf.mxu0
        %2548 = vmatprep.mubr.f32.mxu0 %v1189
        %2549 = vmatmul.mubr.f32.gmra.mxu0 %v1188
        %v2550 = vpop.f32.mrf.mxu0
        %v2551 = vadd.f32 %v2166, %v2550
        %v2552 = vpop.f32.mrf.mxu0
        %2553 = vmatprep.mubr.f32.mxu0 %v1193
        %2554 = vmatmul.mubr.f32.gmra.mxu0 %v1192
        %v2555 = vpop.f32.mrf.mxu0
        %v2556 = vadd.f32 %v2171, %v2555
        %v2557 = vpop.f32.mrf.mxu0
        %2558 = vmatprep.mubr.f32.mxu0 %v1197
        %2559 = vmatmul.mubr.f32.gmra.mxu0 %v1196
        %v2560 = vpop.f32.mrf.mxu0
        %v2561 = vadd.f32 %v2176, %v2560
        %v2562 = vpop.f32.mrf.mxu0
        %2563 = vmatprep.mubr.f32.mxu0 %v1201
        %2564 = vmatmul.mubr.f32.gmra.mxu0 %v1200
        %v2565 = vpop.f32.mrf.mxu0
        %v2566 = vadd.f32 %v2181, %v2565
        %v2567 = vpop.f32.mrf.mxu0
        %2568 = vmatprep.mubr.f32.mxu0 %v1205
        %2569 = vmatmul.mubr.f32.gmra.mxu0 %v1204
        %v2570 = vpop.f32.mrf.mxu0
        %v2571 = vadd.f32 %v2186, %v2570
        %v2572 = vpop.f32.mrf.mxu0
        %2573 = vmatprep.mubr.f32.mxu0 %v1209
        %2574 = vmatmul.mubr.f32.gmra.mxu0 %v1208
        %v2575 = vpop.f32.mrf.mxu0
        %v2576 = vadd.f32 %v2191, %v2575
        %v2577 = vpop.f32.mrf.mxu0
        %2578 = vmatprep.mubr.f32.mxu0 %v1213
        %2579 = vmatmul.mubr.f32.gmra.mxu0 %v1212
        %v2580 = vpop.f32.mrf.mxu0
        %v2581 = vadd.f32 %v2196, %v2580
        %v2582 = vpop.f32.mrf.mxu0
        %2583 = vmatprep.mubr.f32.mxu0 %v1217
        %2584 = vmatmul.mubr.f32.gmra.mxu0 %v1216
        %v2585 = vpop.f32.mrf.mxu0
        %v2586 = vadd.f32 %v2201, %v2585
        %v2587 = vpop.f32.mrf.mxu0
        %2588 = vmatprep.mubr.f32.mxu0 %v1221
        %2589 = vmatmul.mubr.f32.gmra.mxu0 %v1220
        %v2590 = vpop.f32.mrf.mxu0
        %v2591 = vadd.f32 %v2206, %v2590
        %v2592 = vpop.f32.mrf.mxu0
        %2593 = vmatprep.mubr.f32.mxu0 %v1225
        %2594 = vmatmul.mubr.f32.gmra.mxu0 %v1224
        %v2595 = vpop.f32.mrf.mxu0
        %v2596 = vadd.f32 %v2211, %v2595
        %v2597 = vpop.f32.mrf.mxu0
        %2598 = vmatprep.mubr.f32.mxu0 %v1229
        %2599 = vmatmul.mubr.f32.gmra.mxu0 %v1228
        %v2600 = vpop.f32.mrf.mxu0
        %v2601 = vadd.f32 %v2216, %v2600
        %v2602 = vpop.f32.mrf.mxu0
        %2603 = vmatprep.mubr.f32.mxu0 %v1233
        %2604 = vmatmul.mubr.f32.gmra.mxu0 %v1232
        %v2605 = vpop.f32.mrf.mxu0
        %v2606 = vadd.f32 %v2221, %v2605
        %v2607 = vpop.f32.mrf.mxu0
        %2608 = vmatprep.mubr.f32.mxu0 %v1237
        %2609 = vmatmul.mubr.f32.gmra.mxu0 %v1236
        %v2610 = vpop.f32.mrf.mxu0
        %v2611 = vadd.f32 %v2226, %v2610
        %v2612 = vpop.f32.mrf.mxu0
        %2613 = vmatprep.mubr.f32.mxu0 %v1241
        %2614 = vmatmul.mubr.f32.gmra.mxu0 %v1240
        %v2615 = vpop.f32.mrf.mxu0
        %v2616 = vadd.f32 %v2231, %v2615
        %v2617 = vpop.f32.mrf.mxu0
        %2618 = vmatprep.mubr.f32.mxu0 %v1245
        %2619 = vmatmul.mubr.f32.gmra.mxu0 %v1244
        %v2620 = vpop.f32.mrf.mxu0
        %v2621 = vadd.f32 %v2236, %v2620
        %v2622 = vpop.f32.mrf.mxu0
        %2623 = vmatprep.mubr.f32.mxu0 %v1249
        %2624 = vmatmul.mubr.f32.gmra.mxu0 %v1248
        %v2625 = vpop.f32.mrf.mxu0
        %v2626 = vadd.f32 %v2241, %v2625
        %v2627 = vpop.f32.mrf.mxu0
        %2628 = vmatprep.mubr.f32.mxu0 %v1253
        %2629 = vmatmul.mubr.f32.gmra.mxu0 %v1252
        %v2630 = vpop.f32.mrf.mxu0
        %v2631 = vadd.f32 %v2246, %v2630
        %v2632 = vpop.f32.mrf.mxu0
        %2633 = vmatprep.mubr.f32.mxu0 %v1257
        %2634 = vmatmul.mubr.f32.gmra.mxu0 %v1256
        %v2635 = vpop.f32.mrf.mxu0
        %v2636 = vadd.f32 %v2251, %v2635
        %v2637 = vpop.f32.mrf.mxu0
        %2638 = vmatprep.mubr.f32.mxu0 %v1261
        %2639 = vmatmul.mubr.f32.gmra.mxu0 %v1260
        %v2640 = vpop.f32.mrf.mxu0
        %v2641 = vadd.f32 %v2256, %v2640
        %v2642 = vpop.f32.mrf.mxu0
        %2643 = vmatprep.mubr.f32.mxu0 %v1265
        %2644 = vmatmul.mubr.f32.gmra.mxu0 %v1264
        %v2645 = vpop.f32.mrf.mxu0
        %v2646 = vadd.f32 %v2261, %v2645
        %v2647 = vpop.f32.mrf.mxu0
        %2648 = vmatprep.mubr.f32.mxu0 %v1269
        %2649 = vmatmul.mubr.f32.gmra.mxu0 %v1268
        %v2650 = vpop.f32.mrf.mxu0
        %v2651 = vadd.f32 %v2266, %v2650
        %v2652 = vpop.f32.mrf.mxu0
        %2653 = vmatprep.mubr.f32.mxu0 %v1273
        %2654 = vmatmul.mubr.f32.gmra.mxu0 %v1272
        %v2655 = vpop.f32.mrf.mxu0
        %v2656 = vadd.f32 %v2271, %v2655
        %v2657 = vpop.f32.mrf.mxu0
        %2658 = vmatprep.mubr.f32.mxu0 %v1277
        %2659 = vmatmul.mubr.f32.gmra.mxu0 %v1276
        %v2660 = vpop.f32.mrf.mxu0
        %v2661 = vadd.f32 %v2276, %v2660
        %v2662 = vpop.f32.mrf.mxu0
        %2663 = vmatprep.mubr.f32.mxu0 %v1281
        %2664 = vmatmul.mubr.f32.gmra.mxu0 %v1280
        %v2665 = vpop.f32.mrf.mxu0
        %v2666 = vadd.f32 %v2281, %v2665
        %v2667 = vpop.f32.mrf.mxu0
        %2668 = vmatprep.mubr.f32.mxu0 %v1285
        %2669 = vmatmul.mubr.f32.gmra.mxu0 %v1284
        %v2670 = vpop.f32.mrf.mxu0
        %v2671 = vadd.f32 %v2286, %v2670
        %v2672 = vpop.f32.mrf.mxu0
        %2673 = vmatprep.mubr.f32.mxu0 %v1289
        %2674 = vmatmul.mubr.f32.gmra.mxu0 %v1288
        %v2675 = vpop.f32.mrf.mxu0
        %v2676 = vadd.f32 %v2291, %v2675
        %v2677 = vpop.f32.mrf.mxu0
        %2678 = vmatprep.mubr.f32.mxu0 %v1293
        %2679 = vmatmul.mubr.f32.gmra.mxu0 %v1292
        %v2680 = vpop.f32.mrf.mxu0
        %v2681 = vadd.f32 %v2296, %v2680
        %v2682 = vpop.f32.mrf.mxu0
        %2683 = vmatprep.mubr.f32.mxu0 %v1297
        %2684 = vmatmul.mubr.f32.gmra.mxu0 %v1296
        %v2685 = vpop.f32.mrf.mxu0
        %v2686 = vadd.f32 %v2301, %v2685
        %v2687 = vpop.f32.mrf.mxu0
        %2688 = vmatprep.mubr.f32.mxu0 %v1301
        %2689 = vmatmul.mubr.f32.gmra.mxu0 %v1300
        %v2690 = vpop.f32.mrf.mxu0
        %v2691 = vadd.f32 %v2306, %v2690
        %v2692 = vpop.f32.mrf.mxu0
        %2693 = vmatprep.mubr.f32.mxu0 %v1305
        %2694 = vmatmul.mubr.f32.gmra.mxu0 %v1304
        %v2695 = vpop.f32.mrf.mxu0
        %v2696 = vadd.f32 %v2311, %v2695
        %v2697 = vpop.f32.mrf.mxu0
        %2698 = vmatprep.mubr.f32.mxu0 %v1309
        %2699 = vmatmul.mubr.f32.gmra.mxu0 %v1308
        %v2700 = vpop.f32.mrf.mxu0
        %v2701 = vadd.f32 %v2316, %v2700
        %v2702 = vpop.f32.mrf.mxu0
        %2703 = vmatprep.mubr.f32.mxu0 %v1313
        %2704 = vmatmul.mubr.f32.gmra.mxu0 %v1312
        %v2705 = vpop.f32.mrf.mxu0
        %v2706 = vadd.f32 %v2321, %v2705
        %v2707 = vpop.f32.mrf.mxu0
        %2708 = vmatprep.mubr.f32.mxu0 %v1317
        %2709 = vmatmul.mubr.f32.gmra.mxu0 %v1316
        %v2710 = vpop.f32.mrf.mxu0
        %v2711 = vadd.f32 %v2326, %v2710
        %v2712 = vpop.f32.mrf.mxu0
        %2713 = vmatprep.mubr.f32.mxu0 %v1321
        %2714 = vmatmul.mubr.f32.gmra.mxu0 %v1320
        %v2715 = vpop.f32.mrf.mxu0
        %v2716 = vadd.f32 %v2331, %v2715
        %v2717 = vpop.f32.mrf.mxu0
        %2718 = vmatprep.mubr.f32.mxu0 %v1325
        %2719 = vmatmul.mubr.f32.gmra.mxu0 %v1324
        %v2720 = vpop.f32.mrf.mxu0
        %v2721 = vadd.f32 %v2336, %v2720
        %v2722 = vpop.f32.mrf.mxu0
        %2723 = vmatprep.mubr.f32.mxu0 %v1329
        %2724 = vmatmul.mubr.f32.gmra.mxu0 %v1328
        %v2725 = vpop.f32.mrf.mxu0
        %v2726 = vadd.f32 %v2341, %v2725
        %v2727 = vpop.f32.mrf.mxu0
        %2728 = vmatprep.mubr.f32.mxu0 %v1333
        %2729 = vmatmul.mubr.f32.gmra.mxu0 %v1332
        %v2730 = vpop.f32.mrf.mxu0
        %v2731 = vadd.f32 %v2346, %v2730
        %v2732 = vpop.f32.mrf.mxu0
        %2733 = vmatprep.mubr.f32.mxu0 %v1337
        %2734 = vmatmul.mubr.f32.gmra.mxu0 %v1336
        %v2735 = vpop.f32.mrf.mxu0
        %v2736 = vadd.f32 %v2351, %v2735
        %v2737 = vpop.f32.mrf.mxu0
        %2738 = vmatprep.mubr.f32.mxu0 %v1341
        %2739 = vmatmul.mubr.f32.gmra.mxu0 %v1340
        %v2740 = vpop.f32.mrf.mxu0
        %v2741 = vadd.f32 %v2356, %v2740
        %v2742 = vpop.f32.mrf.mxu0
        %2743 = vmatprep.mubr.f32.mxu0 %v1345
        %2744 = vmatmul.mubr.f32.gmra.mxu0 %v1344
        %v2745 = vpop.f32.mrf.mxu0
        %v2746 = vadd.f32 %v2361, %v2745
        %v2747 = vpop.f32.mrf.mxu0
        %2748 = vmatprep.mubr.f32.mxu0 %v1349
        %2749 = vmatmul.mubr.f32.gmra.mxu0 %v1348
        %v2750 = vpop.f32.mrf.mxu0
        %v2751 = vadd.f32 %v2366, %v2750
        %v2752 = vpop.f32.mrf.mxu0
        %2753 = vmatprep.mubr.f32.mxu0 %v1353
        %2754 = vmatmul.mubr.f32.gmra.mxu0 %v1352
        %v2755 = vpop.f32.mrf.mxu0
        %v2756 = vadd.f32 %v2371, %v2755
        %v2757 = vpop.f32.mrf.mxu0
        %2758 = vmatprep.mubr.f32.mxu0 %v1357
        %2759 = vmatmul.mubr.f32.gmra.mxu0 %v1356
        %v2760 = vpop.f32.mrf.mxu0
        %v2761 = vadd.f32 %v2376, %v2760
        %v2762 = vpop.f32.mrf.mxu0
        %2763 = vmatprep.mubr.f32.mxu0 %v1361
        %2764 = vmatmul.mubr.f32.gmra.mxu0 %v1360
        %v2765 = vpop.f32.mrf.mxu0
        %v2766 = vadd.f32 %v2381, %v2765
        %v2767 = vpop.f32.mrf.mxu0
        %2768 = vmatprep.mubr.f32.mxu0 %v1365
        %2769 = vmatmul.mubr.f32.gmra.mxu0 %v1364
        %v2770 = vpop.f32.mrf.mxu0
        %v2771 = vadd.f32 %v2386, %v2770
        %v2772 = vpop.f32.mrf.mxu0
        %2773 = vmatprep.mubr.f32.mxu0 %v1369
        %2774 = vmatmul.mubr.f32.gmra.mxu0 %v1368
        %v2775 = vpop.f32.mrf.mxu0
        %v2776 = vadd.f32 %v2391, %v2775
        %v2777 = vpop.f32.mrf.mxu0
        %2778 = vmatprep.mubr.f32.mxu0 %v1373
        %2779 = vmatmul.mubr.f32.gmra.mxu0 %v1372
        %v2780 = vpop.f32.mrf.mxu0
        %v2781 = vadd.f32 %v2396, %v2780
        %v2782 = vpop.f32.mrf.mxu0
        %2783 = vmatprep.mubr.f32.mxu0 %v1377
        %2784 = vmatmul.mubr.f32.gmra.mxu0 %v1376
        %v2785 = vpop.f32.mrf.mxu0
        %v2786 = vadd.f32 %v2401, %v2785
        %v2787 = vpop.f32.mrf.mxu0
        %2788 = vmatprep.mubr.f32.mxu0 %v1381
        %2789 = vmatmul.mubr.f32.gmra.mxu0 %v1380
        %v2790 = vpop.f32.mrf.mxu0
        %v2791 = vadd.f32 %v2406, %v2790
        %v2792 = vpop.f32.mrf.mxu0
        %2793 = vmatprep.mubr.f32.mxu0 %v1385
        %2794 = vmatmul.mubr.f32.gmra.mxu0 %v1384
        %v2795 = vpop.f32.mrf.mxu0
        %v2796 = vadd.f32 %v2411, %v2795
        %v2797 = vpop.f32.mrf.mxu0
        %2798 = vdwg.mxu0
        %2799 = vmatprep.subr.mxu0 0.0
        %2800 = vmatpush1.msra.mxu0 %v571
        %2801 = vmatprep.subr.mxu0 0.0
        %2802 = vmatpush1.msra.mxu0 %v568
        %2803 = vmatprep.subr.mxu0 0.0
        %2804 = vmatpush1.msra.mxu0 %v565
        %2805 = vmatprep.subr.mxu0 0.0
        %2806 = vmatpush1.msra.mxu0 %v562
        %2807 = vmatprep.subr.mxu0 0.0
        %2808 = vmatpush1.msra.mxu0 %v559
        %2809 = vmatprep.subr.mxu0 0.0
        %2810 = vmatpush1.msra.mxu0 %v556
        %2811 = vmatprep.subr.mxu0 0.0
        %2812 = vmatpush1.msra.mxu0 %v553
        %2813 = vmatprep.subr.mxu0 0.0
        %2814 = vmatpush1.msra.mxu0 %v550
        %2815 = vmatprep.subr.mxu0 0.0
        %2816 = vmatpush1.msra.mxu0 %v547
        %2817 = vmatprep.subr.mxu0 0.0
        %2818 = vmatpush1.msra.mxu0 %v544
        %2819 = vmatprep.subr.mxu0 0.0
        %2820 = vmatpush1.msra.mxu0 %v541
        %2821 = vmatprep.subr.mxu0 0.0
        %2822 = vmatpush1.msra.mxu0 %v538
        %2823 = vmatprep.subr.mxu0 0.0
        %2824 = vmatpush1.msra.mxu0 %v535
        %2825 = vmatprep.subr.mxu0 0.0
        %2826 = vmatpush1.msra.mxu0 %v532
        %2827 = vmatprep.subr.mxu0 0.0
        %2828 = vmatpush1.msra.mxu0 %v529
        %2829 = vmatprep.subr.mxu0 0.0
        %2830 = vmatpush1.msra.mxu0 %v526
        %2831 = vmatprep.subr.mxu0 0.0
        %2832 = vmatpush2.msra.mxu0 %v619
        %2833 = vmatprep.subr.mxu0 0.0
        %2834 = vmatpush2.msra.mxu0 %v616
        %2835 = vmatprep.subr.mxu0 0.0
        %2836 = vmatpush2.msra.mxu0 %v613
        %2837 = vmatprep.subr.mxu0 0.0
        %2838 = vmatpush2.msra.mxu0 %v610
        %2839 = vmatprep.subr.mxu0 0.0
        %2840 = vmatpush2.msra.mxu0 %v607
        %2841 = vmatprep.subr.mxu0 0.0
        %2842 = vmatpush2.msra.mxu0 %v604
        %2843 = vmatprep.subr.mxu0 0.0
        %2844 = vmatpush2.msra.mxu0 %v601
        %2845 = vmatprep.subr.mxu0 0.0
        %2846 = vmatpush2.msra.mxu0 %v598
        %2847 = vmatprep.subr.mxu0 0.0
        %2848 = vmatpush2.msra.mxu0 %v595
        %2849 = vmatprep.subr.mxu0 0.0
        %2850 = vmatpush2.msra.mxu0 %v592
        %2851 = vmatprep.subr.mxu0 0.0
        %2852 = vmatpush2.msra.mxu0 %v589
        %2853 = vmatprep.subr.mxu0 0.0
        %2854 = vmatpush2.msra.mxu0 %v586
        %2855 = vmatprep.subr.mxu0 0.0
        %2856 = vmatpush2.msra.mxu0 %v583
        %2857 = vmatprep.subr.mxu0 0.0
        %2858 = vmatpush2.msra.mxu0 %v580
        %2859 = vmatprep.subr.mxu0 0.0
        %2860 = vmatpush2.msra.mxu0 %v577
        %2861 = vmatprep.subr.mxu0 0.0
        %2862 = vmatpush2.msra.mxu0 %v574
        %2863 = vmatprep.mubr.f32.mxu0 %v1135
        %2864 = vmatmul.mubr.f32.gmra.mxu0 %v1134
        %v2865 = vpop.f32.mrf.mxu0
        %v2866 = vadd.f32 %v2481, %v2865
        %v2867 = vpop.f32.mrf.mxu0
        %2868 = vmatprep.mubr.f32.mxu0 %v1139
        %2869 = vmatmul.mubr.f32.gmra.mxu0 %v1138
        %v2870 = vpop.f32.mrf.mxu0
        %v2871 = vadd.f32 %v2486, %v2870
        %v2872 = vpop.f32.mrf.mxu0
        %2873 = vmatprep.mubr.f32.mxu0 %v1143
        %2874 = vmatmul.mubr.f32.gmra.mxu0 %v1142
        %v2875 = vpop.f32.mrf.mxu0
        %v2876 = vadd.f32 %v2491, %v2875
        %v2877 = vpop.f32.mrf.mxu0
        %2878 = vmatprep.mubr.f32.mxu0 %v1147
        %2879 = vmatmul.mubr.f32.gmra.mxu0 %v1146
        %v2880 = vpop.f32.mrf.mxu0
        %v2881 = vadd.f32 %v2496, %v2880
        %v2882 = vpop.f32.mrf.mxu0
        %2883 = vmatprep.mubr.f32.mxu0 %v1151
        %2884 = vmatmul.mubr.f32.gmra.mxu0 %v1150
        %v2885 = vpop.f32.mrf.mxu0
        %v2886 = vadd.f32 %v2501, %v2885
        %v2887 = vpop.f32.mrf.mxu0
        %2888 = vmatprep.mubr.f32.mxu0 %v1155
        %2889 = vmatmul.mubr.f32.gmra.mxu0 %v1154
        %v2890 = vpop.f32.mrf.mxu0
        %v2891 = vadd.f32 %v2506, %v2890
        %v2892 = vpop.f32.mrf.mxu0
        %2893 = vmatprep.mubr.f32.mxu0 %v1159
        %2894 = vmatmul.mubr.f32.gmra.mxu0 %v1158
        %v2895 = vpop.f32.mrf.mxu0
        %v2896 = vadd.f32 %v2511, %v2895
        %v2897 = vpop.f32.mrf.mxu0
        %2898 = vmatprep.mubr.f32.mxu0 %v1163
        %2899 = vmatmul.mubr.f32.gmra.mxu0 %v1162
        %v2900 = vpop.f32.mrf.mxu0
        %v2901 = vadd.f32 %v2516, %v2900
        %v2902 = vpop.f32.mrf.mxu0
        %2903 = vmatprep.mubr.f32.mxu0 %v1167
        %2904 = vmatmul.mubr.f32.gmra.mxu0 %v1166
        %v2905 = vpop.f32.mrf.mxu0
        %v2906 = vadd.f32 %v2521, %v2905
        %v2907 = vpop.f32.mrf.mxu0
        %2908 = vmatprep.mubr.f32.mxu0 %v1171
        %2909 = vmatmul.mubr.f32.gmra.mxu0 %v1170
        %v2910 = vpop.f32.mrf.mxu0
        %v2911 = vadd.f32 %v2526, %v2910
        %v2912 = vpop.f32.mrf.mxu0
        %2913 = vmatprep.mubr.f32.mxu0 %v1175
        %2914 = vmatmul.mubr.f32.gmra.mxu0 %v1174
        %v2915 = vpop.f32.mrf.mxu0
        %v2916 = vadd.f32 %v2531, %v2915
        %v2917 = vpop.f32.mrf.mxu0
        %2918 = vmatprep.mubr.f32.mxu0 %v1179
        %2919 = vmatmul.mubr.f32.gmra.mxu0 %v1178
        %v2920 = vpop.f32.mrf.mxu0
        %v2921 = vadd.f32 %v2536, %v2920
        %v2922 = vpop.f32.mrf.mxu0
        %2923 = vmatprep.mubr.f32.mxu0 %v1183
        %2924 = vmatmul.mubr.f32.gmra.mxu0 %v1182
        %v2925 = vpop.f32.mrf.mxu0
        %v2926 = vadd.f32 %v2541, %v2925
        %v2927 = vpop.f32.mrf.mxu0
        %2928 = vmatprep.mubr.f32.mxu0 %v1187
        %2929 = vmatmul.mubr.f32.gmra.mxu0 %v1186
        %v2930 = vpop.f32.mrf.mxu0
        %v2931 = vadd.f32 %v2546, %v2930
        %v2932 = vpop.f32.mrf.mxu0
        %2933 = vmatprep.mubr.f32.mxu0 %v1191
        %2934 = vmatmul.mubr.f32.gmra.mxu0 %v1190
        %v2935 = vpop.f32.mrf.mxu0
        %v2936 = vadd.f32 %v2551, %v2935
        %v2937 = vpop.f32.mrf.mxu0
        %2938 = vmatprep.mubr.f32.mxu0 %v1195
        %2939 = vmatmul.mubr.f32.gmra.mxu0 %v1194
        %v2940 = vpop.f32.mrf.mxu0
        %v2941 = vadd.f32 %v2556, %v2940
        %v2942 = vpop.f32.mrf.mxu0
        %2943 = vmatprep.mubr.f32.mxu0 %v1199
        %2944 = vmatmul.mubr.f32.gmra.mxu0 %v1198
        %v2945 = vpop.f32.mrf.mxu0
        %v2946 = vadd.f32 %v2561, %v2945
        %v2947 = vpop.f32.mrf.mxu0
        %2948 = vmatprep.mubr.f32.mxu0 %v1203
        %2949 = vmatmul.mubr.f32.gmra.mxu0 %v1202
        %v2950 = vpop.f32.mrf.mxu0
        %v2951 = vadd.f32 %v2566, %v2950
        %v2952 = vpop.f32.mrf.mxu0
        %2953 = vmatprep.mubr.f32.mxu0 %v1207
        %2954 = vmatmul.mubr.f32.gmra.mxu0 %v1206
        %v2955 = vpop.f32.mrf.mxu0
        %v2956 = vadd.f32 %v2571, %v2955
        %v2957 = vpop.f32.mrf.mxu0
        %2958 = vmatprep.mubr.f32.mxu0 %v1211
        %2959 = vmatmul.mubr.f32.gmra.mxu0 %v1210
        %v2960 = vpop.f32.mrf.mxu0
        %v2961 = vadd.f32 %v2576, %v2960
        %v2962 = vpop.f32.mrf.mxu0
        %2963 = vmatprep.mubr.f32.mxu0 %v1215
        %2964 = vmatmul.mubr.f32.gmra.mxu0 %v1214
        %v2965 = vpop.f32.mrf.mxu0
        %v2966 = vadd.f32 %v2581, %v2965
        %v2967 = vpop.f32.mrf.mxu0
        %2968 = vmatprep.mubr.f32.mxu0 %v1219
        %2969 = vmatmul.mubr.f32.gmra.mxu0 %v1218
        %v2970 = vpop.f32.mrf.mxu0
        %v2971 = vadd.f32 %v2586, %v2970
        %v2972 = vpop.f32.mrf.mxu0
        %2973 = vmatprep.mubr.f32.mxu0 %v1223
        %2974 = vmatmul.mubr.f32.gmra.mxu0 %v1222
        %v2975 = vpop.f32.mrf.mxu0
        %v2976 = vadd.f32 %v2591, %v2975
        %v2977 = vpop.f32.mrf.mxu0
        %2978 = vmatprep.mubr.f32.mxu0 %v1227
        %2979 = vmatmul.mubr.f32.gmra.mxu0 %v1226
        %v2980 = vpop.f32.mrf.mxu0
        %v2981 = vadd.f32 %v2596, %v2980
        %v2982 = vpop.f32.mrf.mxu0
        %2983 = vmatprep.mubr.f32.mxu0 %v1231
        %2984 = vmatmul.mubr.f32.gmra.mxu0 %v1230
        %v2985 = vpop.f32.mrf.mxu0
        %v2986 = vadd.f32 %v2601, %v2985
        %v2987 = vpop.f32.mrf.mxu0
        %2988 = vmatprep.mubr.f32.mxu0 %v1235
        %2989 = vmatmul.mubr.f32.gmra.mxu0 %v1234
        %v2990 = vpop.f32.mrf.mxu0
        %v2991 = vadd.f32 %v2606, %v2990
        %v2992 = vpop.f32.mrf.mxu0
        %2993 = vmatprep.mubr.f32.mxu0 %v1239
        %2994 = vmatmul.mubr.f32.gmra.mxu0 %v1238
        %v2995 = vpop.f32.mrf.mxu0
        %v2996 = vadd.f32 %v2611, %v2995
        %v2997 = vpop.f32.mrf.mxu0
        %2998 = vmatprep.mubr.f32.mxu0 %v1243
        %2999 = vmatmul.mubr.f32.gmra.mxu0 %v1242
        %v3000 = vpop.f32.mrf.mxu0
        %v3001 = vadd.f32 %v2616, %v3000
        %v3002 = vpop.f32.mrf.mxu0
        %3003 = vmatprep.mubr.f32.mxu0 %v1247
        %3004 = vmatmul.mubr.f32.gmra.mxu0 %v1246
        %v3005 = vpop.f32.mrf.mxu0
        %v3006 = vadd.f32 %v2621, %v3005
        %v3007 = vpop.f32.mrf.mxu0
        %3008 = vmatprep.mubr.f32.mxu0 %v1251
        %3009 = vmatmul.mubr.f32.gmra.mxu0 %v1250
        %v3010 = vpop.f32.mrf.mxu0
        %v3011 = vadd.f32 %v2626, %v3010
        %v3012 = vpop.f32.mrf.mxu0
        %3013 = vmatprep.mubr.f32.mxu0 %v1255
        %3014 = vmatmul.mubr.f32.gmra.mxu0 %v1254
        %v3015 = vpop.f32.mrf.mxu0
        %v3016 = vadd.f32 %v2631, %v3015
        %v3017 = vpop.f32.mrf.mxu0
        %3018 = vmatprep.mubr.f32.mxu0 %v1259
        %3019 = vmatmul.mubr.f32.gmra.mxu0 %v1258
        %v3020 = vpop.f32.mrf.mxu0
        %v3021 = vadd.f32 %v2636, %v3020
        %v3022 = vpop.f32.mrf.mxu0
        %3023 = vmatprep.mubr.f32.mxu0 %v1263
        %3024 = vmatmul.mubr.f32.gmra.mxu0 %v1262
        %v3025 = vpop.f32.mrf.mxu0
        %v3026 = vadd.f32 %v2641, %v3025
        %v3027 = vpop.f32.mrf.mxu0
        %3028 = vmatprep.mubr.f32.mxu0 %v1267
        %3029 = vmatmul.mubr.f32.gmra.mxu0 %v1266
        %v3030 = vpop.f32.mrf.mxu0
        %v3031 = vadd.f32 %v2646, %v3030
        %v3032 = vpop.f32.mrf.mxu0
        %3033 = vmatprep.mubr.f32.mxu0 %v1271
        %3034 = vmatmul.mubr.f32.gmra.mxu0 %v1270
        %v3035 = vpop.f32.mrf.mxu0
        %v3036 = vadd.f32 %v2651, %v3035
        %v3037 = vpop.f32.mrf.mxu0
        %3038 = vmatprep.mubr.f32.mxu0 %v1275
        %3039 = vmatmul.mubr.f32.gmra.mxu0 %v1274
        %v3040 = vpop.f32.mrf.mxu0
        %v3041 = vadd.f32 %v2656, %v3040
        %v3042 = vpop.f32.mrf.mxu0
        %3043 = vmatprep.mubr.f32.mxu0 %v1279
        %3044 = vmatmul.mubr.f32.gmra.mxu0 %v1278
        %v3045 = vpop.f32.mrf.mxu0
        %v3046 = vadd.f32 %v2661, %v3045
        %v3047 = vpop.f32.mrf.mxu0
        %3048 = vmatprep.mubr.f32.mxu0 %v1283
        %3049 = vmatmul.mubr.f32.gmra.mxu0 %v1282
        %v3050 = vpop.f32.mrf.mxu0
        %v3051 = vadd.f32 %v2666, %v3050
        %v3052 = vpop.f32.mrf.mxu0
        %3053 = vmatprep.mubr.f32.mxu0 %v1287
        %3054 = vmatmul.mubr.f32.gmra.mxu0 %v1286
        %v3055 = vpop.f32.mrf.mxu0
        %v3056 = vadd.f32 %v2671, %v3055
        %v3057 = vpop.f32.mrf.mxu0
        %3058 = vmatprep.mubr.f32.mxu0 %v1291
        %3059 = vmatmul.mubr.f32.gmra.mxu0 %v1290
        %v3060 = vpop.f32.mrf.mxu0
        %v3061 = vadd.f32 %v2676, %v3060
        %v3062 = vpop.f32.mrf.mxu0
        %3063 = vmatprep.mubr.f32.mxu0 %v1295
        %3064 = vmatmul.mubr.f32.gmra.mxu0 %v1294
        %v3065 = vpop.f32.mrf.mxu0
        %v3066 = vadd.f32 %v2681, %v3065
        %v3067 = vpop.f32.mrf.mxu0
        %3068 = vmatprep.mubr.f32.mxu0 %v1299
        %3069 = vmatmul.mubr.f32.gmra.mxu0 %v1298
        %v3070 = vpop.f32.mrf.mxu0
        %v3071 = vadd.f32 %v2686, %v3070
        %v3072 = vpop.f32.mrf.mxu0
        %3073 = vmatprep.mubr.f32.mxu0 %v1303
        %3074 = vmatmul.mubr.f32.gmra.mxu0 %v1302
        %v3075 = vpop.f32.mrf.mxu0
        %v3076 = vadd.f32 %v2691, %v3075
        %v3077 = vpop.f32.mrf.mxu0
        %3078 = vmatprep.mubr.f32.mxu0 %v1307
        %3079 = vmatmul.mubr.f32.gmra.mxu0 %v1306
        %v3080 = vpop.f32.mrf.mxu0
        %v3081 = vadd.f32 %v2696, %v3080
        %v3082 = vpop.f32.mrf.mxu0
        %3083 = vmatprep.mubr.f32.mxu0 %v1311
        %3084 = vmatmul.mubr.f32.gmra.mxu0 %v1310
        %v3085 = vpop.f32.mrf.mxu0
        %v3086 = vadd.f32 %v2701, %v3085
        %v3087 = vpop.f32.mrf.mxu0
        %3088 = vmatprep.mubr.f32.mxu0 %v1315
        %3089 = vmatmul.mubr.f32.gmra.mxu0 %v1314
        %v3090 = vpop.f32.mrf.mxu0
        %v3091 = vadd.f32 %v2706, %v3090
        %v3092 = vpop.f32.mrf.mxu0
        %3093 = vmatprep.mubr.f32.mxu0 %v1319
        %3094 = vmatmul.mubr.f32.gmra.mxu0 %v1318
        %v3095 = vpop.f32.mrf.mxu0
        %v3096 = vadd.f32 %v2711, %v3095
        %v3097 = vpop.f32.mrf.mxu0
        %3098 = vmatprep.mubr.f32.mxu0 %v1323
        %3099 = vmatmul.mubr.f32.gmra.mxu0 %v1322
        %v3100 = vpop.f32.mrf.mxu0
        %v3101 = vadd.f32 %v2716, %v3100
        %v3102 = vpop.f32.mrf.mxu0
        %3103 = vmatprep.mubr.f32.mxu0 %v1327
        %3104 = vmatmul.mubr.f32.gmra.mxu0 %v1326
        %v3105 = vpop.f32.mrf.mxu0
        %v3106 = vadd.f32 %v2721, %v3105
        %v3107 = vpop.f32.mrf.mxu0
        %3108 = vmatprep.mubr.f32.mxu0 %v1331
        %3109 = vmatmul.mubr.f32.gmra.mxu0 %v1330
        %v3110 = vpop.f32.mrf.mxu0
        %v3111 = vadd.f32 %v2726, %v3110
        %v3112 = vpop.f32.mrf.mxu0
        %3113 = vmatprep.mubr.f32.mxu0 %v1335
        %3114 = vmatmul.mubr.f32.gmra.mxu0 %v1334
        %v3115 = vpop.f32.mrf.mxu0
        %v3116 = vadd.f32 %v2731, %v3115
        %v3117 = vpop.f32.mrf.mxu0
        %3118 = vmatprep.mubr.f32.mxu0 %v1339
        %3119 = vmatmul.mubr.f32.gmra.mxu0 %v1338
        %v3120 = vpop.f32.mrf.mxu0
        %v3121 = vadd.f32 %v2736, %v3120
        %v3122 = vpop.f32.mrf.mxu0
        %3123 = vmatprep.mubr.f32.mxu0 %v1343
        %3124 = vmatmul.mubr.f32.gmra.mxu0 %v1342
        %v3125 = vpop.f32.mrf.mxu0
        %v3126 = vadd.f32 %v2741, %v3125
        %v3127 = vpop.f32.mrf.mxu0
        %3128 = vmatprep.mubr.f32.mxu0 %v1347
        %3129 = vmatmul.mubr.f32.gmra.mxu0 %v1346
        %v3130 = vpop.f32.mrf.mxu0
        %v3131 = vadd.f32 %v2746, %v3130
        %v3132 = vpop.f32.mrf.mxu0
        %3133 = vmatprep.mubr.f32.mxu0 %v1351
        %3134 = vmatmul.mubr.f32.gmra.mxu0 %v1350
        %v3135 = vpop.f32.mrf.mxu0
        %v3136 = vadd.f32 %v2751, %v3135
        %v3137 = vpop.f32.mrf.mxu0
        %3138 = vmatprep.mubr.f32.mxu0 %v1355
        %3139 = vmatmul.mubr.f32.gmra.mxu0 %v1354
        %v3140 = vpop.f32.mrf.mxu0
        %v3141 = vadd.f32 %v2756, %v3140
        %v3142 = vpop.f32.mrf.mxu0
        %3143 = vmatprep.mubr.f32.mxu0 %v1359
        %3144 = vmatmul.mubr.f32.gmra.mxu0 %v1358
        %v3145 = vpop.f32.mrf.mxu0
        %v3146 = vadd.f32 %v2761, %v3145
        %v3147 = vpop.f32.mrf.mxu0
        %3148 = vmatprep.mubr.f32.mxu0 %v1363
        %3149 = vmatmul.mubr.f32.gmra.mxu0 %v1362
        %v3150 = vpop.f32.mrf.mxu0
        %v3151 = vadd.f32 %v2766, %v3150
        %v3152 = vpop.f32.mrf.mxu0
        %3153 = vmatprep.mubr.f32.mxu0 %v1367
        %3154 = vmatmul.mubr.f32.gmra.mxu0 %v1366
        %v3155 = vpop.f32.mrf.mxu0
        %v3156 = vadd.f32 %v2771, %v3155
        %v3157 = vpop.f32.mrf.mxu0
        %3158 = vmatprep.mubr.f32.mxu0 %v1371
        %3159 = vmatmul.mubr.f32.gmra.mxu0 %v1370
        %v3160 = vpop.f32.mrf.mxu0
        %v3161 = vadd.f32 %v2776, %v3160
        %v3162 = vpop.f32.mrf.mxu0
        %3163 = vmatprep.mubr.f32.mxu0 %v1375
        %3164 = vmatmul.mubr.f32.gmra.mxu0 %v1374
        %v3165 = vpop.f32.mrf.mxu0
        %v3166 = vadd.f32 %v2781, %v3165
        %v3167 = vpop.f32.mrf.mxu0
        %3168 = vmatprep.mubr.f32.mxu0 %v1379
        %3169 = vmatmul.mubr.f32.gmra.mxu0 %v1378
        %v3170 = vpop.f32.mrf.mxu0
        %v3171 = vadd.f32 %v2786, %v3170
        %v3172 = vpop.f32.mrf.mxu0
        %3173 = vmatprep.mubr.f32.mxu0 %v1383
        %3174 = vmatmul.mubr.f32.gmra.mxu0 %v1382
        %v3175 = vpop.f32.mrf.mxu0
        %v3176 = vadd.f32 %v2791, %v3175
        %v3177 = vpop.f32.mrf.mxu0
        %3178 = vmatprep.mubr.f32.mxu0 %v1387
        %3179 = vmatmul.mubr.f32.gmra.mxu0 %v1386
        %v3180 = vpop.f32.mrf.mxu0
        %v3181 = vadd.f32 %v2796, %v3180
        %v3182 = vpop.f32.mrf.mxu0
        %3183 = vdwg.mxu0
        %v3184 = vld [vmem:[#allocation5 + $0x40] sm:$0xff]
        %v3185 = vld [vmem:[#allocation5 + $0x48] sm:$0xff]
        %v3186 = vld [vmem:[#allocation5 + $0x50] sm:$0xff]
        %v3187 = vld [vmem:[#allocation5 + $0x58] sm:$0xff]
        %v3188 = vld [vmem:[#allocation5 + $0xa0] sm:$0xff]
        %v3189 = vld [vmem:[#allocation5 + $0xa8] sm:$0xff]
        %v3190 = vld [vmem:[#allocation5 + $0xb0] sm:$0xff]
        %v3191 = vld [vmem:[#allocation5 + $0xb8] sm:$0xff]
        %v3192 = vld [vmem:[#allocation5 + $0x100] sm:$0xff]
        %v3193 = vld [vmem:[#allocation5 + $0x108] sm:$0xff]
        %v3194 = vld [vmem:[#allocation5 + $0x110] sm:$0xff]
        %v3195 = vld [vmem:[#allocation5 + $0x118] sm:$0xff]
        %v3196 = vld [vmem:[#allocation5 + $0x160] sm:$0xff]
        %v3197 = vld [vmem:[#allocation5 + $0x168] sm:$0xff]
        %v3198 = vld [vmem:[#allocation5 + $0x170] sm:$0xff]
        %v3199 = vld [vmem:[#allocation5 + $0x178] sm:$0xff]
        %v3200 = vld [vmem:[#allocation5 + $0x1c0] sm:$0xff]
        %v3201 = vld [vmem:[#allocation5 + $0x1c8] sm:$0xff]
        %v3202 = vld [vmem:[#allocation5 + $0x1d0] sm:$0xff]
        %v3203 = vld [vmem:[#allocation5 + $0x1d8] sm:$0xff]
        %v3204 = vld [vmem:[#allocation5 + $0x220] sm:$0xff]
        %v3205 = vld [vmem:[#allocation5 + $0x228] sm:$0xff]
        %v3206 = vld [vmem:[#allocation5 + $0x230] sm:$0xff]
        %v3207 = vld [vmem:[#allocation5 + $0x238] sm:$0xff]
        %v3208 = vld [vmem:[#allocation5 + $0x280] sm:$0xff]
        %v3209 = vld [vmem:[#allocation5 + $0x288] sm:$0xff]
        %v3210 = vld [vmem:[#allocation5 + $0x290] sm:$0xff]
        %v3211 = vld [vmem:[#allocation5 + $0x298] sm:$0xff]
        %v3212 = vld [vmem:[#allocation5 + $0x2e0] sm:$0xff]
        %v3213 = vld [vmem:[#allocation5 + $0x2e8] sm:$0xff]
        %v3214 = vld [vmem:[#allocation5 + $0x2f0] sm:$0xff]
        %v3215 = vld [vmem:[#allocation5 + $0x2f8] sm:$0xff]
        %v3216 = vld [vmem:[#allocation5 + $0x340] sm:$0xff]
        %v3217 = vld [vmem:[#allocation5 + $0x348] sm:$0xff]
        %v3218 = vld [vmem:[#allocation5 + $0x350] sm:$0xff]
        %v3219 = vld [vmem:[#allocation5 + $0x358] sm:$0xff]
        %v3220 = vld [vmem:[#allocation5 + $0x3a0] sm:$0xff]
        %v3221 = vld [vmem:[#allocation5 + $0x3a8] sm:$0xff]
        %v3222 = vld [vmem:[#allocation5 + $0x3b0] sm:$0xff]
        %v3223 = vld [vmem:[#allocation5 + $0x3b8] sm:$0xff]
        %v3224 = vld [vmem:[#allocation5 + $0x400] sm:$0xff]
        %v3225 = vld [vmem:[#allocation5 + $0x408] sm:$0xff]
        %v3226 = vld [vmem:[#allocation5 + $0x410] sm:$0xff]
        %v3227 = vld [vmem:[#allocation5 + $0x418] sm:$0xff]
        %v3228 = vld [vmem:[#allocation5 + $0x460] sm:$0xff]
        %v3229 = vld [vmem:[#allocation5 + $0x468] sm:$0xff]
        %v3230 = vld [vmem:[#allocation5 + $0x470] sm:$0xff]
        %v3231 = vld [vmem:[#allocation5 + $0x478] sm:$0xff]
        %v3232 = vld [vmem:[#allocation5 + $0x4c0] sm:$0xff]
        %v3233 = vld [vmem:[#allocation5 + $0x4c8] sm:$0xff]
        %v3234 = vld [vmem:[#allocation5 + $0x4d0] sm:$0xff]
        %v3235 = vld [vmem:[#allocation5 + $0x4d8] sm:$0xff]
        %v3236 = vld [vmem:[#allocation5 + $0x520] sm:$0xff]
        %v3237 = vld [vmem:[#allocation5 + $0x528] sm:$0xff]
        %v3238 = vld [vmem:[#allocation5 + $0x530] sm:$0xff]
        %v3239 = vld [vmem:[#allocation5 + $0x538] sm:$0xff]
        %v3240 = vld [vmem:[#allocation5 + $0x580] sm:$0xff]
        %v3241 = vld [vmem:[#allocation5 + $0x588] sm:$0xff]
        %v3242 = vld [vmem:[#allocation5 + $0x590] sm:$0xff]
        %v3243 = vld [vmem:[#allocation5 + $0x598] sm:$0xff]
        %v3244 = vld [vmem:[#allocation5 + $0x5e0] sm:$0xff]
        %v3245 = vld [vmem:[#allocation5 + $0x5e8] sm:$0xff]
        %v3246 = vld [vmem:[#allocation5 + $0x5f0] sm:$0xff]
        %v3247 = vld [vmem:[#allocation5 + $0x5f8] sm:$0xff]
        %v3248 = vld [vmem:[#allocation5 + $0x640] sm:$0xff]
        %v3249 = vld [vmem:[#allocation5 + $0x648] sm:$0xff]
        %v3250 = vld [vmem:[#allocation5 + $0x650] sm:$0xff]
        %v3251 = vld [vmem:[#allocation5 + $0x658] sm:$0xff]
        %v3252 = vld [vmem:[#allocation5 + $0x6a0] sm:$0xff]
        %v3253 = vld [vmem:[#allocation5 + $0x6a8] sm:$0xff]
        %v3254 = vld [vmem:[#allocation5 + $0x6b0] sm:$0xff]
        %v3255 = vld [vmem:[#allocation5 + $0x6b8] sm:$0xff]
        %v3256 = vld [vmem:[#allocation5 + $0x700] sm:$0xff]
        %v3257 = vld [vmem:[#allocation5 + $0x708] sm:$0xff]
        %v3258 = vld [vmem:[#allocation5 + $0x710] sm:$0xff]
        %v3259 = vld [vmem:[#allocation5 + $0x718] sm:$0xff]
        %v3260 = vld [vmem:[#allocation5 + $0x760] sm:$0xff]
        %v3261 = vld [vmem:[#allocation5 + $0x768] sm:$0xff]
        %v3262 = vld [vmem:[#allocation5 + $0x770] sm:$0xff]
        %v3263 = vld [vmem:[#allocation5 + $0x778] sm:$0xff]
        %v3264 = vld [vmem:[#allocation5 + $0x7c0] sm:$0xff]
        %v3265 = vld [vmem:[#allocation5 + $0x7c8] sm:$0xff]
        %v3266 = vld [vmem:[#allocation5 + $0x7d0] sm:$0xff]
        %v3267 = vld [vmem:[#allocation5 + $0x7d8] sm:$0xff]
        %v3268 = vld [vmem:[#allocation5 + $0x820] sm:$0xff]
        %v3269 = vld [vmem:[#allocation5 + $0x828] sm:$0xff]
        %v3270 = vld [vmem:[#allocation5 + $0x830] sm:$0xff]
        %v3271 = vld [vmem:[#allocation5 + $0x838] sm:$0xff]
        %v3272 = vld [vmem:[#allocation5 + $0x880] sm:$0xff]
        %v3273 = vld [vmem:[#allocation5 + $0x888] sm:$0xff]
        %v3274 = vld [vmem:[#allocation5 + $0x890] sm:$0xff]
        %v3275 = vld [vmem:[#allocation5 + $0x898] sm:$0xff]
        %v3276 = vld [vmem:[#allocation5 + $0x8e0] sm:$0xff]
        %v3277 = vld [vmem:[#allocation5 + $0x8e8] sm:$0xff]
        %v3278 = vld [vmem:[#allocation5 + $0x8f0] sm:$0xff]
        %v3279 = vld [vmem:[#allocation5 + $0x8f8] sm:$0xff]
        %v3280 = vld [vmem:[#allocation5 + $0x940] sm:$0xff]
        %v3281 = vld [vmem:[#allocation5 + $0x948] sm:$0xff]
        %v3282 = vld [vmem:[#allocation5 + $0x950] sm:$0xff]
        %v3283 = vld [vmem:[#allocation5 + $0x958] sm:$0xff]
        %v3284 = vld [vmem:[#allocation5 + $0x9a0] sm:$0xff]
        %v3285 = vld [vmem:[#allocation5 + $0x9a8] sm:$0xff]
        %v3286 = vld [vmem:[#allocation5 + $0x9b0] sm:$0xff]
        %v3287 = vld [vmem:[#allocation5 + $0x9b8] sm:$0xff]
        %v3288 = vld [vmem:[#allocation5 + $0xa00] sm:$0xff]
        %v3289 = vld [vmem:[#allocation5 + $0xa08] sm:$0xff]
        %v3290 = vld [vmem:[#allocation5 + $0xa10] sm:$0xff]
        %v3291 = vld [vmem:[#allocation5 + $0xa18] sm:$0xff]
        %v3292 = vld [vmem:[#allocation5 + $0xa60] sm:$0xff]
        %v3293 = vld [vmem:[#allocation5 + $0xa68] sm:$0xff]
        %v3294 = vld [vmem:[#allocation5 + $0xa70] sm:$0xff]
        %v3295 = vld [vmem:[#allocation5 + $0xa78] sm:$0xff]
        %v3296 = vld [vmem:[#allocation5 + $0xac0] sm:$0xff]
        %v3297 = vld [vmem:[#allocation5 + $0xac8] sm:$0xff]
        %v3298 = vld [vmem:[#allocation5 + $0xad0] sm:$0xff]
        %v3299 = vld [vmem:[#allocation5 + $0xad8] sm:$0xff]
        %v3300 = vld [vmem:[#allocation5 + $0xb20] sm:$0xff]
        %v3301 = vld [vmem:[#allocation5 + $0xb28] sm:$0xff]
        %v3302 = vld [vmem:[#allocation5 + $0xb30] sm:$0xff]
        %v3303 = vld [vmem:[#allocation5 + $0xb38] sm:$0xff]
        %v3304 = vld [vmem:[#allocation5 + $0xb80] sm:$0xff]
        %v3305 = vld [vmem:[#allocation5 + $0xb88] sm:$0xff]
        %v3306 = vld [vmem:[#allocation5 + $0xb90] sm:$0xff]
        %v3307 = vld [vmem:[#allocation5 + $0xb98] sm:$0xff]
        %v3308 = vld [vmem:[#allocation5 + $0xbe0] sm:$0xff]
        %v3309 = vld [vmem:[#allocation5 + $0xbe8] sm:$0xff]
        %v3310 = vld [vmem:[#allocation5 + $0xbf0] sm:$0xff]
        %v3311 = vld [vmem:[#allocation5 + $0xbf8] sm:$0xff]
        %v3312 = vld [vmem:[#allocation5 + $0xc40] sm:$0xff]
        %v3313 = vld [vmem:[#allocation5 + $0xc48] sm:$0xff]
        %v3314 = vld [vmem:[#allocation5 + $0xc50] sm:$0xff]
        %v3315 = vld [vmem:[#allocation5 + $0xc58] sm:$0xff]
        %v3316 = vld [vmem:[#allocation5 + $0xca0] sm:$0xff]
        %v3317 = vld [vmem:[#allocation5 + $0xca8] sm:$0xff]
        %v3318 = vld [vmem:[#allocation5 + $0xcb0] sm:$0xff]
        %v3319 = vld [vmem:[#allocation5 + $0xcb8] sm:$0xff]
        %v3320 = vld [vmem:[#allocation5 + $0xd00] sm:$0xff]
        %v3321 = vld [vmem:[#allocation5 + $0xd08] sm:$0xff]
        %v3322 = vld [vmem:[#allocation5 + $0xd10] sm:$0xff]
        %v3323 = vld [vmem:[#allocation5 + $0xd18] sm:$0xff]
        %v3324 = vld [vmem:[#allocation5 + $0xd60] sm:$0xff]
        %v3325 = vld [vmem:[#allocation5 + $0xd68] sm:$0xff]
        %v3326 = vld [vmem:[#allocation5 + $0xd70] sm:$0xff]
        %v3327 = vld [vmem:[#allocation5 + $0xd78] sm:$0xff]
        %v3328 = vld [vmem:[#allocation5 + $0xdc0] sm:$0xff]
        %v3329 = vld [vmem:[#allocation5 + $0xdc8] sm:$0xff]
        %v3330 = vld [vmem:[#allocation5 + $0xdd0] sm:$0xff]
        %v3331 = vld [vmem:[#allocation5 + $0xdd8] sm:$0xff]
        %v3332 = vld [vmem:[#allocation5 + $0xe20] sm:$0xff]
        %v3333 = vld [vmem:[#allocation5 + $0xe28] sm:$0xff]
        %v3334 = vld [vmem:[#allocation5 + $0xe30] sm:$0xff]
        %v3335 = vld [vmem:[#allocation5 + $0xe38] sm:$0xff]
        %v3336 = vld [vmem:[#allocation5 + $0xe80] sm:$0xff]
        %v3337 = vld [vmem:[#allocation5 + $0xe88] sm:$0xff]
        %v3338 = vld [vmem:[#allocation5 + $0xe90] sm:$0xff]
        %v3339 = vld [vmem:[#allocation5 + $0xe98] sm:$0xff]
        %v3340 = vld [vmem:[#allocation5 + $0xee0] sm:$0xff]
        %v3341 = vld [vmem:[#allocation5 + $0xee8] sm:$0xff]
        %v3342 = vld [vmem:[#allocation5 + $0xef0] sm:$0xff]
        %v3343 = vld [vmem:[#allocation5 + $0xef8] sm:$0xff]
        %v3344 = vld [vmem:[#allocation5 + $0xf40] sm:$0xff]
        %v3345 = vld [vmem:[#allocation5 + $0xf48] sm:$0xff]
        %v3346 = vld [vmem:[#allocation5 + $0xf50] sm:$0xff]
        %v3347 = vld [vmem:[#allocation5 + $0xf58] sm:$0xff]
        %v3348 = vld [vmem:[#allocation5 + $0xfa0] sm:$0xff]
        %v3349 = vld [vmem:[#allocation5 + $0xfa8] sm:$0xff]
        %v3350 = vld [vmem:[#allocation5 + $0xfb0] sm:$0xff]
        %v3351 = vld [vmem:[#allocation5 + $0xfb8] sm:$0xff]
        %v3352 = vld [vmem:[#allocation5 + $0x1000] sm:$0xff]
        %v3353 = vld [vmem:[#allocation5 + $0x1008] sm:$0xff]
        %v3354 = vld [vmem:[#allocation5 + $0x1010] sm:$0xff]
        %v3355 = vld [vmem:[#allocation5 + $0x1018] sm:$0xff]
        %v3356 = vld [vmem:[#allocation5 + $0x1060] sm:$0xff]
        %v3357 = vld [vmem:[#allocation5 + $0x1068] sm:$0xff]
        %v3358 = vld [vmem:[#allocation5 + $0x1070] sm:$0xff]
        %v3359 = vld [vmem:[#allocation5 + $0x1078] sm:$0xff]
        %v3360 = vld [vmem:[#allocation5 + $0x10c0] sm:$0xff]
        %v3361 = vld [vmem:[#allocation5 + $0x10c8] sm:$0xff]
        %v3362 = vld [vmem:[#allocation5 + $0x10d0] sm:$0xff]
        %v3363 = vld [vmem:[#allocation5 + $0x10d8] sm:$0xff]
        %v3364 = vld [vmem:[#allocation5 + $0x1120] sm:$0xff]
        %v3365 = vld [vmem:[#allocation5 + $0x1128] sm:$0xff]
        %v3366 = vld [vmem:[#allocation5 + $0x1130] sm:$0xff]
        %v3367 = vld [vmem:[#allocation5 + $0x1138] sm:$0xff]
        %v3368 = vld [vmem:[#allocation5 + $0x1180] sm:$0xff]
        %v3369 = vld [vmem:[#allocation5 + $0x1188] sm:$0xff]
        %v3370 = vld [vmem:[#allocation5 + $0x1190] sm:$0xff]
        %v3371 = vld [vmem:[#allocation5 + $0x1198] sm:$0xff]
        %v3372 = vld [vmem:[#allocation5 + $0x11e0] sm:$0xff]
        %v3373 = vld [vmem:[#allocation5 + $0x11e8] sm:$0xff]
        %v3374 = vld [vmem:[#allocation5 + $0x11f0] sm:$0xff]
        %v3375 = vld [vmem:[#allocation5 + $0x11f8] sm:$0xff]
        %v3376 = vld [vmem:[#allocation5 + $0x1240] sm:$0xff]
        %v3377 = vld [vmem:[#allocation5 + $0x1248] sm:$0xff]
        %v3378 = vld [vmem:[#allocation5 + $0x1250] sm:$0xff]
        %v3379 = vld [vmem:[#allocation5 + $0x1258] sm:$0xff]
        %v3380 = vld [vmem:[#allocation5 + $0x12a0] sm:$0xff]
        %v3381 = vld [vmem:[#allocation5 + $0x12a8] sm:$0xff]
        %v3382 = vld [vmem:[#allocation5 + $0x12b0] sm:$0xff]
        %v3383 = vld [vmem:[#allocation5 + $0x12b8] sm:$0xff]
        %v3384 = vld [vmem:[#allocation5 + $0x1300] sm:$0xff]
        %v3385 = vld [vmem:[#allocation5 + $0x1308] sm:$0xff]
        %v3386 = vld [vmem:[#allocation5 + $0x1310] sm:$0xff]
        %v3387 = vld [vmem:[#allocation5 + $0x1318] sm:$0xff]
        %v3388 = vld [vmem:[#allocation5 + $0x1360] sm:$0xff]
        %v3389 = vld [vmem:[#allocation5 + $0x1368] sm:$0xff]
        %v3390 = vld [vmem:[#allocation5 + $0x1370] sm:$0xff]
        %v3391 = vld [vmem:[#allocation5 + $0x1378] sm:$0xff]
        %v3392 = vld [vmem:[#allocation5 + $0x13c0] sm:$0xff]
        %v3393 = vld [vmem:[#allocation5 + $0x13c8] sm:$0xff]
        %v3394 = vld [vmem:[#allocation5 + $0x13d0] sm:$0xff]
        %v3395 = vld [vmem:[#allocation5 + $0x13d8] sm:$0xff]
        %v3396 = vld [vmem:[#allocation5 + $0x1420] sm:$0xff]
        %v3397 = vld [vmem:[#allocation5 + $0x1428] sm:$0xff]
        %v3398 = vld [vmem:[#allocation5 + $0x1430] sm:$0xff]
        %v3399 = vld [vmem:[#allocation5 + $0x1438] sm:$0xff]
        %v3400 = vld [vmem:[#allocation5 + $0x1480] sm:$0xff]
        %v3401 = vld [vmem:[#allocation5 + $0x1488] sm:$0xff]
        %v3402 = vld [vmem:[#allocation5 + $0x1490] sm:$0xff]
        %v3403 = vld [vmem:[#allocation5 + $0x1498] sm:$0xff]
        %v3404 = vld [vmem:[#allocation5 + $0x14e0] sm:$0xff]
        %v3405 = vld [vmem:[#allocation5 + $0x14e8] sm:$0xff]
        %v3406 = vld [vmem:[#allocation5 + $0x14f0] sm:$0xff]
        %v3407 = vld [vmem:[#allocation5 + $0x14f8] sm:$0xff]
        %v3408 = vld [vmem:[#allocation5 + $0x1540] sm:$0xff]
        %v3409 = vld [vmem:[#allocation5 + $0x1548] sm:$0xff]
        %v3410 = vld [vmem:[#allocation5 + $0x1550] sm:$0xff]
        %v3411 = vld [vmem:[#allocation5 + $0x1558] sm:$0xff]
        %v3412 = vld [vmem:[#allocation5 + $0x15a0] sm:$0xff]
        %v3413 = vld [vmem:[#allocation5 + $0x15a8] sm:$0xff]
        %v3414 = vld [vmem:[#allocation5 + $0x15b0] sm:$0xff]
        %v3415 = vld [vmem:[#allocation5 + $0x15b8] sm:$0xff]
        %v3416 = vld [vmem:[#allocation5 + $0x1600] sm:$0xff]
        %v3417 = vld [vmem:[#allocation5 + $0x1608] sm:$0xff]
        %v3418 = vld [vmem:[#allocation5 + $0x1610] sm:$0xff]
        %v3419 = vld [vmem:[#allocation5 + $0x1618] sm:$0xff]
        %v3420 = vld [vmem:[#allocation5 + $0x1660] sm:$0xff]
        %v3421 = vld [vmem:[#allocation5 + $0x1668] sm:$0xff]
        %v3422 = vld [vmem:[#allocation5 + $0x1670] sm:$0xff]
        %v3423 = vld [vmem:[#allocation5 + $0x1678] sm:$0xff]
        %v3424 = vld [vmem:[#allocation5 + $0x16c0] sm:$0xff]
        %v3425 = vld [vmem:[#allocation5 + $0x16c8] sm:$0xff]
        %v3426 = vld [vmem:[#allocation5 + $0x16d0] sm:$0xff]
        %v3427 = vld [vmem:[#allocation5 + $0x16d8] sm:$0xff]
        %v3428 = vld [vmem:[#allocation5 + $0x1720] sm:$0xff]
        %v3429 = vld [vmem:[#allocation5 + $0x1728] sm:$0xff]
        %v3430 = vld [vmem:[#allocation5 + $0x1730] sm:$0xff]
        %v3431 = vld [vmem:[#allocation5 + $0x1738] sm:$0xff]
        %v3432 = vld [vmem:[#allocation5 + $0x1780] sm:$0xff]
        %v3433 = vld [vmem:[#allocation5 + $0x1788] sm:$0xff]
        %v3434 = vld [vmem:[#allocation5 + $0x1790] sm:$0xff]
        %v3435 = vld [vmem:[#allocation5 + $0x1798] sm:$0xff]
        %v3436 = vld [vmem:[#allocation5 + $0x17e0] sm:$0xff]
        %v3437 = vld [vmem:[#allocation5 + $0x17e8] sm:$0xff]
        %v3438 = vld [vmem:[#allocation5 + $0x17f0] sm:$0xff]
        %v3439 = vld [vmem:[#allocation5 + $0x17f8] sm:$0xff]
        %3440 = vmatprep.subr.mxu0 0.0
        %3441 = vmatpush1.msra.mxu0 %v987
        %3442 = vmatprep.subr.mxu0 0.0
        %3443 = vmatpush1.msra.mxu0 %v984
        %3444 = vmatprep.subr.mxu0 0.0
        %3445 = vmatpush1.msra.mxu0 %v981
        %3446 = vmatprep.subr.mxu0 0.0
        %3447 = vmatpush1.msra.mxu0 %v978
        %3448 = vmatprep.subr.mxu0 0.0
        %3449 = vmatpush1.msra.mxu0 %v975
        %3450 = vmatprep.subr.mxu0 0.0
        %3451 = vmatpush1.msra.mxu0 %v972
        %3452 = vmatprep.subr.mxu0 0.0
        %3453 = vmatpush1.msra.mxu0 %v969
        %3454 = vmatprep.subr.mxu0 0.0
        %3455 = vmatpush1.msra.mxu0 %v966
        %3456 = vmatprep.subr.mxu0 0.0
        %3457 = vmatpush1.msra.mxu0 %v963
        %3458 = vmatprep.subr.mxu0 0.0
        %3459 = vmatpush1.msra.mxu0 %v960
        %3460 = vmatprep.subr.mxu0 0.0
        %3461 = vmatpush1.msra.mxu0 %v957
        %3462 = vmatprep.subr.mxu0 0.0
        %3463 = vmatpush1.msra.mxu0 %v954
        %3464 = vmatprep.subr.mxu0 0.0
        %3465 = vmatpush1.msra.mxu0 %v951
        %3466 = vmatprep.subr.mxu0 0.0
        %3467 = vmatpush1.msra.mxu0 %v948
        %3468 = vmatprep.subr.mxu0 0.0
        %3469 = vmatpush1.msra.mxu0 %v945
        %3470 = vmatprep.subr.mxu0 0.0
        %3471 = vmatpush1.msra.mxu0 %v942
        %3472 = vmatprep.subr.mxu0 0.0
        %3473 = vmatpush2.msra.mxu0 %v1035
        %3474 = vmatprep.subr.mxu0 0.0
        %3475 = vmatpush2.msra.mxu0 %v1032
        %3476 = vmatprep.subr.mxu0 0.0
        %3477 = vmatpush2.msra.mxu0 %v1029
        %3478 = vmatprep.subr.mxu0 0.0
        %3479 = vmatpush2.msra.mxu0 %v1026
        %3480 = vmatprep.subr.mxu0 0.0
        %3481 = vmatpush2.msra.mxu0 %v1023
        %3482 = vmatprep.subr.mxu0 0.0
        %3483 = vmatpush2.msra.mxu0 %v1020
        %3484 = vmatprep.subr.mxu0 0.0
        %3485 = vmatpush2.msra.mxu0 %v1017
        %3486 = vmatprep.subr.mxu0 0.0
        %3487 = vmatpush2.msra.mxu0 %v1014
        %3488 = vmatprep.subr.mxu0 0.0
        %3489 = vmatpush2.msra.mxu0 %v1011
        %3490 = vmatprep.subr.mxu0 0.0
        %3491 = vmatpush2.msra.mxu0 %v1008
        %3492 = vmatprep.subr.mxu0 0.0
        %3493 = vmatpush2.msra.mxu0 %v1005
        %3494 = vmatprep.subr.mxu0 0.0
        %3495 = vmatpush2.msra.mxu0 %v1002
        %3496 = vmatprep.subr.mxu0 0.0
        %3497 = vmatpush2.msra.mxu0 %v999
        %3498 = vmatprep.subr.mxu0 0.0
        %3499 = vmatpush2.msra.mxu0 %v996
        %3500 = vmatprep.subr.mxu0 0.0
        %3501 = vmatpush2.msra.mxu0 %v993
        %3502 = vmatprep.subr.mxu0 0.0
        %3503 = vmatpush2.msra.mxu0 %v990
        %3504 = vmatprep.mubr.f32.mxu0 %v3185
        %3505 = vmatmul.mubr.f32.gmra.mxu0 %v3184
        %v3506 = vpop.f32.mrf.mxu0
        %v3507 = vadd.f32 0.0, %v3506
        %v3508 = vpop.f32.mrf.mxu0
        %3509 = vmatprep.mubr.f32.mxu0 %v3189
        %3510 = vmatmul.mubr.f32.gmra.mxu0 %v3188
        %v3511 = vpop.f32.mrf.mxu0
        %v3512 = vadd.f32 0.0, %v3511
        %v3513 = vpop.f32.mrf.mxu0
        %3514 = vmatprep.mubr.f32.mxu0 %v3193
        %3515 = vmatmul.mubr.f32.gmra.mxu0 %v3192
        %v3516 = vpop.f32.mrf.mxu0
        %v3517 = vadd.f32 0.0, %v3516
        %v3518 = vpop.f32.mrf.mxu0
        %3519 = vmatprep.mubr.f32.mxu0 %v3197
        %3520 = vmatmul.mubr.f32.gmra.mxu0 %v3196
        %v3521 = vpop.f32.mrf.mxu0
        %v3522 = vadd.f32 0.0, %v3521
        %v3523 = vpop.f32.mrf.mxu0
        %3524 = vmatprep.mubr.f32.mxu0 %v3201
        %3525 = vmatmul.mubr.f32.gmra.mxu0 %v3200
        %v3526 = vpop.f32.mrf.mxu0
        %v3527 = vadd.f32 0.0, %v3526
        %v3528 = vpop.f32.mrf.mxu0
        %3529 = vmatprep.mubr.f32.mxu0 %v3205
        %3530 = vmatmul.mubr.f32.gmra.mxu0 %v3204
        %v3531 = vpop.f32.mrf.mxu0
        %v3532 = vadd.f32 0.0, %v3531
        %v3533 = vpop.f32.mrf.mxu0
        %3534 = vmatprep.mubr.f32.mxu0 %v3209
        %3535 = vmatmul.mubr.f32.gmra.mxu0 %v3208
        %v3536 = vpop.f32.mrf.mxu0
        %v3537 = vadd.f32 0.0, %v3536
        %v3538 = vpop.f32.mrf.mxu0
        %3539 = vmatprep.mubr.f32.mxu0 %v3213
        %3540 = vmatmul.mubr.f32.gmra.mxu0 %v3212
        %v3541 = vpop.f32.mrf.mxu0
        %v3542 = vadd.f32 0.0, %v3541
        %v3543 = vpop.f32.mrf.mxu0
        %3544 = vmatprep.mubr.f32.mxu0 %v3217
        %3545 = vmatmul.mubr.f32.gmra.mxu0 %v3216
        %v3546 = vpop.f32.mrf.mxu0
        %v3547 = vadd.f32 0.0, %v3546
        %v3548 = vpop.f32.mrf.mxu0
        %3549 = vmatprep.mubr.f32.mxu0 %v3221
        %3550 = vmatmul.mubr.f32.gmra.mxu0 %v3220
        %v3551 = vpop.f32.mrf.mxu0
        %v3552 = vadd.f32 0.0, %v3551
        %v3553 = vpop.f32.mrf.mxu0
        %3554 = vmatprep.mubr.f32.mxu0 %v3225
        %3555 = vmatmul.mubr.f32.gmra.mxu0 %v3224
        %v3556 = vpop.f32.mrf.mxu0
        %v3557 = vadd.f32 0.0, %v3556
        %v3558 = vpop.f32.mrf.mxu0
        %3559 = vmatprep.mubr.f32.mxu0 %v3229
        %3560 = vmatmul.mubr.f32.gmra.mxu0 %v3228
        %v3561 = vpop.f32.mrf.mxu0
        %v3562 = vadd.f32 0.0, %v3561
        %v3563 = vpop.f32.mrf.mxu0
        %3564 = vmatprep.mubr.f32.mxu0 %v3233
        %3565 = vmatmul.mubr.f32.gmra.mxu0 %v3232
        %v3566 = vpop.f32.mrf.mxu0
        %v3567 = vadd.f32 0.0, %v3566
        %v3568 = vpop.f32.mrf.mxu0
        %3569 = vmatprep.mubr.f32.mxu0 %v3237
        %3570 = vmatmul.mubr.f32.gmra.mxu0 %v3236
        %v3571 = vpop.f32.mrf.mxu0
        %v3572 = vadd.f32 0.0, %v3571
        %v3573 = vpop.f32.mrf.mxu0
        %3574 = vmatprep.mubr.f32.mxu0 %v3241
        %3575 = vmatmul.mubr.f32.gmra.mxu0 %v3240
        %v3576 = vpop.f32.mrf.mxu0
        %v3577 = vadd.f32 0.0, %v3576
        %v3578 = vpop.f32.mrf.mxu0
        %3579 = vmatprep.mubr.f32.mxu0 %v3245
        %3580 = vmatmul.mubr.f32.gmra.mxu0 %v3244
        %v3581 = vpop.f32.mrf.mxu0
        %v3582 = vadd.f32 0.0, %v3581
        %v3583 = vpop.f32.mrf.mxu0
        %3584 = vmatprep.mubr.f32.mxu0 %v3249
        %3585 = vmatmul.mubr.f32.gmra.mxu0 %v3248
        %v3586 = vpop.f32.mrf.mxu0
        %v3587 = vadd.f32 0.0, %v3586
        %v3588 = vpop.f32.mrf.mxu0
        %3589 = vmatprep.mubr.f32.mxu0 %v3253
        %3590 = vmatmul.mubr.f32.gmra.mxu0 %v3252
        %v3591 = vpop.f32.mrf.mxu0
        %v3592 = vadd.f32 0.0, %v3591
        %v3593 = vpop.f32.mrf.mxu0
        %3594 = vmatprep.mubr.f32.mxu0 %v3257
        %3595 = vmatmul.mubr.f32.gmra.mxu0 %v3256
        %v3596 = vpop.f32.mrf.mxu0
        %v3597 = vadd.f32 0.0, %v3596
        %v3598 = vpop.f32.mrf.mxu0
        %3599 = vmatprep.mubr.f32.mxu0 %v3261
        %3600 = vmatmul.mubr.f32.gmra.mxu0 %v3260
        %v3601 = vpop.f32.mrf.mxu0
        %v3602 = vadd.f32 0.0, %v3601
        %v3603 = vpop.f32.mrf.mxu0
        %3604 = vmatprep.mubr.f32.mxu0 %v3265
        %3605 = vmatmul.mubr.f32.gmra.mxu0 %v3264
        %v3606 = vpop.f32.mrf.mxu0
        %v3607 = vadd.f32 0.0, %v3606
        %v3608 = vpop.f32.mrf.mxu0
        %3609 = vmatprep.mubr.f32.mxu0 %v3269
        %3610 = vmatmul.mubr.f32.gmra.mxu0 %v3268
        %v3611 = vpop.f32.mrf.mxu0
        %v3612 = vadd.f32 0.0, %v3611
        %v3613 = vpop.f32.mrf.mxu0
        %3614 = vmatprep.mubr.f32.mxu0 %v3273
        %3615 = vmatmul.mubr.f32.gmra.mxu0 %v3272
        %v3616 = vpop.f32.mrf.mxu0
        %v3617 = vadd.f32 0.0, %v3616
        %v3618 = vpop.f32.mrf.mxu0
        %3619 = vmatprep.mubr.f32.mxu0 %v3277
        %3620 = vmatmul.mubr.f32.gmra.mxu0 %v3276
        %v3621 = vpop.f32.mrf.mxu0
        %v3622 = vadd.f32 0.0, %v3621
        %v3623 = vpop.f32.mrf.mxu0
        %3624 = vmatprep.mubr.f32.mxu0 %v3281
        %3625 = vmatmul.mubr.f32.gmra.mxu0 %v3280
        %v3626 = vpop.f32.mrf.mxu0
        %v3627 = vadd.f32 0.0, %v3626
        %v3628 = vpop.f32.mrf.mxu0
        %3629 = vmatprep.mubr.f32.mxu0 %v3285
        %3630 = vmatmul.mubr.f32.gmra.mxu0 %v3284
        %v3631 = vpop.f32.mrf.mxu0
        %v3632 = vadd.f32 0.0, %v3631
        %v3633 = vpop.f32.mrf.mxu0
        %3634 = vmatprep.mubr.f32.mxu0 %v3289
        %3635 = vmatmul.mubr.f32.gmra.mxu0 %v3288
        %v3636 = vpop.f32.mrf.mxu0
        %v3637 = vadd.f32 0.0, %v3636
        %v3638 = vpop.f32.mrf.mxu0
        %3639 = vmatprep.mubr.f32.mxu0 %v3293
        %3640 = vmatmul.mubr.f32.gmra.mxu0 %v3292
        %v3641 = vpop.f32.mrf.mxu0
        %v3642 = vadd.f32 0.0, %v3641
        %v3643 = vpop.f32.mrf.mxu0
        %3644 = vmatprep.mubr.f32.mxu0 %v3297
        %3645 = vmatmul.mubr.f32.gmra.mxu0 %v3296
        %v3646 = vpop.f32.mrf.mxu0
        %v3647 = vadd.f32 0.0, %v3646
        %v3648 = vpop.f32.mrf.mxu0
        %3649 = vmatprep.mubr.f32.mxu0 %v3301
        %3650 = vmatmul.mubr.f32.gmra.mxu0 %v3300
        %v3651 = vpop.f32.mrf.mxu0
        %v3652 = vadd.f32 0.0, %v3651
        %v3653 = vpop.f32.mrf.mxu0
        %3654 = vmatprep.mubr.f32.mxu0 %v3305
        %3655 = vmatmul.mubr.f32.gmra.mxu0 %v3304
        %v3656 = vpop.f32.mrf.mxu0
        %v3657 = vadd.f32 0.0, %v3656
        %v3658 = vpop.f32.mrf.mxu0
        %3659 = vmatprep.mubr.f32.mxu0 %v3309
        %3660 = vmatmul.mubr.f32.gmra.mxu0 %v3308
        %v3661 = vpop.f32.mrf.mxu0
        %v3662 = vadd.f32 0.0, %v3661
        %v3663 = vpop.f32.mrf.mxu0
        %3664 = vmatprep.mubr.f32.mxu0 %v3313
        %3665 = vmatmul.mubr.f32.gmra.mxu0 %v3312
        %v3666 = vpop.f32.mrf.mxu0
        %v3667 = vadd.f32 0.0, %v3666
        %v3668 = vpop.f32.mrf.mxu0
        %3669 = vmatprep.mubr.f32.mxu0 %v3317
        %3670 = vmatmul.mubr.f32.gmra.mxu0 %v3316
        %v3671 = vpop.f32.mrf.mxu0
        %v3672 = vadd.f32 0.0, %v3671
        %v3673 = vpop.f32.mrf.mxu0
        %3674 = vmatprep.mubr.f32.mxu0 %v3321
        %3675 = vmatmul.mubr.f32.gmra.mxu0 %v3320
        %v3676 = vpop.f32.mrf.mxu0
        %v3677 = vadd.f32 0.0, %v3676
        %v3678 = vpop.f32.mrf.mxu0
        %3679 = vmatprep.mubr.f32.mxu0 %v3325
        %3680 = vmatmul.mubr.f32.gmra.mxu0 %v3324
        %v3681 = vpop.f32.mrf.mxu0
        %v3682 = vadd.f32 0.0, %v3681
        %v3683 = vpop.f32.mrf.mxu0
        %3684 = vmatprep.mubr.f32.mxu0 %v3329
        %3685 = vmatmul.mubr.f32.gmra.mxu0 %v3328
        %v3686 = vpop.f32.mrf.mxu0
        %v3687 = vadd.f32 0.0, %v3686
        %v3688 = vpop.f32.mrf.mxu0
        %3689 = vmatprep.mubr.f32.mxu0 %v3333
        %3690 = vmatmul.mubr.f32.gmra.mxu0 %v3332
        %v3691 = vpop.f32.mrf.mxu0
        %v3692 = vadd.f32 0.0, %v3691
        %v3693 = vpop.f32.mrf.mxu0
        %3694 = vmatprep.mubr.f32.mxu0 %v3337
        %3695 = vmatmul.mubr.f32.gmra.mxu0 %v3336
        %v3696 = vpop.f32.mrf.mxu0
        %v3697 = vadd.f32 0.0, %v3696
        %v3698 = vpop.f32.mrf.mxu0
        %3699 = vmatprep.mubr.f32.mxu0 %v3341
        %3700 = vmatmul.mubr.f32.gmra.mxu0 %v3340
        %v3701 = vpop.f32.mrf.mxu0
        %v3702 = vadd.f32 0.0, %v3701
        %v3703 = vpop.f32.mrf.mxu0
        %3704 = vmatprep.mubr.f32.mxu0 %v3345
        %3705 = vmatmul.mubr.f32.gmra.mxu0 %v3344
        %v3706 = vpop.f32.mrf.mxu0
        %v3707 = vadd.f32 0.0, %v3706
        %v3708 = vpop.f32.mrf.mxu0
        %3709 = vmatprep.mubr.f32.mxu0 %v3349
        %3710 = vmatmul.mubr.f32.gmra.mxu0 %v3348
        %v3711 = vpop.f32.mrf.mxu0
        %v3712 = vadd.f32 0.0, %v3711
        %v3713 = vpop.f32.mrf.mxu0
        %3714 = vmatprep.mubr.f32.mxu0 %v3353
        %3715 = vmatmul.mubr.f32.gmra.mxu0 %v3352
        %v3716 = vpop.f32.mrf.mxu0
        %v3717 = vadd.f32 0.0, %v3716
        %v3718 = vpop.f32.mrf.mxu0
        %3719 = vmatprep.mubr.f32.mxu0 %v3357
        %3720 = vmatmul.mubr.f32.gmra.mxu0 %v3356
        %v3721 = vpop.f32.mrf.mxu0
        %v3722 = vadd.f32 0.0, %v3721
        %v3723 = vpop.f32.mrf.mxu0
        %3724 = vmatprep.mubr.f32.mxu0 %v3361
        %3725 = vmatmul.mubr.f32.gmra.mxu0 %v3360
        %v3726 = vpop.f32.mrf.mxu0
        %v3727 = vadd.f32 0.0, %v3726
        %v3728 = vpop.f32.mrf.mxu0
        %3729 = vmatprep.mubr.f32.mxu0 %v3365
        %3730 = vmatmul.mubr.f32.gmra.mxu0 %v3364
        %v3731 = vpop.f32.mrf.mxu0
        %v3732 = vadd.f32 0.0, %v3731
        %v3733 = vpop.f32.mrf.mxu0
        %3734 = vmatprep.mubr.f32.mxu0 %v3369
        %3735 = vmatmul.mubr.f32.gmra.mxu0 %v3368
        %v3736 = vpop.f32.mrf.mxu0
        %v3737 = vadd.f32 0.0, %v3736
        %v3738 = vpop.f32.mrf.mxu0
        %3739 = vmatprep.mubr.f32.mxu0 %v3373
        %3740 = vmatmul.mubr.f32.gmra.mxu0 %v3372
        %v3741 = vpop.f32.mrf.mxu0
        %v3742 = vadd.f32 0.0, %v3741
        %v3743 = vpop.f32.mrf.mxu0
        %3744 = vmatprep.mubr.f32.mxu0 %v3377
        %3745 = vmatmul.mubr.f32.gmra.mxu0 %v3376
        %v3746 = vpop.f32.mrf.mxu0
        %v3747 = vadd.f32 0.0, %v3746
        %v3748 = vpop.f32.mrf.mxu0
        %3749 = vmatprep.mubr.f32.mxu0 %v3381
        %3750 = vmatmul.mubr.f32.gmra.mxu0 %v3380
        %v3751 = vpop.f32.mrf.mxu0
        %v3752 = vadd.f32 0.0, %v3751
        %v3753 = vpop.f32.mrf.mxu0
        %3754 = vmatprep.mubr.f32.mxu0 %v3385
        %3755 = vmatmul.mubr.f32.gmra.mxu0 %v3384
        %v3756 = vpop.f32.mrf.mxu0
        %v3757 = vadd.f32 0.0, %v3756
        %v3758 = vpop.f32.mrf.mxu0
        %3759 = vmatprep.mubr.f32.mxu0 %v3389
        %3760 = vmatmul.mubr.f32.gmra.mxu0 %v3388
        %v3761 = vpop.f32.mrf.mxu0
        %v3762 = vadd.f32 0.0, %v3761
        %v3763 = vpop.f32.mrf.mxu0
        %3764 = vmatprep.mubr.f32.mxu0 %v3393
        %3765 = vmatmul.mubr.f32.gmra.mxu0 %v3392
        %v3766 = vpop.f32.mrf.mxu0
        %v3767 = vadd.f32 0.0, %v3766
        %v3768 = vpop.f32.mrf.mxu0
        %3769 = vmatprep.mubr.f32.mxu0 %v3397
        %3770 = vmatmul.mubr.f32.gmra.mxu0 %v3396
        %v3771 = vpop.f32.mrf.mxu0
        %v3772 = vadd.f32 0.0, %v3771
        %v3773 = vpop.f32.mrf.mxu0
        %3774 = vmatprep.mubr.f32.mxu0 %v3401
        %3775 = vmatmul.mubr.f32.gmra.mxu0 %v3400
        %v3776 = vpop.f32.mrf.mxu0
        %v3777 = vadd.f32 0.0, %v3776
        %v3778 = vpop.f32.mrf.mxu0
        %3779 = vmatprep.mubr.f32.mxu0 %v3405
        %3780 = vmatmul.mubr.f32.gmra.mxu0 %v3404
        %v3781 = vpop.f32.mrf.mxu0
        %v3782 = vadd.f32 0.0, %v3781
        %v3783 = vpop.f32.mrf.mxu0
        %3784 = vmatprep.mubr.f32.mxu0 %v3409
        %3785 = vmatmul.mubr.f32.gmra.mxu0 %v3408
        %v3786 = vpop.f32.mrf.mxu0
        %v3787 = vadd.f32 0.0, %v3786
        %v3788 = vpop.f32.mrf.mxu0
        %3789 = vmatprep.mubr.f32.mxu0 %v3413
        %3790 = vmatmul.mubr.f32.gmra.mxu0 %v3412
        %v3791 = vpop.f32.mrf.mxu0
        %v3792 = vadd.f32 0.0, %v3791
        %v3793 = vpop.f32.mrf.mxu0
        %3794 = vmatprep.mubr.f32.mxu0 %v3417
        %3795 = vmatmul.mubr.f32.gmra.mxu0 %v3416
        %v3796 = vpop.f32.mrf.mxu0
        %v3797 = vadd.f32 0.0, %v3796
        %v3798 = vpop.f32.mrf.mxu0
        %3799 = vmatprep.mubr.f32.mxu0 %v3421
        %3800 = vmatmul.mubr.f32.gmra.mxu0 %v3420
        %v3801 = vpop.f32.mrf.mxu0
        %v3802 = vadd.f32 0.0, %v3801
        %v3803 = vpop.f32.mrf.mxu0
        %3804 = vmatprep.mubr.f32.mxu0 %v3425
        %3805 = vmatmul.mubr.f32.gmra.mxu0 %v3424
        %v3806 = vpop.f32.mrf.mxu0
        %v3807 = vadd.f32 0.0, %v3806
        %v3808 = vpop.f32.mrf.mxu0
        %3809 = vmatprep.mubr.f32.mxu0 %v3429
        %3810 = vmatmul.mubr.f32.gmra.mxu0 %v3428
        %v3811 = vpop.f32.mrf.mxu0
        %v3812 = vadd.f32 0.0, %v3811
        %v3813 = vpop.f32.mrf.mxu0
        %3814 = vmatprep.mubr.f32.mxu0 %v3433
        %3815 = vmatmul.mubr.f32.gmra.mxu0 %v3432
        %v3816 = vpop.f32.mrf.mxu0
        %v3817 = vadd.f32 0.0, %v3816
        %v3818 = vpop.f32.mrf.mxu0
        %3819 = vmatprep.mubr.f32.mxu0 %v3437
        %3820 = vmatmul.mubr.f32.gmra.mxu0 %v3436
        %v3821 = vpop.f32.mrf.mxu0
        %v3822 = vadd.f32 0.0, %v3821
        %v3823 = vpop.f32.mrf.mxu0
        %3824 = vdwg.mxu0
        %3825 = vmatprep.subr.mxu0 0.0
        %3826 = vmatpush1.msra.mxu0 %v1083
        %3827 = vmatprep.subr.mxu0 0.0
        %3828 = vmatpush1.msra.mxu0 %v1080
        %3829 = vmatprep.subr.mxu0 0.0
        %3830 = vmatpush1.msra.mxu0 %v1077
        %3831 = vmatprep.subr.mxu0 0.0
        %3832 = vmatpush1.msra.mxu0 %v1074
        %3833 = vmatprep.subr.mxu0 0.0
        %3834 = vmatpush1.msra.mxu0 %v1071
        %3835 = vmatprep.subr.mxu0 0.0
        %3836 = vmatpush1.msra.mxu0 %v1068
        %3837 = vmatprep.subr.mxu0 0.0
        %3838 = vmatpush1.msra.mxu0 %v1065
        %3839 = vmatprep.subr.mxu0 0.0
        %3840 = vmatpush1.msra.mxu0 %v1062
        %3841 = vmatprep.subr.mxu0 0.0
        %3842 = vmatpush1.msra.mxu0 %v1059
        %3843 = vmatprep.subr.mxu0 0.0
        %3844 = vmatpush1.msra.mxu0 %v1056
        %3845 = vmatprep.subr.mxu0 0.0
        %3846 = vmatpush1.msra.mxu0 %v1053
        %3847 = vmatprep.subr.mxu0 0.0
        %3848 = vmatpush1.msra.mxu0 %v1050
        %3849 = vmatprep.subr.mxu0 0.0
        %3850 = vmatpush1.msra.mxu0 %v1047
        %3851 = vmatprep.subr.mxu0 0.0
        %3852 = vmatpush1.msra.mxu0 %v1044
        %3853 = vmatprep.subr.mxu0 0.0
        %3854 = vmatpush1.msra.mxu0 %v1041
        %3855 = vmatprep.subr.mxu0 0.0
        %3856 = vmatpush1.msra.mxu0 %v1038
        %3857 = vmatprep.subr.mxu0 0.0
        %3858 = vmatpush2.msra.mxu0 %v1131
        %3859 = vmatprep.subr.mxu0 0.0
        %3860 = vmatpush2.msra.mxu0 %v1128
        %3861 = vmatprep.subr.mxu0 0.0
        %3862 = vmatpush2.msra.mxu0 %v1125
        %3863 = vmatprep.subr.mxu0 0.0
        %3864 = vmatpush2.msra.mxu0 %v1122
        %3865 = vmatprep.subr.mxu0 0.0
        %3866 = vmatpush2.msra.mxu0 %v1119
        %3867 = vmatprep.subr.mxu0 0.0
        %3868 = vmatpush2.msra.mxu0 %v1116
        %3869 = vmatprep.subr.mxu0 0.0
        %3870 = vmatpush2.msra.mxu0 %v1113
        %3871 = vmatprep.subr.mxu0 0.0
        %3872 = vmatpush2.msra.mxu0 %v1110
        %3873 = vmatprep.subr.mxu0 0.0
        %3874 = vmatpush2.msra.mxu0 %v1107
        %3875 = vmatprep.subr.mxu0 0.0
        %3876 = vmatpush2.msra.mxu0 %v1104
        %3877 = vmatprep.subr.mxu0 0.0
        %3878 = vmatpush2.msra.mxu0 %v1101
        %3879 = vmatprep.subr.mxu0 0.0
        %3880 = vmatpush2.msra.mxu0 %v1098
        %3881 = vmatprep.subr.mxu0 0.0
        %3882 = vmatpush2.msra.mxu0 %v1095
        %3883 = vmatprep.subr.mxu0 0.0
        %3884 = vmatpush2.msra.mxu0 %v1092
        %3885 = vmatprep.subr.mxu0 0.0
        %3886 = vmatpush2.msra.mxu0 %v1089
        %3887 = vmatprep.subr.mxu0 0.0
        %3888 = vmatpush2.msra.mxu0 %v1086
        %3889 = vmatprep.mubr.f32.mxu0 %v3187
        %3890 = vmatmul.mubr.f32.gmra.mxu0 %v3186
        %v3891 = vpop.f32.mrf.mxu0
        %v3892 = vadd.f32 %v3507, %v3891
        %v3893 = vpop.f32.mrf.mxu0
        %3894 = vmatprep.mubr.f32.mxu0 %v3191
        %3895 = vmatmul.mubr.f32.gmra.mxu0 %v3190
        %v3896 = vpop.f32.mrf.mxu0
        %v3897 = vadd.f32 %v3512, %v3896
        %v3898 = vpop.f32.mrf.mxu0
        %3899 = vmatprep.mubr.f32.mxu0 %v3195
        %3900 = vmatmul.mubr.f32.gmra.mxu0 %v3194
        %v3901 = vpop.f32.mrf.mxu0
        %v3902 = vadd.f32 %v3517, %v3901
        %v3903 = vpop.f32.mrf.mxu0
        %3904 = vmatprep.mubr.f32.mxu0 %v3199
        %3905 = vmatmul.mubr.f32.gmra.mxu0 %v3198
        %v3906 = vpop.f32.mrf.mxu0
        %v3907 = vadd.f32 %v3522, %v3906
        %v3908 = vpop.f32.mrf.mxu0
        %3909 = vmatprep.mubr.f32.mxu0 %v3203
        %3910 = vmatmul.mubr.f32.gmra.mxu0 %v3202
        %v3911 = vpop.f32.mrf.mxu0
        %v3912 = vadd.f32 %v3527, %v3911
        %v3913 = vpop.f32.mrf.mxu0
        %3914 = vmatprep.mubr.f32.mxu0 %v3207
        %3915 = vmatmul.mubr.f32.gmra.mxu0 %v3206
        %v3916 = vpop.f32.mrf.mxu0
        %v3917 = vadd.f32 %v3532, %v3916
        %v3918 = vpop.f32.mrf.mxu0
        %3919 = vmatprep.mubr.f32.mxu0 %v3211
        %3920 = vmatmul.mubr.f32.gmra.mxu0 %v3210
        %v3921 = vpop.f32.mrf.mxu0
        %v3922 = vadd.f32 %v3537, %v3921
        %v3923 = vpop.f32.mrf.mxu0
        %3924 = vmatprep.mubr.f32.mxu0 %v3215
        %3925 = vmatmul.mubr.f32.gmra.mxu0 %v3214
        %v3926 = vpop.f32.mrf.mxu0
        %v3927 = vadd.f32 %v3542, %v3926
        %v3928 = vpop.f32.mrf.mxu0
        %3929 = vmatprep.mubr.f32.mxu0 %v3219
        %3930 = vmatmul.mubr.f32.gmra.mxu0 %v3218
        %v3931 = vpop.f32.mrf.mxu0
        %v3932 = vadd.f32 %v3547, %v3931
        %v3933 = vpop.f32.mrf.mxu0
        %3934 = vmatprep.mubr.f32.mxu0 %v3223
        %3935 = vmatmul.mubr.f32.gmra.mxu0 %v3222
        %v3936 = vpop.f32.mrf.mxu0
        %v3937 = vadd.f32 %v3552, %v3936
        %v3938 = vpop.f32.mrf.mxu0
        %3939 = vmatprep.mubr.f32.mxu0 %v3227
        %3940 = vmatmul.mubr.f32.gmra.mxu0 %v3226
        %v3941 = vpop.f32.mrf.mxu0
        %v3942 = vadd.f32 %v3557, %v3941
        %v3943 = vpop.f32.mrf.mxu0
        %3944 = vmatprep.mubr.f32.mxu0 %v3231
        %3945 = vmatmul.mubr.f32.gmra.mxu0 %v3230
        %v3946 = vpop.f32.mrf.mxu0
        %v3947 = vadd.f32 %v3562, %v3946
        %v3948 = vpop.f32.mrf.mxu0
        %3949 = vmatprep.mubr.f32.mxu0 %v3235
        %3950 = vmatmul.mubr.f32.gmra.mxu0 %v3234
        %v3951 = vpop.f32.mrf.mxu0
        %v3952 = vadd.f32 %v3567, %v3951
        %v3953 = vpop.f32.mrf.mxu0
        %3954 = vmatprep.mubr.f32.mxu0 %v3239
        %3955 = vmatmul.mubr.f32.gmra.mxu0 %v3238
        %v3956 = vpop.f32.mrf.mxu0
        %v3957 = vadd.f32 %v3572, %v3956
        %v3958 = vpop.f32.mrf.mxu0
        %3959 = vmatprep.mubr.f32.mxu0 %v3243
        %3960 = vmatmul.mubr.f32.gmra.mxu0 %v3242
        %v3961 = vpop.f32.mrf.mxu0
        %v3962 = vadd.f32 %v3577, %v3961
        %v3963 = vpop.f32.mrf.mxu0
        %3964 = vmatprep.mubr.f32.mxu0 %v3247
        %3965 = vmatmul.mubr.f32.gmra.mxu0 %v3246
        %v3966 = vpop.f32.mrf.mxu0
        %v3967 = vadd.f32 %v3582, %v3966
        %v3968 = vpop.f32.mrf.mxu0
        %3969 = vmatprep.mubr.f32.mxu0 %v3251
        %3970 = vmatmul.mubr.f32.gmra.mxu0 %v3250
        %v3971 = vpop.f32.mrf.mxu0
        %v3972 = vadd.f32 %v3587, %v3971
        %v3973 = vpop.f32.mrf.mxu0
        %3974 = vmatprep.mubr.f32.mxu0 %v3255
        %3975 = vmatmul.mubr.f32.gmra.mxu0 %v3254
        %v3976 = vpop.f32.mrf.mxu0
        %v3977 = vadd.f32 %v3592, %v3976
        %v3978 = vpop.f32.mrf.mxu0
        %3979 = vmatprep.mubr.f32.mxu0 %v3259
        %3980 = vmatmul.mubr.f32.gmra.mxu0 %v3258
        %v3981 = vpop.f32.mrf.mxu0
        %v3982 = vadd.f32 %v3597, %v3981
        %v3983 = vpop.f32.mrf.mxu0
        %3984 = vmatprep.mubr.f32.mxu0 %v3263
        %3985 = vmatmul.mubr.f32.gmra.mxu0 %v3262
        %v3986 = vpop.f32.mrf.mxu0
        %v3987 = vadd.f32 %v3602, %v3986
        %v3988 = vpop.f32.mrf.mxu0
        %3989 = vmatprep.mubr.f32.mxu0 %v3267
        %3990 = vmatmul.mubr.f32.gmra.mxu0 %v3266
        %v3991 = vpop.f32.mrf.mxu0
        %v3992 = vadd.f32 %v3607, %v3991
        %v3993 = vpop.f32.mrf.mxu0
        %3994 = vmatprep.mubr.f32.mxu0 %v3271
        %3995 = vmatmul.mubr.f32.gmra.mxu0 %v3270
        %v3996 = vpop.f32.mrf.mxu0
        %v3997 = vadd.f32 %v3612, %v3996
        %v3998 = vpop.f32.mrf.mxu0
        %3999 = vmatprep.mubr.f32.mxu0 %v3275
        %4000 = vmatmul.mubr.f32.gmra.mxu0 %v3274
        %v4001 = vpop.f32.mrf.mxu0
        %v4002 = vadd.f32 %v3617, %v4001
        %v4003 = vpop.f32.mrf.mxu0
        %4004 = vmatprep.mubr.f32.mxu0 %v3279
        %4005 = vmatmul.mubr.f32.gmra.mxu0 %v3278
        %v4006 = vpop.f32.mrf.mxu0
        %v4007 = vadd.f32 %v3622, %v4006
        %v4008 = vpop.f32.mrf.mxu0
        %4009 = vmatprep.mubr.f32.mxu0 %v3283
        %4010 = vmatmul.mubr.f32.gmra.mxu0 %v3282
        %v4011 = vpop.f32.mrf.mxu0
        %v4012 = vadd.f32 %v3627, %v4011
        %v4013 = vpop.f32.mrf.mxu0
        %4014 = vmatprep.mubr.f32.mxu0 %v3287
        %4015 = vmatmul.mubr.f32.gmra.mxu0 %v3286
        %v4016 = vpop.f32.mrf.mxu0
        %v4017 = vadd.f32 %v3632, %v4016
        %v4018 = vpop.f32.mrf.mxu0
        %4019 = vmatprep.mubr.f32.mxu0 %v3291
        %4020 = vmatmul.mubr.f32.gmra.mxu0 %v3290
        %v4021 = vpop.f32.mrf.mxu0
        %v4022 = vadd.f32 %v3637, %v4021
        %v4023 = vpop.f32.mrf.mxu0
        %4024 = vmatprep.mubr.f32.mxu0 %v3295
        %4025 = vmatmul.mubr.f32.gmra.mxu0 %v3294
        %v4026 = vpop.f32.mrf.mxu0
        %v4027 = vadd.f32 %v3642, %v4026
        %v4028 = vpop.f32.mrf.mxu0
        %4029 = vmatprep.mubr.f32.mxu0 %v3299
        %4030 = vmatmul.mubr.f32.gmra.mxu0 %v3298
        %v4031 = vpop.f32.mrf.mxu0
        %v4032 = vadd.f32 %v3647, %v4031
        %v4033 = vpop.f32.mrf.mxu0
        %4034 = vmatprep.mubr.f32.mxu0 %v3303
        %4035 = vmatmul.mubr.f32.gmra.mxu0 %v3302
        %v4036 = vpop.f32.mrf.mxu0
        %v4037 = vadd.f32 %v3652, %v4036
        %v4038 = vpop.f32.mrf.mxu0
        %4039 = vmatprep.mubr.f32.mxu0 %v3307
        %4040 = vmatmul.mubr.f32.gmra.mxu0 %v3306
        %v4041 = vpop.f32.mrf.mxu0
        %v4042 = vadd.f32 %v3657, %v4041
        %v4043 = vpop.f32.mrf.mxu0
        %4044 = vmatprep.mubr.f32.mxu0 %v3311
        %4045 = vmatmul.mubr.f32.gmra.mxu0 %v3310
        %v4046 = vpop.f32.mrf.mxu0
        %v4047 = vadd.f32 %v3662, %v4046
        %v4048 = vpop.f32.mrf.mxu0
        %4049 = vmatprep.mubr.f32.mxu0 %v3315
        %4050 = vmatmul.mubr.f32.gmra.mxu0 %v3314
        %v4051 = vpop.f32.mrf.mxu0
        %v4052 = vadd.f32 %v3667, %v4051
        %v4053 = vpop.f32.mrf.mxu0
        %4054 = vmatprep.mubr.f32.mxu0 %v3319
        %4055 = vmatmul.mubr.f32.gmra.mxu0 %v3318
        %v4056 = vpop.f32.mrf.mxu0
        %v4057 = vadd.f32 %v3672, %v4056
        %v4058 = vpop.f32.mrf.mxu0
        %4059 = vmatprep.mubr.f32.mxu0 %v3323
        %4060 = vmatmul.mubr.f32.gmra.mxu0 %v3322
        %v4061 = vpop.f32.mrf.mxu0
        %v4062 = vadd.f32 %v3677, %v4061
        %v4063 = vpop.f32.mrf.mxu0
        %4064 = vmatprep.mubr.f32.mxu0 %v3327
        %4065 = vmatmul.mubr.f32.gmra.mxu0 %v3326
        %v4066 = vpop.f32.mrf.mxu0
        %v4067 = vadd.f32 %v3682, %v4066
        %v4068 = vpop.f32.mrf.mxu0
        %4069 = vmatprep.mubr.f32.mxu0 %v3331
        %4070 = vmatmul.mubr.f32.gmra.mxu0 %v3330
        %v4071 = vpop.f32.mrf.mxu0
        %v4072 = vadd.f32 %v3687, %v4071
        %v4073 = vpop.f32.mrf.mxu0
        %4074 = vmatprep.mubr.f32.mxu0 %v3335
        %4075 = vmatmul.mubr.f32.gmra.mxu0 %v3334
        %v4076 = vpop.f32.mrf.mxu0
        %v4077 = vadd.f32 %v3692, %v4076
        %v4078 = vpop.f32.mrf.mxu0
        %4079 = vmatprep.mubr.f32.mxu0 %v3339
        %4080 = vmatmul.mubr.f32.gmra.mxu0 %v3338
        %v4081 = vpop.f32.mrf.mxu0
        %v4082 = vadd.f32 %v3697, %v4081
        %v4083 = vpop.f32.mrf.mxu0
        %4084 = vmatprep.mubr.f32.mxu0 %v3343
        %4085 = vmatmul.mubr.f32.gmra.mxu0 %v3342
        %v4086 = vpop.f32.mrf.mxu0
        %v4087 = vadd.f32 %v3702, %v4086
        %v4088 = vpop.f32.mrf.mxu0
        %4089 = vmatprep.mubr.f32.mxu0 %v3347
        %4090 = vmatmul.mubr.f32.gmra.mxu0 %v3346
        %v4091 = vpop.f32.mrf.mxu0
        %v4092 = vadd.f32 %v3707, %v4091
        %v4093 = vpop.f32.mrf.mxu0
        %4094 = vmatprep.mubr.f32.mxu0 %v3351
        %4095 = vmatmul.mubr.f32.gmra.mxu0 %v3350
        %v4096 = vpop.f32.mrf.mxu0
        %v4097 = vadd.f32 %v3712, %v4096
        %v4098 = vpop.f32.mrf.mxu0
        %4099 = vmatprep.mubr.f32.mxu0 %v3355
        %4100 = vmatmul.mubr.f32.gmra.mxu0 %v3354
        %v4101 = vpop.f32.mrf.mxu0
        %v4102 = vadd.f32 %v3717, %v4101
        %v4103 = vpop.f32.mrf.mxu0
        %4104 = vmatprep.mubr.f32.mxu0 %v3359
        %4105 = vmatmul.mubr.f32.gmra.mxu0 %v3358
        %v4106 = vpop.f32.mrf.mxu0
        %v4107 = vadd.f32 %v3722, %v4106
        %v4108 = vpop.f32.mrf.mxu0
        %4109 = vmatprep.mubr.f32.mxu0 %v3363
        %4110 = vmatmul.mubr.f32.gmra.mxu0 %v3362
        %v4111 = vpop.f32.mrf.mxu0
        %v4112 = vadd.f32 %v3727, %v4111
        %v4113 = vpop.f32.mrf.mxu0
        %4114 = vmatprep.mubr.f32.mxu0 %v3367
        %4115 = vmatmul.mubr.f32.gmra.mxu0 %v3366
        %v4116 = vpop.f32.mrf.mxu0
        %v4117 = vadd.f32 %v3732, %v4116
        %v4118 = vpop.f32.mrf.mxu0
        %4119 = vmatprep.mubr.f32.mxu0 %v3371
        %4120 = vmatmul.mubr.f32.gmra.mxu0 %v3370
        %v4121 = vpop.f32.mrf.mxu0
        %v4122 = vadd.f32 %v3737, %v4121
        %v4123 = vpop.f32.mrf.mxu0
        %4124 = vmatprep.mubr.f32.mxu0 %v3375
        %4125 = vmatmul.mubr.f32.gmra.mxu0 %v3374
        %v4126 = vpop.f32.mrf.mxu0
        %v4127 = vadd.f32 %v3742, %v4126
        %v4128 = vpop.f32.mrf.mxu0
        %4129 = vmatprep.mubr.f32.mxu0 %v3379
        %4130 = vmatmul.mubr.f32.gmra.mxu0 %v3378
        %v4131 = vpop.f32.mrf.mxu0
        %v4132 = vadd.f32 %v3747, %v4131
        %v4133 = vpop.f32.mrf.mxu0
        %4134 = vmatprep.mubr.f32.mxu0 %v3383
        %4135 = vmatmul.mubr.f32.gmra.mxu0 %v3382
        %v4136 = vpop.f32.mrf.mxu0
        %v4137 = vadd.f32 %v3752, %v4136
        %v4138 = vpop.f32.mrf.mxu0
        %4139 = vmatprep.mubr.f32.mxu0 %v3387
        %4140 = vmatmul.mubr.f32.gmra.mxu0 %v3386
        %v4141 = vpop.f32.mrf.mxu0
        %v4142 = vadd.f32 %v3757, %v4141
        %v4143 = vpop.f32.mrf.mxu0
        %4144 = vmatprep.mubr.f32.mxu0 %v3391
        %4145 = vmatmul.mubr.f32.gmra.mxu0 %v3390
        %v4146 = vpop.f32.mrf.mxu0
        %v4147 = vadd.f32 %v3762, %v4146
        %v4148 = vpop.f32.mrf.mxu0
        %4149 = vmatprep.mubr.f32.mxu0 %v3395
        %4150 = vmatmul.mubr.f32.gmra.mxu0 %v3394
        %v4151 = vpop.f32.mrf.mxu0
        %v4152 = vadd.f32 %v3767, %v4151
        %v4153 = vpop.f32.mrf.mxu0
        %4154 = vmatprep.mubr.f32.mxu0 %v3399
        %4155 = vmatmul.mubr.f32.gmra.mxu0 %v3398
        %v4156 = vpop.f32.mrf.mxu0
        %v4157 = vadd.f32 %v3772, %v4156
        %v4158 = vpop.f32.mrf.mxu0
        %4159 = vmatprep.mubr.f32.mxu0 %v3403
        %4160 = vmatmul.mubr.f32.gmra.mxu0 %v3402
        %v4161 = vpop.f32.mrf.mxu0
        %v4162 = vadd.f32 %v3777, %v4161
        %v4163 = vpop.f32.mrf.mxu0
        %4164 = vmatprep.mubr.f32.mxu0 %v3407
        %4165 = vmatmul.mubr.f32.gmra.mxu0 %v3406
        %v4166 = vpop.f32.mrf.mxu0
        %v4167 = vadd.f32 %v3782, %v4166
        %v4168 = vpop.f32.mrf.mxu0
        %4169 = vmatprep.mubr.f32.mxu0 %v3411
        %4170 = vmatmul.mubr.f32.gmra.mxu0 %v3410
        %v4171 = vpop.f32.mrf.mxu0
        %v4172 = vadd.f32 %v3787, %v4171
        %v4173 = vpop.f32.mrf.mxu0
        %4174 = vmatprep.mubr.f32.mxu0 %v3415
        %4175 = vmatmul.mubr.f32.gmra.mxu0 %v3414
        %v4176 = vpop.f32.mrf.mxu0
        %v4177 = vadd.f32 %v3792, %v4176
        %v4178 = vpop.f32.mrf.mxu0
        %4179 = vmatprep.mubr.f32.mxu0 %v3419
        %4180 = vmatmul.mubr.f32.gmra.mxu0 %v3418
        %v4181 = vpop.f32.mrf.mxu0
        %v4182 = vadd.f32 %v3797, %v4181
        %v4183 = vpop.f32.mrf.mxu0
        %4184 = vmatprep.mubr.f32.mxu0 %v3423
        %4185 = vmatmul.mubr.f32.gmra.mxu0 %v3422
        %v4186 = vpop.f32.mrf.mxu0
        %v4187 = vadd.f32 %v3802, %v4186
        %v4188 = vpop.f32.mrf.mxu0
        %4189 = vmatprep.mubr.f32.mxu0 %v3427
        %4190 = vmatmul.mubr.f32.gmra.mxu0 %v3426
        %v4191 = vpop.f32.mrf.mxu0
        %v4192 = vadd.f32 %v3807, %v4191
        %v4193 = vpop.f32.mrf.mxu0
        %4194 = vmatprep.mubr.f32.mxu0 %v3431
        %4195 = vmatmul.mubr.f32.gmra.mxu0 %v3430
        %v4196 = vpop.f32.mrf.mxu0
        %v4197 = vadd.f32 %v3812, %v4196
        %v4198 = vpop.f32.mrf.mxu0
        %4199 = vmatprep.mubr.f32.mxu0 %v3435
        %4200 = vmatmul.mubr.f32.gmra.mxu0 %v3434
        %v4201 = vpop.f32.mrf.mxu0
        %v4202 = vadd.f32 %v3817, %v4201
        %v4203 = vpop.f32.mrf.mxu0
        %4204 = vmatprep.mubr.f32.mxu0 %v3439
        %4205 = vmatmul.mubr.f32.gmra.mxu0 %v3438
        %v4206 = vpop.f32.mrf.mxu0
        %v4207 = vadd.f32 %v3822, %v4206
        %v4208 = vpop.f32.mrf.mxu0
        %4209 = vdwg.mxu0
        %v4210 = vadd.f32 %v2866, %v3892
        %v4211 = vadd.f32 %v2871, %v3897
        %v4212 = vadd.f32 %v2876, %v3902
        %v4213 = vadd.f32 %v2881, %v3907
        %v4214 = vadd.f32 %v2886, %v3912
        %v4215 = vadd.f32 %v2891, %v3917
        %v4216 = vadd.f32 %v2896, %v3922
        %v4217 = vadd.f32 %v2901, %v3927
        %v4218 = vadd.f32 %v2906, %v3932
        %v4219 = vadd.f32 %v2911, %v3937
        %v4220 = vadd.f32 %v2916, %v3942
        %v4221 = vadd.f32 %v2921, %v3947
        %v4222 = vadd.f32 %v2926, %v3952
        %v4223 = vadd.f32 %v2931, %v3957
        %v4224 = vadd.f32 %v2936, %v3962
        %v4225 = vadd.f32 %v2941, %v3967
        %v4226 = vadd.f32 %v2946, %v3972
        %v4227 = vadd.f32 %v2951, %v3977
        %v4228 = vadd.f32 %v2956, %v3982
        %v4229 = vadd.f32 %v2961, %v3987
        %v4230 = vadd.f32 %v2966, %v3992
        %v4231 = vadd.f32 %v2971, %v3997
        %v4232 = vadd.f32 %v2976, %v4002
        %v4233 = vadd.f32 %v2981, %v4007
        %v4234 = vadd.f32 %v2986, %v4012
        %v4235 = vadd.f32 %v2991, %v4017
        %v4236 = vadd.f32 %v2996, %v4022
        %v4237 = vadd.f32 %v3001, %v4027
        %v4238 = vadd.f32 %v3006, %v4032
        %v4239 = vadd.f32 %v3011, %v4037
        %v4240 = vadd.f32 %v3016, %v4042
        %v4241 = vadd.f32 %v3021, %v4047
        %v4242 = vadd.f32 %v3026, %v4052
        %v4243 = vadd.f32 %v3031, %v4057
        %v4244 = vadd.f32 %v3036, %v4062
        %v4245 = vadd.f32 %v3041, %v4067
        %v4246 = vadd.f32 %v3046, %v4072
        %v4247 = vadd.f32 %v3051, %v4077
        %v4248 = vadd.f32 %v3056, %v4082
        %v4249 = vadd.f32 %v3061, %v4087
        %v4250 = vadd.f32 %v3066, %v4092
        %v4251 = vadd.f32 %v3071, %v4097
        %v4252 = vadd.f32 %v3076, %v4102
        %v4253 = vadd.f32 %v3081, %v4107
        %v4254 = vadd.f32 %v3086, %v4112
        %v4255 = vadd.f32 %v3091, %v4117
        %v4256 = vadd.f32 %v3096, %v4122
        %v4257 = vadd.f32 %v3101, %v4127
        %v4258 = vadd.f32 %v3106, %v4132
        %v4259 = vadd.f32 %v3111, %v4137
        %v4260 = vadd.f32 %v3116, %v4142
        %v4261 = vadd.f32 %v3121, %v4147
        %v4262 = vadd.f32 %v3126, %v4152
        %v4263 = vadd.f32 %v3131, %v4157
        %v4264 = vadd.f32 %v3136, %v4162
        %v4265 = vadd.f32 %v3141, %v4167
        %v4266 = vadd.f32 %v3146, %v4172
        %v4267 = vadd.f32 %v3151, %v4177
        %v4268 = vadd.f32 %v3156, %v4182
        %v4269 = vadd.f32 %v3161, %v4187
        %v4270 = vadd.f32 %v3166, %v4192
        %v4271 = vadd.f32 %v3171, %v4197
        %v4272 = vadd.f32 %v3176, %v4202
        %v4273 = vadd.f32 %v3181, %v4207
        %v4274 = vmul.f32 %v4210, 0.015625
        %v4275 = vmul.f32 %v4211, 0.015625
        %v4276 = vmul.f32 %v4212, 0.015625
        %v4277 = vmul.f32 %v4213, 0.015625
        %v4278 = vmul.f32 %v4214, 0.015625
        %v4279 = vmul.f32 %v4215, 0.015625
        %v4280 = vmul.f32 %v4216, 0.015625
        %v4281 = vmul.f32 %v4217, 0.015625
        %v4282 = vmul.f32 %v4218, 0.015625
        %v4283 = vmul.f32 %v4219, 0.015625
        %v4284 = vmul.f32 %v4220, 0.015625
        %v4285 = vmul.f32 %v4221, 0.015625
        %v4286 = vmul.f32 %v4222, 0.015625
        %v4287 = vmul.f32 %v4223, 0.015625
        %v4288 = vmul.f32 %v4224, 0.015625
        %v4289 = vmul.f32 %v4225, 0.015625
        %v4290 = vmul.f32 %v4226, 0.015625
        %v4291 = vmul.f32 %v4227, 0.015625
        %v4292 = vmul.f32 %v4228, 0.015625
        %v4293 = vmul.f32 %v4229, 0.015625
        %v4294 = vmul.f32 %v4230, 0.015625
        %v4295 = vmul.f32 %v4231, 0.015625
        %v4296 = vmul.f32 %v4232, 0.015625
        %v4297 = vmul.f32 %v4233, 0.015625
        %v4298 = vmul.f32 %v4234, 0.015625
        %v4299 = vmul.f32 %v4235, 0.015625
        %v4300 = vmul.f32 %v4236, 0.015625
        %v4301 = vmul.f32 %v4237, 0.015625
        %v4302 = vmul.f32 %v4238, 0.015625
        %v4303 = vmul.f32 %v4239, 0.015625
        %v4304 = vmul.f32 %v4240, 0.015625
        %v4305 = vmul.f32 %v4241, 0.015625
        %v4306 = vmul.f32 %v4242, 0.015625
        %v4307 = vmul.f32 %v4243, 0.015625
        %v4308 = vmul.f32 %v4244, 0.015625
        %v4309 = vmul.f32 %v4245, 0.015625
        %v4310 = vmul.f32 %v4246, 0.015625
        %v4311 = vmul.f32 %v4247, 0.015625
        %v4312 = vmul.f32 %v4248, 0.015625
        %v4313 = vmul.f32 %v4249, 0.015625
        %v4314 = vmul.f32 %v4250, 0.015625
        %v4315 = vmul.f32 %v4251, 0.015625
        %v4316 = vmul.f32 %v4252, 0.015625
        %v4317 = vmul.f32 %v4253, 0.015625
        %v4318 = vmul.f32 %v4254, 0.015625
        %v4319 = vmul.f32 %v4255, 0.015625
        %v4320 = vmul.f32 %v4256, 0.015625
        %v4321 = vmul.f32 %v4257, 0.015625
        %v4322 = vmul.f32 %v4258, 0.015625
        %v4323 = vmul.f32 %v4259, 0.015625
        %v4324 = vmul.f32 %v4260, 0.015625
        %v4325 = vmul.f32 %v4261, 0.015625
        %v4326 = vmul.f32 %v4262, 0.015625
        %v4327 = vmul.f32 %v4263, 0.015625
        %v4328 = vmul.f32 %v4264, 0.015625
        %v4329 = vmul.f32 %v4265, 0.015625
        %v4330 = vmul.f32 %v4266, 0.015625
        %v4331 = vmul.f32 %v4267, 0.015625
        %v4332 = vmul.f32 %v4268, 0.015625
        %v4333 = vmul.f32 %v4269, 0.015625
        %v4334 = vmul.f32 %v4270, 0.015625
        %v4335 = vmul.f32 %v4271, 0.015625
        %v4336 = vmul.f32 %v4272, 0.015625
        %v4337 = vmul.f32 %v4273, 0.015625
        %v4338 = vld [vmem:[%s4] sm:$0xff]
        %v4339 = vld [vmem:[%s4 + $0x8] sm:$0xff]
        %v4340 = vld [vmem:[%s4 + $0x10] sm:$0xff]
        %v4341 = vld [vmem:[%s4 + $0x18] sm:$0xff]
        %v4342 = vld [vmem:[%s4 + $0x20] sm:$0xff]
        %v4343 = vld [vmem:[%s4 + $0x28] sm:$0xff]
        %v4344 = vld [vmem:[%s4 + $0x30] sm:$0xff]
        %v4345 = vld [vmem:[%s4 + $0x38] sm:$0xff]
        %v4346 = vld [vmem:[%s4 + $0x40] sm:$0xff]
        %v4347 = vld [vmem:[%s4 + $0x48] sm:$0xff]
        %v4348 = vld [vmem:[%s4 + $0x50] sm:$0xff]
        %v4349 = vld [vmem:[%s4 + $0x58] sm:$0xff]
        %v4350 = vld [vmem:[%s4 + $0x60] sm:$0xff]
        %v4351 = vld [vmem:[%s4 + $0x68] sm:$0xff]
        %v4352 = vld [vmem:[%s4 + $0x70] sm:$0xff]
        %v4353 = vld [vmem:[%s4 + $0x78] sm:$0xff]
        %v4354 = vld [vmem:[%s4 + $0x80] sm:$0xff]
        %v4355 = vld [vmem:[%s4 + $0x88] sm:$0xff]
        %v4356 = vld [vmem:[%s4 + $0x90] sm:$0xff]
        %v4357 = vld [vmem:[%s4 + $0x98] sm:$0xff]
        %v4358 = vld [vmem:[%s4 + $0xa0] sm:$0xff]
        %v4359 = vld [vmem:[%s4 + $0xa8] sm:$0xff]
        %v4360 = vld [vmem:[%s4 + $0xb0] sm:$0xff]
        %v4361 = vld [vmem:[%s4 + $0xb8] sm:$0xff]
        %v4362 = vld [vmem:[%s4 + $0xc0] sm:$0xff]
        %v4363 = vld [vmem:[%s4 + $0xc8] sm:$0xff]
        %v4364 = vld [vmem:[%s4 + $0xd0] sm:$0xff]
        %v4365 = vld [vmem:[%s4 + $0xd8] sm:$0xff]
        %v4366 = vld [vmem:[%s4 + $0xe0] sm:$0xff]
        %v4367 = vld [vmem:[%s4 + $0xe8] sm:$0xff]
        %v4368 = vld [vmem:[%s4 + $0xf0] sm:$0xff]
        %v4369 = vld [vmem:[%s4 + $0xf8] sm:$0xff]
        %v4370 = vld [vmem:[%s4 + $0x100] sm:$0xff]
        %v4371 = vld [vmem:[%s4 + $0x108] sm:$0xff]
        %v4372 = vld [vmem:[%s4 + $0x110] sm:$0xff]
        %v4373 = vld [vmem:[%s4 + $0x118] sm:$0xff]
        %v4374 = vld [vmem:[%s4 + $0x120] sm:$0xff]
        %v4375 = vld [vmem:[%s4 + $0x128] sm:$0xff]
        %v4376 = vld [vmem:[%s4 + $0x130] sm:$0xff]
        %v4377 = vld [vmem:[%s4 + $0x138] sm:$0xff]
        %v4378 = vld [vmem:[%s4 + $0x140] sm:$0xff]
        %v4379 = vld [vmem:[%s4 + $0x148] sm:$0xff]
        %v4380 = vld [vmem:[%s4 + $0x150] sm:$0xff]
        %v4381 = vld [vmem:[%s4 + $0x158] sm:$0xff]
        %v4382 = vld [vmem:[%s4 + $0x160] sm:$0xff]
        %v4383 = vld [vmem:[%s4 + $0x168] sm:$0xff]
        %v4384 = vld [vmem:[%s4 + $0x170] sm:$0xff]
        %v4385 = vld [vmem:[%s4 + $0x178] sm:$0xff]
        %v4386 = vld [vmem:[%s4 + $0x180] sm:$0xff]
        %v4387 = vld [vmem:[%s4 + $0x188] sm:$0xff]
        %v4388 = vld [vmem:[%s4 + $0x190] sm:$0xff]
        %v4389 = vld [vmem:[%s4 + $0x198] sm:$0xff]
        %v4390 = vld [vmem:[%s4 + $0x1a0] sm:$0xff]
        %v4391 = vld [vmem:[%s4 + $0x1a8] sm:$0xff]
        %v4392 = vld [vmem:[%s4 + $0x1b0] sm:$0xff]
        %v4393 = vld [vmem:[%s4 + $0x1b8] sm:$0xff]
        %v4394 = vld [vmem:[%s4 + $0x1c0] sm:$0xff]
        %v4395 = vld [vmem:[%s4 + $0x1c8] sm:$0xff]
        %v4396 = vld [vmem:[%s4 + $0x1d0] sm:$0xff]
        %v4397 = vld [vmem:[%s4 + $0x1d8] sm:$0xff]
        %v4398 = vld [vmem:[%s4 + $0x1e0] sm:$0xff]
        %v4399 = vld [vmem:[%s4 + $0x1e8] sm:$0xff]
        %v4400 = vld [vmem:[%s4 + $0x1f0] sm:$0xff]
        %v4401 = vld [vmem:[%s4 + $0x1f8] sm:$0xff]
        %v4402 = vadd.f32 %v4274, %v4338
        %v4403 = vadd.f32 %v4275, %v4339
        %v4404 = vadd.f32 %v4276, %v4340
        %v4405 = vadd.f32 %v4277, %v4341
        %v4406 = vadd.f32 %v4278, %v4342
        %v4407 = vadd.f32 %v4279, %v4343
        %v4408 = vadd.f32 %v4280, %v4344
        %v4409 = vadd.f32 %v4281, %v4345
        %v4410 = vadd.f32 %v4282, %v4346
        %v4411 = vadd.f32 %v4283, %v4347
        %v4412 = vadd.f32 %v4284, %v4348
        %v4413 = vadd.f32 %v4285, %v4349
        %v4414 = vadd.f32 %v4286, %v4350
        %v4415 = vadd.f32 %v4287, %v4351
        %v4416 = vadd.f32 %v4288, %v4352
        %v4417 = vadd.f32 %v4289, %v4353
        %v4418 = vadd.f32 %v4290, %v4354
        %v4419 = vadd.f32 %v4291, %v4355
        %v4420 = vadd.f32 %v4292, %v4356
        %v4421 = vadd.f32 %v4293, %v4357
        %v4422 = vadd.f32 %v4294, %v4358
        %v4423 = vadd.f32 %v4295, %v4359
        %v4424 = vadd.f32 %v4296, %v4360
        %v4425 = vadd.f32 %v4297, %v4361
        %v4426 = vadd.f32 %v4298, %v4362
        %v4427 = vadd.f32 %v4299, %v4363
        %v4428 = vadd.f32 %v4300, %v4364
        %v4429 = vadd.f32 %v4301, %v4365
        %v4430 = vadd.f32 %v4302, %v4366
        %v4431 = vadd.f32 %v4303, %v4367
        %v4432 = vadd.f32 %v4304, %v4368
        %v4433 = vadd.f32 %v4305, %v4369
        %v4434 = vadd.f32 %v4306, %v4370
        %v4435 = vadd.f32 %v4307, %v4371
        %v4436 = vadd.f32 %v4308, %v4372
        %v4437 = vadd.f32 %v4309, %v4373
        %v4438 = vadd.f32 %v4310, %v4374
        %v4439 = vadd.f32 %v4311, %v4375
        %v4440 = vadd.f32 %v4312, %v4376
        %v4441 = vadd.f32 %v4313, %v4377
        %v4442 = vadd.f32 %v4314, %v4378
        %v4443 = vadd.f32 %v4315, %v4379
        %v4444 = vadd.f32 %v4316, %v4380
        %v4445 = vadd.f32 %v4317, %v4381
        %v4446 = vadd.f32 %v4318, %v4382
        %v4447 = vadd.f32 %v4319, %v4383
        %v4448 = vadd.f32 %v4320, %v4384
        %v4449 = vadd.f32 %v4321, %v4385
        %v4450 = vadd.f32 %v4322, %v4386
        %v4451 = vadd.f32 %v4323, %v4387
        %v4452 = vadd.f32 %v4324, %v4388
        %v4453 = vadd.f32 %v4325, %v4389
        %v4454 = vadd.f32 %v4326, %v4390
        %v4455 = vadd.f32 %v4327, %v4391
        %v4456 = vadd.f32 %v4328, %v4392
        %v4457 = vadd.f32 %v4329, %v4393
        %v4458 = vadd.f32 %v4330, %v4394
        %v4459 = vadd.f32 %v4331, %v4395
        %v4460 = vadd.f32 %v4332, %v4396
        %v4461 = vadd.f32 %v4333, %v4397
        %v4462 = vadd.f32 %v4334, %v4398
        %v4463 = vadd.f32 %v4335, %v4399
        %v4464 = vadd.f32 %v4336, %v4400
        %v4465 = vadd.f32 %v4337, %v4401
        %vm4466 = vcmask 7168
        %4467 = vst.msk [vmem:[%s362] sm:$0xff] %vm4466, %v4402
        %4468 = vst.msk [vmem:[%s362 + $0x8] sm:$0xff] %vm4466, %v4403
        %4469 = vst.msk [vmem:[%s362 + $0x10] sm:$0xff] %vm4466, %v4404
        %4470 = vst.msk [vmem:[%s362 + $0x18] sm:$0xff] %vm4466, %v4405
        %4471 = vst.msk [vmem:[%s362 + $0x20] sm:$0xff] %vm4466, %v4406
        %4472 = vst.msk [vmem:[%s362 + $0x28] sm:$0xff] %vm4466, %v4407
        %4473 = vst.msk [vmem:[%s362 + $0x30] sm:$0xff] %vm4466, %v4408
        %4474 = vst.msk [vmem:[%s362 + $0x38] sm:$0xff] %vm4466, %v4409
        %4475 = vst.msk [vmem:[%s362 + $0x40] sm:$0xff] %vm4466, %v4410
        %4476 = vst.msk [vmem:[%s362 + $0x48] sm:$0xff] %vm4466, %v4411
        %4477 = vst.msk [vmem:[%s362 + $0x50] sm:$0xff] %vm4466, %v4412
        %4478 = vst.msk [vmem:[%s362 + $0x58] sm:$0xff] %vm4466, %v4413
        %4479 = vst.msk [vmem:[%s362 + $0x60] sm:$0xff] %vm4466, %v4414
        %4480 = vst.msk [vmem:[%s362 + $0x68] sm:$0xff] %vm4466, %v4415
        %4481 = vst.msk [vmem:[%s362 + $0x70] sm:$0xff] %vm4466, %v4416
        %4482 = vst.msk [vmem:[%s362 + $0x78] sm:$0xff] %vm4466, %v4417
        %4483 = vst.msk [vmem:[%s362 + $0x80] sm:$0xff] %vm4466, %v4418
        %4484 = vst.msk [vmem:[%s362 + $0x88] sm:$0xff] %vm4466, %v4419
        %4485 = vst.msk [vmem:[%s362 + $0x90] sm:$0xff] %vm4466, %v4420
        %4486 = vst.msk [vmem:[%s362 + $0x98] sm:$0xff] %vm4466, %v4421
        %4487 = vst.msk [vmem:[%s362 + $0xa0] sm:$0xff] %vm4466, %v4422
        %4488 = vst.msk [vmem:[%s362 + $0xa8] sm:$0xff] %vm4466, %v4423
        %4489 = vst.msk [vmem:[%s362 + $0xb0] sm:$0xff] %vm4466, %v4424
        %4490 = vst.msk [vmem:[%s362 + $0xb8] sm:$0xff] %vm4466, %v4425
        %4491 = vst.msk [vmem:[%s362 + $0xc0] sm:$0xff] %vm4466, %v4426
        %4492 = vst.msk [vmem:[%s362 + $0xc8] sm:$0xff] %vm4466, %v4427
        %4493 = vst.msk [vmem:[%s362 + $0xd0] sm:$0xff] %vm4466, %v4428
        %4494 = vst.msk [vmem:[%s362 + $0xd8] sm:$0xff] %vm4466, %v4429
        %4495 = vst.msk [vmem:[%s362 + $0xe0] sm:$0xff] %vm4466, %v4430
        %4496 = vst.msk [vmem:[%s362 + $0xe8] sm:$0xff] %vm4466, %v4431
        %4497 = vst.msk [vmem:[%s362 + $0xf0] sm:$0xff] %vm4466, %v4432
        %4498 = vst.msk [vmem:[%s362 + $0xf8] sm:$0xff] %vm4466, %v4433
        %4499 = vst.msk [vmem:[%s362 + $0x100] sm:$0xff] %vm4466, %v4434
        %4500 = vst.msk [vmem:[%s362 + $0x108] sm:$0xff] %vm4466, %v4435
        %4501 = vst.msk [vmem:[%s362 + $0x110] sm:$0xff] %vm4466, %v4436
        %4502 = vst.msk [vmem:[%s362 + $0x118] sm:$0xff] %vm4466, %v4437
        %4503 = vst.msk [vmem:[%s362 + $0x120] sm:$0xff] %vm4466, %v4438
        %4504 = vst.msk [vmem:[%s362 + $0x128] sm:$0xff] %vm4466, %v4439
        %4505 = vst.msk [vmem:[%s362 + $0x130] sm:$0xff] %vm4466, %v4440
        %4506 = vst.msk [vmem:[%s362 + $0x138] sm:$0xff] %vm4466, %v4441
        %4507 = vst.msk [vmem:[%s362 + $0x140] sm:$0xff] %vm4466, %v4442
        %4508 = vst.msk [vmem:[%s362 + $0x148] sm:$0xff] %vm4466, %v4443
        %4509 = vst.msk [vmem:[%s362 + $0x150] sm:$0xff] %vm4466, %v4444
        %4510 = vst.msk [vmem:[%s362 + $0x158] sm:$0xff] %vm4466, %v4445
        %4511 = vst.msk [vmem:[%s362 + $0x160] sm:$0xff] %vm4466, %v4446
        %4512 = vst.msk [vmem:[%s362 + $0x168] sm:$0xff] %vm4466, %v4447
        %4513 = vst.msk [vmem:[%s362 + $0x170] sm:$0xff] %vm4466, %v4448
        %4514 = vst.msk [vmem:[%s362 + $0x178] sm:$0xff] %vm4466, %v4449
        %4515 = vst.msk [vmem:[%s362 + $0x180] sm:$0xff] %vm4466, %v4450
        %4516 = vst.msk [vmem:[%s362 + $0x188] sm:$0xff] %vm4466, %v4451
        %4517 = vst.msk [vmem:[%s362 + $0x190] sm:$0xff] %vm4466, %v4452
        %4518 = vst.msk [vmem:[%s362 + $0x198] sm:$0xff] %vm4466, %v4453
        %4519 = vst.msk [vmem:[%s362 + $0x1a0] sm:$0xff] %vm4466, %v4454
        %4520 = vst.msk [vmem:[%s362 + $0x1a8] sm:$0xff] %vm4466, %v4455
        %4521 = vst.msk [vmem:[%s362 + $0x1b0] sm:$0xff] %vm4466, %v4456
        %4522 = vst.msk [vmem:[%s362 + $0x1b8] sm:$0xff] %vm4466, %v4457
        %4523 = vst.msk [vmem:[%s362 + $0x1c0] sm:$0xff] %vm4466, %v4458
        %4524 = vst.msk [vmem:[%s362 + $0x1c8] sm:$0xff] %vm4466, %v4459
        %4525 = vst.msk [vmem:[%s362 + $0x1d0] sm:$0xff] %vm4466, %v4460
        %4526 = vst.msk [vmem:[%s362 + $0x1d8] sm:$0xff] %vm4466, %v4461
        %4527 = vst.msk [vmem:[%s362 + $0x1e0] sm:$0xff] %vm4466, %v4462
        %4528 = vst.msk [vmem:[%s362 + $0x1e8] sm:$0xff] %vm4466, %v4463
        %4529 = vst.msk [vmem:[%s362 + $0x1f0] sm:$0xff] %vm4466, %v4464
        %4530 = vst.msk [vmem:[%s362 + $0x1f8] sm:$0xff] %vm4466, %v4465
        %p4531 = scmp.lt.s32.totalorder %s22, 1
        %s4532 = scalar_select %p4531, %s22, 1
        %p4533 = scmp.lt.s32.totalorder %s23, 0
        %s4534 = scalar_select %p4533, %s23, 0
        %s4535 = smul.addr %s4534, 64
        %s4536 = smul.addr %s4532, 64
        %s4537 = sadd.s32 %s4535, %s4536
        %s4538 = smul.addr %s4537, 8
        %s4539 = scalar_lea.vmem %s5, %s4538
        // Predicated region
        $region45: #{tpu_custom_call.1} parent=39 // pred_check
          %p4540 = pneg %p188
        $region46: #{tpu_custom_call.1} parent=39 // pred_check_branch
          %4542 = sbr.rel (%p4540) target = $region48
        $region47: #{tpu_custom_call.1} parent=39 // pred_region
          _
        $region48: #{tpu_custom_call.1} parent=39 // pred_fallthru
          _
      $region40: #{tpu_custom_call.1} parent=5 // pred_fallthru
        _
      %p4543 = scmp.le.s32.totalorder 2, %s12
      // Predicated region
      $region49: #{tpu_custom_call.1} parent=5 // pred_check
        %p4544 = pneg %p4543
      $region50: #{tpu_custom_call.1} parent=5 // pred_check_branch
        %4546 = sbr.rel (%p4544) target = $region52
      $region51: #{tpu_custom_call.1} parent=5 // pred_region
        %s4547 = ssub.s32 %s12, 2
        // Predicated region
        $region53: #{tpu_custom_call.1} parent=51 // pred_check
          %p4548 = pneg %p194
        $region54: #{tpu_custom_call.1} parent=51 // pred_check_branch
          %4550 = sbr.rel (%p4548) target = $region56
        $region55: #{tpu_custom_call.1} parent=51 // pred_region
          %p4551 = scmp.lt.s32.totalorder %s25, 1
          %s4552 = scalar_select %p4551, %s25, 1
          %p4553 = scmp.lt.s32.totalorder %s26, 0
          %s4554 = scalar_select %p4553, %s26, 0
          %s4555 = smul.addr %s4554, 64
          %s4556 = smul.addr %s4552, 64
          %s4557 = sadd.s32 %s4555, %s4556
          %s4558 = smul.addr %s4557, 8
          %s4559 = scalar_lea.vmem %s5, %s4558
        $region56: #{tpu_custom_call.1} parent=51 // pred_fallthru
          _
      $region52: #{tpu_custom_call.1} parent=5 // pred_fallthru
        _
    $region6: #{tpu_custom_call.1} parent=1 // loop_footer
      %s16 = sadd.s32 1, %s12
    $region7: #{tpu_custom_call.1} parent=1 // loop_footer_branch
      %11 = sbr.rel target = $region3
    $region8: #{tpu_custom_call.1} parent=1 // loop_exit
      _
    %4560 = vsyncpa [#allocation6], 1
    %s4561 = scalar_lea.sflag [#allocation6], 1
    %4562 = vsyncpa %s4561, 1

</llo_original>
